<compile_context>
chip_gen: v6e
topology: v6e:2x2x1
jax: 0.10.0
libtpu: 0.0.40
codegen_flags: <defaults>
</compile_context>

<pallas_src>
import functools
import math

import jax
import jax.numpy as jnp
from jax.experimental import pallas as pl
from jax.experimental.pallas import tpu as pltpu

_INV_SQRT2 = 0.7071067811865476

# ---- geometry constants (input 4x23x23, conv1 k3/s2/p1 -> 12x12, conv3 -> 10x10)
_H1 = 12                 # conv1 output spatial size
_H3 = 10                 # conv3 output spatial size
_PW = 14                 # shared flat row pitch (= H1 + 2 * conv3_pad)
_LEAD = 15               # lead pad = flat offset of v17 cell (0,0) in conv3 frame
_PHASE_FLAT = _PW * _PW  # 196: one stride-2 phase image (14x14), flattened
_PITCH = 216             # per-image lane pitch (>= _LEAD + 196 = 211, mult of 8)


def _round_up(v, m):
    return (v + m - 1) // m * m


# ---------------- exact-GELU helpers (in-kernel) ----------------

_ERF_ALPHA = (0.00022905065861350646, 0.0034082910107109506,
              0.050955695062380861, 0.18520832239976145, 1.128379143519084)
_ERF_BETA = (-1.1791602954361697e-7, 0.000023547966471313185,
             0.0010179625278914885, 0.014070470171167667,
             0.11098505178285362, 0.49746925110067538, 1.0)


def _erf_f32(x):
    # Rational erf approximation (Eigen/XLA family), |x| clamped to 4.
    x = jnp.clip(x, -4.0, 4.0)
    x2 = x * x
    p = jnp.full_like(x2, _ERF_ALPHA[0])
    for c in _ERF_ALPHA[1:]:
        p = p * x2 + c
    q = jnp.full_like(x2, _ERF_BETA[0])
    for c in _ERF_BETA[1:]:
        q = q * x2 + c
    # Divide on the EUP (separate VLIW slot) + one Newton step -> ~f32 accuracy.
    inv_q = pl.reciprocal(q, approx=True)
    inv_q = inv_q * (2.0 - q * inv_q)
    return x * p * inv_q


def _gelu_exact(x):
    # matches: v2 = x*0.5 ; v5 = erf(x*0.7071067811865476) + 1 ; out = v2*v5
    return (x * 0.5) * (_erf_f32(x * _INV_SQRT2) + 1.0)


# ---------------- fused Pallas kernel ----------------

def _fused_conv_gelu_conv_kernel(ph_ref, w1_ref, b1_ref, w3_ref, b3_ref,
                                 mask_ref, o_ref, *, w1_width, w3_width):
    # ph_ref : (1, 16, PHW)  stride-2 phase split, rows = (phase*4 + cin);
    #                        image b lives at lanes [b*216+15, b*216+211)
    # w1_ref : (72, 4)       rows = tap*8 + cout (rows 4..7 zero), cols = cin
    # b1_ref : (4, 1)
    # w3_ref : (200, 4)      rows = tap*8 + cout (rows 5..7 zero), cols = cin
    # b3_ref : (5, 1)
    # mask   : (1, W1)       1.0 where a lane is a real conv1 output
    # o_ref  : (1, 5, W3)    conv3 output, per-image pitch 216 along lanes
    b1 = b1_ref[...]
    b3 = b3_ref[...]
    valid = mask_ref[...]

    # ---- conv1 (3x3, stride 2, pad 1): 9 shifted-window taps over the phase
    # images, accumulated directly into conv3's zero-padded coordinate frame.
    # Cin=4 contraction as broadcast-FMAs (K=4 is too small for the MXU).
    acc1 = None
    tap = 0
    for ky in range(3):
        for kx in range(3):
            p = (ky % 2) * 2 + (kx % 2)                    # stride-2 phase id
            off = (ky // 2) * _PW + (kx // 2)              # flat window offset
            slab = ph_ref[0, p * 4:(p + 1) * 4, off:off + w1_width]   # (4, W1)
            wt = w1_ref[tap * 8:tap * 8 + 4, :]            # (cout=4, cin=4)
            prods = [wt[:, ci:ci + 1] * slab[ci:ci + 1, :] for ci in range(4)]
            acc1 = prods if acc1 is None else [a + q for a, q in zip(acc1, prods)]
            tap += 1
    v1 = (acc1[0] + acc1[1]) + (acc1[2] + acc1[3]) + b1
    # v6 = gelu(v1); v17 = gelu(v6).  The mask zeroes junk lanes so they double
    # as conv3's zero padding (no VMEM staging roundtrip).
    v17 = _gelu_exact(_gelu_exact(v1)) * valid             # (4, W1), in vregs

    # ---- conv3 (5x5, stride 1, pad 1): 25 shifted taps sliced from vregs ----
    acc3 = None
    tap = 0
    for ky in range(5):
        for kx in range(5):
            off = ky * _PW + kx
            slab = v17[:, off:off + w3_width]              # (4, W3) contiguous
            wt = w3_ref[tap * 8:tap * 8 + 5, :]            # (cout=5, cin=4)
            prods = [wt[:, ci:ci + 1] * slab[ci:ci + 1, :] for ci in range(4)]
            acc3 = prods if acc3 is None else [a + q for a, q in zip(acc3, prods)]
            tap += 1
    o_ref[0] = (acc3[0] + acc3[1]) + (acc3[2] + acc3[3]) + b3


# ---------------- JAX wrapper ----------------

def _phase_flat(x_nchw):
    # (N,4,23,23) -> (N,16,196): pad-1 image split into its 4 stride-2 phases,
    # each 13x13 phase zero-padded to 14x14 and flattened with pitch 14.
    n = x_nchw.shape[0]
    xp = jnp.pad(x_nchw, ((0, 0), (0, 0), (1, 2), (1, 2)))      # (N,4,26,26)
    ph = xp.reshape(n, 4, 13, 2, 13, 2)
    ph = jnp.transpose(ph, (0, 3, 5, 1, 2, 4))                  # (N,2,2,4,13,13)
    ph = jnp.pad(ph, ((0, 0),) * 4 + ((0, 1), (0, 1)))          # (N,2,2,4,14,14)
    return ph.reshape(n, 16, _PHASE_FLAT)


def _pad_weights(w):
    # (cout, cin, k, k) -> (k*k*8, cin): tap-major with cout at an 8-row stride
    # so every in-kernel per-tap weight extract is sublane-aligned.
    cout, cin, k, _ = w.shape
    wt = jnp.transpose(w, (2, 3, 0, 1)).reshape(k * k, cout, cin)
    wt = jnp.pad(wt, ((0, 0), (0, 8 - cout), (0, 0)))
    return wt.reshape(k * k * 8, cin)


@jax.jit
def model_forward(x_nchw, params):
    (w1, b1), (w3, b3) = params
    if x_nchw.shape[1:] != (4, 23, 23):
        raise ValueError("kernel is specialised to (N, 4, 23, 23) inputs")
    n = x_nchw.shape[0]

    # Batch block: amortise per-grid-step overhead; keep >=2 grid steps when
    # possible (v7x has 2 TensorCores); cap at 4 images/step so the wide
    # lane-stacked accumulators stay inside the 64-vreg file (no spills).
    bblk = max(1, min(4, -(-n // 2)))
    g = -(-n // bblk)
    nb = g * bblk
    if nb > n:
        x_nchw = jnp.pad(x_nchw, ((0, nb - n), (0, 0), (0, 0), (0, 0)))

    w3_width = _round_up(bblk * _PITCH, 128)          # conv3 / output lane width
    w1_width = _round_up(w3_width + 4 * _PW + 4, 8)   # v17 frame (+max conv3 off)
    ph_width = _round_up(w1_width + _LEAD, 128)       # phase-buffer lane width

    # Stride-2 phase split, 15-lane lead pad, images stacked along the lane
    # axis at pitch 216, grouped into blocks of bblk images per grid step.
    ph = _phase_flat(x_nchw)                                        # (NB,16,196)
    ph = jnp.pad(ph, ((0, 0), (0, 0),
                      (_LEAD, _PITCH - _LEAD - _PHASE_FLAT)))       # (NB,16,216)
    ph = ph.reshape(g, bblk, 16, _PITCH).transpose(0, 2, 1, 3)
    ph = ph.reshape(g, 16, bblk * _PITCH)
    ph = jnp.pad(ph, ((0, 0), (0, 0), (0, ph_width - bblk * _PITCH)))

    w1m = _pad_weights(w1).astype(jnp.float32)        # (72, 4)
    w3m = _pad_weights(w3).astype(jnp.float32)        # (200, 4)
    b1c = b1.reshape(4, 1).astype(jnp.float32)
    b3c = b3.reshape(5, 1).astype(jnp.float32)

    # Ring-shaped validity mask over the v17 frame (per-image, period = pitch).
    j = jnp.arange(w1_width, dtype=jnp.int32)
    img = j // _PITCH
    f = j % _PITCH
    col = (f - _LEAD) % _PW
    valid = ((img < bblk) & (f >= _LEAD) & (f < _LEAD + _H1 * _PW)
             & (col < _H1))
    valid = valid.astype(jnp.float32).reshape(1, w1_width)

    kern = functools.partial(_fused_conv_gelu_conv_kernel,
                             w1_width=w1_width, w3_width=w3_width)

    flops = g * (2 * 9 * 16 * w1_width          # conv1 taps
                 + 80 * 4 * w1_width            # 2x exact GELU (approx count)
                 + 2 * 25 * 20 * w3_width)      # conv3 taps
    cost = pl.CostEstimate(
        flops=flops,
        transcendentals=g * 8 * w1_width,
        bytes_accessed=g * 4 * (16 * ph_width + 5 * w3_width + w1_width) + 4400)

    out = pl.pallas_call(
        kern,
        out_shape=jax.ShapeDtypeStruct((g, 5, w3_width), jnp.float32),
        grid=(g,),
        in_specs=[
            pl.BlockSpec((1, 16, ph_width), lambda i: (i, 0, 0)),
            pl.BlockSpec((9 * 8, 4), lambda i: (0, 0)),
            pl.BlockSpec((4, 1), lambda i: (0, 0)),
            pl.BlockSpec((25 * 8, 4), lambda i: (0, 0)),
            pl.BlockSpec((5, 1), lambda i: (0, 0)),
            pl.BlockSpec((1, w1_width), lambda i: (0, 0)),
        ],
        out_specs=pl.BlockSpec((1, 5, w3_width), lambda i: (i, 0, 0)),
        compiler_params=pltpu.CompilerParams(
            dimension_semantics=("parallel",)),
        cost_estimate=cost,
    )(ph, w1m, b1c, w3m, b3c, valid)

    # (G,5,W3) -> (NB,5,10,10): strip per-image pitch padding and junk columns.
    out = out[:, :, :bblk * _PITCH].reshape(g, 5, bblk, _PITCH)
    out = out.transpose(0, 2, 1, 3).reshape(nb, 5, _PITCH)
    out = out[:, :, :_H3 * _PW].reshape(nb, 5, _H3, _PW)[:, :, :, :_H3]
    return out[:n]


# ---------------- parameters / reference / main ----------------

def init_params(key):
    def conv_init(k, cout, cin, ksz):
        kw_, kb_ = jax.random.split(k)
        fan_in = cin * ksz * ksz
        bound = 1.0 / math.sqrt(fan_in)
        w = jax.random.uniform(kw_, (cout, cin, ksz, ksz), jnp.float32,
                               -bound, bound)
        b = jax.random.uniform(kb_, (cout,), jnp.float32, -bound, bound)
        return w, b

    k1, _k2, k3 = jax.random.split(key, 3)
    w1, b1 = conv_init(k1, 4, 4, 3)   # conv1: 4 -> 4, k=3
    # conv2 (4 -> 8) only feeds v7, which never reaches the output -> skipped.
    w3, b3 = conv_init(k3, 5, 4, 5)   # conv3 applied to 4-channel v17 (see TODO)
    return (w1, b1), (w3, b3)


def _reference_forward(x, params):
    # Pure-JAX reference (XLA convs) for a correctness cross-check.
    (w1, b1), (w3, b3) = params
    dn = ("NCHW", "OIHW", "NCHW")
    hp = jax.lax.Precision.HIGHEST
    gelu = lambda t: (t * 0.5) * (jax.scipy.special.erf(t * _INV_SQRT2) + 1.0)
    v1 = jax.lax.conv_general_dilated(
        x, w1, (2, 2), ((1, 1), (1, 1)), dimension_numbers=dn,
        precision=hp) + b1[None, :, None, None]
    v17 = gelu(gelu(v1))
    return jax.lax.conv_general_dilated(
        v17, w3, (1, 1), ((1, 1), (1, 1)), dimension_numbers=dn,
        precision=hp) + b3[None, :, None, None]


if __name__ == "__main__":
    key = jax.random.PRNGKey(0)
    kx, kp = jax.random.split(key)
    params = init_params(kp)

    # Batched input exercises batch-blocking (B=2 -> 2 "parallel" grid steps).
    x = jax.random.normal(kx, (4, 4, 23, 23), jnp.float32)
    out = model_forward(x, params)
    jax.block_until_ready(out)
    assert out.shape == (4, 5, 10, 10), out.shape
    assert bool(jnp.isfinite(out).all())
    ref = _reference_forward(x, params)
    assert bool(jnp.allclose(out, ref, atol=5e-4, rtol=5e-3)), (
        "max abs err = %e" % float(jnp.max(jnp.abs(out - ref))))

    # Single-image case matching the original PyTorch script (randn(1,4,23,23)).
    x1 = jax.random.normal(jax.random.fold_in(kx, 1), (1, 4, 23, 23),
                           jnp.float32)
    out1 = model_forward(x1, params)
    jax.block_until_ready(out1)
    assert out1.shape == (1, 5, 10, 10), out1.shape
    ref1 = _reference_forward(x1, params)
    assert bool(jnp.allclose(out1, ref1, atol=5e-4, rtol=5e-3)), (
        "max abs err = %e" % float(jnp.max(jnp.abs(out1 - ref1))))

    print("KERNEL_OK")
</pallas_src>

<mosaic_0001>
module attributes {stable_mosaic.version = 11 : i64} {
  func.func @_fused_conv_gelu_conv_kernel(%arg0: i32, %arg1: memref<1x16x640xf32, #tpu.memory_space<vmem>>, %arg2: memref<72x4xf32, #tpu.memory_space<vmem>>, %arg3: memref<4x1xf32, #tpu.memory_space<vmem>>, %arg4: memref<200x4xf32, #tpu.memory_space<vmem>>, %arg5: memref<5x1xf32, #tpu.memory_space<vmem>>, %arg6: memref<1x576xf32, #tpu.memory_space<vmem>>, %arg7: memref<1x5x512xf32, #tpu.memory_space<vmem>>) attributes {dimension_semantics = [#tpu.dimension_semantics<parallel>], iteration_bounds = array<i64: 2>, scalar_prefetch = 0 : i64, scratch_operands = 0 : i64, tpu.core_type = #tpu.core_type<tc>, window_params = [{transform_indices = @transform_0, window_bounds = array<i64: 1, 16, 640>}, {pipeline_mode = #tpu.pipeline_mode<synchronous>, transform_indices = @transform_1, window_bounds = array<i64: 72, 4>}, {pipeline_mode = #tpu.pipeline_mode<synchronous>, transform_indices = @transform_2, window_bounds = array<i64: 4, 1>}, {pipeline_mode = #tpu.pipeline_mode<synchronous>, transform_indices = @transform_3, window_bounds = array<i64: 200, 4>}, {pipeline_mode = #tpu.pipeline_mode<synchronous>, transform_indices = @transform_4, window_bounds = array<i64: 5, 1>}, {pipeline_mode = #tpu.pipeline_mode<synchronous>, transform_indices = @transform_5, window_bounds = array<i64: 1, 576>}, {transform_indices = @transform_6, window_bounds = array<i64: 1, 5, 512>}]} {
    %c0 = arith.constant 0 : index
    %c0_0 = arith.constant 0 : index
    %0 = vector.load %arg3[%c0, %c0_0] : memref<4x1xf32, #tpu.memory_space<vmem>>, vector<4x1xf32>
    %c0_1 = arith.constant 0 : index
    %c0_2 = arith.constant 0 : index
    %1 = vector.load %arg5[%c0_1, %c0_2] : memref<5x1xf32, #tpu.memory_space<vmem>>, vector<5x1xf32>
    %c0_3 = arith.constant 0 : index
    %c0_4 = arith.constant 0 : index
    %2 = vector.load %arg6[%c0_3, %c0_4] : memref<1x576xf32, #tpu.memory_space<vmem>>, vector<1x576xf32>
    %c0_5 = arith.constant 0 : index
    %c0_6 = arith.constant 0 : index
    %c0_7 = arith.constant 0 : index
    %3 = vector.load %arg1[%c0_5, %c0_6, %c0_7] : memref<1x16x640xf32, #tpu.memory_space<vmem>>, vector<1x4x576xf32>
    %4 = vector.shape_cast %3 : vector<1x4x576xf32> to vector<4x576xf32>
    %c0_8 = arith.constant 0 : index
    %c0_9 = arith.constant 0 : index
    %5 = vector.load %arg2[%c0_8, %c0_9] : memref<72x4xf32, #tpu.memory_space<vmem>>, vector<4x4xf32>
    %6 = vector.extract_strided_slice %5 {offsets = [0, 0], sizes = [4, 1], strides = [1, 1]} : vector<4x4xf32> to vector<4x1xf32>
    %7 = vector.extract_strided_slice %4 {offsets = [0, 0], sizes = [1, 576], strides = [1, 1]} : vector<4x576xf32> to vector<1x576xf32>
    %8 = vector.broadcast %6 : vector<4x1xf32> to vector<4x576xf32>
    %9 = vector.broadcast %7 : vector<1x576xf32> to vector<4x576xf32>
    %10 = arith.mulf %8, %9 : vector<4x576xf32>
    %11 = vector.extract_strided_slice %5 {offsets = [0, 1], sizes = [4, 1], strides = [1, 1]} : vector<4x4xf32> to vector<4x1xf32>
    %12 = vector.extract_strided_slice %4 {offsets = [1, 0], sizes = [1, 576], strides = [1, 1]} : vector<4x576xf32> to vector<1x576xf32>
    %13 = vector.broadcast %11 : vector<4x1xf32> to vector<4x576xf32>
    %14 = vector.broadcast %12 : vector<1x576xf32> to vector<4x576xf32>
    %15 = arith.mulf %13, %14 : vector<4x576xf32>
    %16 = vector.extract_strided_slice %5 {offsets = [0, 2], sizes = [4, 1], strides = [1, 1]} : vector<4x4xf32> to vector<4x1xf32>
    %17 = vector.extract_strided_slice %4 {offsets = [2, 0], sizes = [1, 576], strides = [1, 1]} : vector<4x576xf32> to vector<1x576xf32>
    %18 = vector.broadcast %16 : vector<4x1xf32> to vector<4x576xf32>
    %19 = vector.broadcast %17 : vector<1x576xf32> to vector<4x576xf32>
    %20 = arith.mulf %18, %19 : vector<4x576xf32>
    %21 = vector.extract_strided_slice %5 {offsets = [0, 3], sizes = [4, 1], strides = [1, 1]} : vector<4x4xf32> to vector<4x1xf32>
    %22 = vector.extract_strided_slice %4 {offsets = [3, 0], sizes = [1, 576], strides = [1, 1]} : vector<4x576xf32> to vector<1x576xf32>
    %23 = vector.broadcast %21 : vector<4x1xf32> to vector<4x576xf32>
    %24 = vector.broadcast %22 : vector<1x576xf32> to vector<4x576xf32>
    %25 = arith.mulf %23, %24 : vector<4x576xf32>
    %c0_10 = arith.constant 0 : index
    %c4 = arith.constant 4 : index
    %c0_11 = arith.constant 0 : index
    %26 = vector.load %arg1[%c0_10, %c4, %c0_11] : memref<1x16x640xf32, #tpu.memory_space<vmem>>, vector<1x4x576xf32>
    %27 = vector.shape_cast %26 : vector<1x4x576xf32> to vector<4x576xf32>
    %c8 = arith.constant 8 : index
    %c0_12 = arith.constant 0 : index
    %28 = vector.load %arg2[%c8, %c0_12] : memref<72x4xf32, #tpu.memory_space<vmem>>, vector<4x4xf32>
    %29 = vector.extract_strided_slice %28 {offsets = [0, 0], sizes = [4, 1], strides = [1, 1]} : vector<4x4xf32> to vector<4x1xf32>
    %30 = vector.extract_strided_slice %27 {offsets = [0, 0], sizes = [1, 576], strides = [1, 1]} : vector<4x576xf32> to vector<1x576xf32>
    %31 = vector.broadcast %29 : vector<4x1xf32> to vector<4x576xf32>
    %32 = vector.broadcast %30 : vector<1x576xf32> to vector<4x576xf32>
    %33 = arith.mulf %31, %32 : vector<4x576xf32>
    %34 = vector.extract_strided_slice %28 {offsets = [0, 1], sizes = [4, 1], strides = [1, 1]} : vector<4x4xf32> to vector<4x1xf32>
    %35 = vector.extract_strided_slice %27 {offsets = [1, 0], sizes = [1, 576], strides = [1, 1]} : vector<4x576xf32> to vector<1x576xf32>
    %36 = vector.broadcast %34 : vector<4x1xf32> to vector<4x576xf32>
    %37 = vector.broadcast %35 : vector<1x576xf32> to vector<4x576xf32>
    %38 = arith.mulf %36, %37 : vector<4x576xf32>
    %39 = vector.extract_strided_slice %28 {offsets = [0, 2], sizes = [4, 1], strides = [1, 1]} : vector<4x4xf32> to vector<4x1xf32>
    %40 = vector.extract_strided_slice %27 {offsets = [2, 0], sizes = [1, 576], strides = [1, 1]} : vector<4x576xf32> to vector<1x576xf32>
    %41 = vector.broadcast %39 : vector<4x1xf32> to vector<4x576xf32>
    %42 = vector.broadcast %40 : vector<1x576xf32> to vector<4x576xf32>
    %43 = arith.mulf %41, %42 : vector<4x576xf32>
    %44 = vector.extract_strided_slice %28 {offsets = [0, 3], sizes = [4, 1], strides = [1, 1]} : vector<4x4xf32> to vector<4x1xf32>
    %45 = vector.extract_strided_slice %27 {offsets = [3, 0], sizes = [1, 576], strides = [1, 1]} : vector<4x576xf32> to vector<1x576xf32>
    %46 = vector.broadcast %44 : vector<4x1xf32> to vector<4x576xf32>
    %47 = vector.broadcast %45 : vector<1x576xf32> to vector<4x576xf32>
    %48 = arith.mulf %46, %47 : vector<4x576xf32>
    %49 = arith.addf %10, %33 : vector<4x576xf32>
    %50 = arith.addf %15, %38 : vector<4x576xf32>
    %51 = arith.addf %20, %43 : vector<4x576xf32>
    %52 = arith.addf %25, %48 : vector<4x576xf32>
    %c0_13 = arith.constant 0 : index
    %c0_14 = arith.constant 0 : index
    %c1 = arith.constant 1 : index
    %53 = vector.load %arg1[%c0_13, %c0_14, %c1] : memref<1x16x640xf32, #tpu.memory_space<vmem>>, vector<1x4x576xf32>
    %54 = vector.shape_cast %53 : vector<1x4x576xf32> to vector<4x576xf32>
    %c16 = arith.constant 16 : index
    %c0_15 = arith.constant 0 : index
    %55 = vector.load %arg2[%c16, %c0_15] : memref<72x4xf32, #tpu.memory_space<vmem>>, vector<4x4xf32>
    %56 = vector.extract_strided_slice %55 {offsets = [0, 0], sizes = [4, 1], strides = [1, 1]} : vector<4x4xf32> to vector<4x1xf32>
    %57 = vector.extract_strided_slice %54 {offsets = [0, 0], sizes = [1, 576], strides = [1, 1]} : vector<4x576xf32> to vector<1x576xf32>
    %58 = vector.broadcast %56 : vector<4x1xf32> to vector<4x576xf32>
    %59 = vector.broadcast %57 : vector<1x576xf32> to vector<4x576xf32>
    %60 = arith.mulf %58, %59 : vector<4x576xf32>
    %61 = vector.extract_strided_slice %55 {offsets = [0, 1], sizes = [4, 1], strides = [1, 1]} : vector<4x4xf32> to vector<4x1xf32>
    %62 = vector.extract_strided_slice %54 {offsets = [1, 0], sizes = [1, 576], strides = [1, 1]} : vector<4x576xf32> to vector<1x576xf32>
    %63 = vector.broadcast %61 : vector<4x1xf32> to vector<4x576xf32>
    %64 = vector.broadcast %62 : vector<1x576xf32> to vector<4x576xf32>
    %65 = arith.mulf %63, %64 : vector<4x576xf32>
    %66 = vector.extract_strided_slice %55 {offsets = [0, 2], sizes = [4, 1], strides = [1, 1]} : vector<4x4xf32> to vector<4x1xf32>
    %67 = vector.extract_strided_slice %54 {offsets = [2, 0], sizes = [1, 576], strides = [1, 1]} : vector<4x576xf32> to vector<1x576xf32>
    %68 = vector.broadcast %66 : vector<4x1xf32> to vector<4x576xf32>
    %69 = vector.broadcast %67 : vector<1x576xf32> to vector<4x576xf32>
    %70 = arith.mulf %68, %69 : vector<4x576xf32>
    %71 = vector.extract_strided_slice %55 {offsets = [0, 3], sizes = [4, 1], strides = [1, 1]} : vector<4x4xf32> to vector<4x1xf32>
    %72 = vector.extract_strided_slice %54 {offsets = [3, 0], sizes = [1, 576], strides = [1, 1]} : vector<4x576xf32> to vector<1x576xf32>
    %73 = vector.broadcast %71 : vector<4x1xf32> to vector<4x576xf32>
    %74 = vector.broadcast %72 : vector<1x576xf32> to vector<4x576xf32>
    %75 = arith.mulf %73, %74 : vector<4x576xf32>
    %76 = arith.addf %49, %60 : vector<4x576xf32>
    %77 = arith.addf %50, %65 : vector<4x576xf32>
    %78 = arith.addf %51, %70 : vector<4x576xf32>
    %79 = arith.addf %52, %75 : vector<4x576xf32>
    %c0_16 = arith.constant 0 : index
    %c8_17 = arith.constant 8 : index
    %c0_18 = arith.constant 0 : index
    %80 = vector.load %arg1[%c0_16, %c8_17, %c0_18] : memref<1x16x640xf32, #tpu.memory_space<vmem>>, vector<1x4x576xf32>
    %81 = vector.shape_cast %80 : vector<1x4x576xf32> to vector<4x576xf32>
    %c24 = arith.constant 24 : index
    %c0_19 = arith.constant 0 : index
    %82 = vector.load %arg2[%c24, %c0_19] : memref<72x4xf32, #tpu.memory_space<vmem>>, vector<4x4xf32>
    %83 = vector.extract_strided_slice %82 {offsets = [0, 0], sizes = [4, 1], strides = [1, 1]} : vector<4x4xf32> to vector<4x1xf32>
    %84 = vector.extract_strided_slice %81 {offsets = [0, 0], sizes = [1, 576], strides = [1, 1]} : vector<4x576xf32> to vector<1x576xf32>
    %85 = vector.broadcast %83 : vector<4x1xf32> to vector<4x576xf32>
    %86 = vector.broadcast %84 : vector<1x576xf32> to vector<4x576xf32>
    %87 = arith.mulf %85, %86 : vector<4x576xf32>
    %88 = vector.extract_strided_slice %82 {offsets = [0, 1], sizes = [4, 1], strides = [1, 1]} : vector<4x4xf32> to vector<4x1xf32>
    %89 = vector.extract_strided_slice %81 {offsets = [1, 0], sizes = [1, 576], strides = [1, 1]} : vector<4x576xf32> to vector<1x576xf32>
    %90 = vector.broadcast %88 : vector<4x1xf32> to vector<4x576xf32>
    %91 = vector.broadcast %89 : vector<1x576xf32> to vector<4x576xf32>
    %92 = arith.mulf %90, %91 : vector<4x576xf32>
    %93 = vector.extract_strided_slice %82 {offsets = [0, 2], sizes = [4, 1], strides = [1, 1]} : vector<4x4xf32> to vector<4x1xf32>
    %94 = vector.extract_strided_slice %81 {offsets = [2, 0], sizes = [1, 576], strides = [1, 1]} : vector<4x576xf32> to vector<1x576xf32>
    %95 = vector.broadcast %93 : vector<4x1xf32> to vector<4x576xf32>
    %96 = vector.broadcast %94 : vector<1x576xf32> to vector<4x576xf32>
    %97 = arith.mulf %95, %96 : vector<4x576xf32>
    %98 = vector.extract_strided_slice %82 {offsets = [0, 3], sizes = [4, 1], strides = [1, 1]} : vector<4x4xf32> to vector<4x1xf32>
    %99 = vector.extract_strided_slice %81 {offsets = [3, 0], sizes = [1, 576], strides = [1, 1]} : vector<4x576xf32> to vector<1x576xf32>
    %100 = vector.broadcast %98 : vector<4x1xf32> to vector<4x576xf32>
    %101 = vector.broadcast %99 : vector<1x576xf32> to vector<4x576xf32>
    %102 = arith.mulf %100, %101 : vector<4x576xf32>
    %103 = arith.addf %76, %87 : vector<4x576xf32>
    %104 = arith.addf %77, %92 : vector<4x576xf32>
    %105 = arith.addf %78, %97 : vector<4x576xf32>
    %106 = arith.addf %79, %102 : vector<4x576xf32>
    %c0_20 = arith.constant 0 : index
    %c12 = arith.constant 12 : index
    %c0_21 = arith.constant 0 : index
    %107 = vector.load %arg1[%c0_20, %c12, %c0_21] : memref<1x16x640xf32, #tpu.memory_space<vmem>>, vector<1x4x576xf32>
    %108 = vector.shape_cast %107 : vector<1x4x576xf32> to vector<4x576xf32>
    %c32 = arith.constant 32 : index
    %c0_22 = arith.constant 0 : index
    %109 = vector.load %arg2[%c32, %c0_22] : memref<72x4xf32, #tpu.memory_space<vmem>>, vector<4x4xf32>
    %110 = vector.extract_strided_slice %109 {offsets = [0, 0], sizes = [4, 1], strides = [1, 1]} : vector<4x4xf32> to vector<4x1xf32>
    %111 = vector.extract_strided_slice %108 {offsets = [0, 0], sizes = [1, 576], strides = [1, 1]} : vector<4x576xf32> to vector<1x576xf32>
    %112 = vector.broadcast %110 : vector<4x1xf32> to vector<4x576xf32>
    %113 = vector.broadcast %111 : vector<1x576xf32> to vector<4x576xf32>
    %114 = arith.mulf %112, %113 : vector<4x576xf32>
    %115 = vector.extract_strided_slice %109 {offsets = [0, 1], sizes = [4, 1], strides = [1, 1]} : vector<4x4xf32> to vector<4x1xf32>
    %116 = vector.extract_strided_slice %108 {offsets = [1, 0], sizes = [1, 576], strides = [1, 1]} : vector<4x576xf32> to vector<1x576xf32>
    %117 = vector.broadcast %115 : vector<4x1xf32> to vector<4x576xf32>
    %118 = vector.broadcast %116 : vector<1x576xf32> to vector<4x576xf32>
    %119 = arith.mulf %117, %118 : vector<4x576xf32>
    %120 = vector.extract_strided_slice %109 {offsets = [0, 2], sizes = [4, 1], strides = [1, 1]} : vector<4x4xf32> to vector<4x1xf32>
    %121 = vector.extract_strided_slice %108 {offsets = [2, 0], sizes = [1, 576], strides = [1, 1]} : vector<4x576xf32> to vector<1x576xf32>
    %122 = vector.broadcast %120 : vector<4x1xf32> to vector<4x576xf32>
    %123 = vector.broadcast %121 : vector<1x576xf32> to vector<4x576xf32>
    %124 = arith.mulf %122, %123 : vector<4x576xf32>
    %125 = vector.extract_strided_slice %109 {offsets = [0, 3], sizes = [4, 1], strides = [1, 1]} : vector<4x4xf32> to vector<4x1xf32>
    %126 = vector.extract_strided_slice %108 {offsets = [3, 0], sizes = [1, 576], strides = [1, 1]} : vector<4x576xf32> to vector<1x576xf32>
    %127 = vector.broadcast %125 : vector<4x1xf32> to vector<4x576xf32>
    %128 = vector.broadcast %126 : vector<1x576xf32> to vector<4x576xf32>
    %129 = arith.mulf %127, %128 : vector<4x576xf32>
    %130 = arith.addf %103, %114 : vector<4x576xf32>
    %131 = arith.addf %104, %119 : vector<4x576xf32>
    %132 = arith.addf %105, %124 : vector<4x576xf32>
    %133 = arith.addf %106, %129 : vector<4x576xf32>
    %c0_23 = arith.constant 0 : index
    %c8_24 = arith.constant 8 : index
    %c1_25 = arith.constant 1 : index
    %134 = vector.load %arg1[%c0_23, %c8_24, %c1_25] : memref<1x16x640xf32, #tpu.memory_space<vmem>>, vector<1x4x576xf32>
    %135 = vector.shape_cast %134 : vector<1x4x576xf32> to vector<4x576xf32>
    %c40 = arith.constant 40 : index
    %c0_26 = arith.constant 0 : index
    %136 = vector.load %arg2[%c40, %c0_26] : memref<72x4xf32, #tpu.memory_space<vmem>>, vector<4x4xf32>
    %137 = vector.extract_strided_slice %136 {offsets = [0, 0], sizes = [4, 1], strides = [1, 1]} : vector<4x4xf32> to vector<4x1xf32>
    %138 = vector.extract_strided_slice %135 {offsets = [0, 0], sizes = [1, 576], strides = [1, 1]} : vector<4x576xf32> to vector<1x576xf32>
    %139 = vector.broadcast %137 : vector<4x1xf32> to vector<4x576xf32>
    %140 = vector.broadcast %138 : vector<1x576xf32> to vector<4x576xf32>
    %141 = arith.mulf %139, %140 : vector<4x576xf32>
    %142 = vector.extract_strided_slice %136 {offsets = [0, 1], sizes = [4, 1], strides = [1, 1]} : vector<4x4xf32> to vector<4x1xf32>
    %143 = vector.extract_strided_slice %135 {offsets = [1, 0], sizes = [1, 576], strides = [1, 1]} : vector<4x576xf32> to vector<1x576xf32>
    %144 = vector.broadcast %142 : vector<4x1xf32> to vector<4x576xf32>
    %145 = vector.broadcast %143 : vector<1x576xf32> to vector<4x576xf32>
    %146 = arith.mulf %144, %145 : vector<4x576xf32>
    %147 = vector.extract_strided_slice %136 {offsets = [0, 2], sizes = [4, 1], strides = [1, 1]} : vector<4x4xf32> to vector<4x1xf32>
    %148 = vector.extract_strided_slice %135 {offsets = [2, 0], sizes = [1, 576], strides = [1, 1]} : vector<4x576xf32> to vector<1x576xf32>
    %149 = vector.broadcast %147 : vector<4x1xf32> to vector<4x576xf32>
    %150 = vector.broadcast %148 : vector<1x576xf32> to vector<4x576xf32>
    %151 = arith.mulf %149, %150 : vector<4x576xf32>
    %152 = vector.extract_strided_slice %136 {offsets = [0, 3], sizes = [4, 1], strides = [1, 1]} : vector<4x4xf32> to vector<4x1xf32>
    %153 = vector.extract_strided_slice %135 {offsets = [3, 0], sizes = [1, 576], strides = [1, 1]} : vector<4x576xf32> to vector<1x576xf32>
    %154 = vector.broadcast %152 : vector<4x1xf32> to vector<4x576xf32>
    %155 = vector.broadcast %153 : vector<1x576xf32> to vector<4x576xf32>
    %156 = arith.mulf %154, %155 : vector<4x576xf32>
    %157 = arith.addf %130, %141 : vector<4x576xf32>
    %158 = arith.addf %131, %146 : vector<4x576xf32>
    %159 = arith.addf %132, %151 : vector<4x576xf32>
    %160 = arith.addf %133, %156 : vector<4x576xf32>
    %c0_27 = arith.constant 0 : index
    %c0_28 = arith.constant 0 : index
    %c14 = arith.constant 14 : index
    %161 = vector.load %arg1[%c0_27, %c0_28, %c14] : memref<1x16x640xf32, #tpu.memory_space<vmem>>, vector<1x4x576xf32>
    %162 = vector.shape_cast %161 : vector<1x4x576xf32> to vector<4x576xf32>
    %c48 = arith.constant 48 : index
    %c0_29 = arith.constant 0 : index
    %163 = vector.load %arg2[%c48, %c0_29] : memref<72x4xf32, #tpu.memory_space<vmem>>, vector<4x4xf32>
    %164 = vector.extract_strided_slice %163 {offsets = [0, 0], sizes = [4, 1], strides = [1, 1]} : vector<4x4xf32> to vector<4x1xf32>
    %165 = vector.extract_strided_slice %162 {offsets = [0, 0], sizes = [1, 576], strides = [1, 1]} : vector<4x576xf32> to vector<1x576xf32>
    %166 = vector.broadcast %164 : vector<4x1xf32> to vector<4x576xf32>
    %167 = vector.broadcast %165 : vector<1x576xf32> to vector<4x576xf32>
    %168 = arith.mulf %166, %167 : vector<4x576xf32>
    %169 = vector.extract_strided_slice %163 {offsets = [0, 1], sizes = [4, 1], strides = [1, 1]} : vector<4x4xf32> to vector<4x1xf32>
    %170 = vector.extract_strided_slice %162 {offsets = [1, 0], sizes = [1, 576], strides = [1, 1]} : vector<4x576xf32> to vector<1x576xf32>
    %171 = vector.broadcast %169 : vector<4x1xf32> to vector<4x576xf32>
    %172 = vector.broadcast %170 : vector<1x576xf32> to vector<4x576xf32>
    %173 = arith.mulf %171, %172 : vector<4x576xf32>
    %174 = vector.extract_strided_slice %163 {offsets = [0, 2], sizes = [4, 1], strides = [1, 1]} : vector<4x4xf32> to vector<4x1xf32>
    %175 = vector.extract_strided_slice %162 {offsets = [2, 0], sizes = [1, 576], strides = [1, 1]} : vector<4x576xf32> to vector<1x576xf32>
    %176 = vector.broadcast %174 : vector<4x1xf32> to vector<4x576xf32>
    %177 = vector.broadcast %175 : vector<1x576xf32> to vector<4x576xf32>
    %178 = arith.mulf %176, %177 : vector<4x576xf32>
    %179 = vector.extract_strided_slice %163 {offsets = [0, 3], sizes = [4, 1], strides = [1, 1]} : vector<4x4xf32> to vector<4x1xf32>
    %180 = vector.extract_strided_slice %162 {offsets = [3, 0], sizes = [1, 576], strides = [1, 1]} : vector<4x576xf32> to vector<1x576xf32>
    %181 = vector.broadcast %179 : vector<4x1xf32> to vector<4x576xf32>
    %182 = vector.broadcast %180 : vector<1x576xf32> to vector<4x576xf32>
    %183 = arith.mulf %181, %182 : vector<4x576xf32>
    %184 = arith.addf %157, %168 : vector<4x576xf32>
    %185 = arith.addf %158, %173 : vector<4x576xf32>
    %186 = arith.addf %159, %178 : vector<4x576xf32>
    %187 = arith.addf %160, %183 : vector<4x576xf32>
    %c0_30 = arith.constant 0 : index
    %c4_31 = arith.constant 4 : index
    %c14_32 = arith.constant 14 : index
    %188 = vector.load %arg1[%c0_30, %c4_31, %c14_32] : memref<1x16x640xf32, #tpu.memory_space<vmem>>, vector<1x4x576xf32>
    %189 = vector.shape_cast %188 : vector<1x4x576xf32> to vector<4x576xf32>
    %c56 = arith.constant 56 : index
    %c0_33 = arith.constant 0 : index
    %190 = vector.load %arg2[%c56, %c0_33] : memref<72x4xf32, #tpu.memory_space<vmem>>, vector<4x4xf32>
    %191 = vector.extract_strided_slice %190 {offsets = [0, 0], sizes = [4, 1], strides = [1, 1]} : vector<4x4xf32> to vector<4x1xf32>
    %192 = vector.extract_strided_slice %189 {offsets = [0, 0], sizes = [1, 576], strides = [1, 1]} : vector<4x576xf32> to vector<1x576xf32>
    %193 = vector.broadcast %191 : vector<4x1xf32> to vector<4x576xf32>
    %194 = vector.broadcast %192 : vector<1x576xf32> to vector<4x576xf32>
    %195 = arith.mulf %193, %194 : vector<4x576xf32>
    %196 = vector.extract_strided_slice %190 {offsets = [0, 1], sizes = [4, 1], strides = [1, 1]} : vector<4x4xf32> to vector<4x1xf32>
    %197 = vector.extract_strided_slice %189 {offsets = [1, 0], sizes = [1, 576], strides = [1, 1]} : vector<4x576xf32> to vector<1x576xf32>
    %198 = vector.broadcast %196 : vector<4x1xf32> to vector<4x576xf32>
    %199 = vector.broadcast %197 : vector<1x576xf32> to vector<4x576xf32>
    %200 = arith.mulf %198, %199 : vector<4x576xf32>
    %201 = vector.extract_strided_slice %190 {offsets = [0, 2], sizes = [4, 1], strides = [1, 1]} : vector<4x4xf32> to vector<4x1xf32>
    %202 = vector.extract_strided_slice %189 {offsets = [2, 0], sizes = [1, 576], strides = [1, 1]} : vector<4x576xf32> to vector<1x576xf32>
    %203 = vector.broadcast %201 : vector<4x1xf32> to vector<4x576xf32>
    %204 = vector.broadcast %202 : vector<1x576xf32> to vector<4x576xf32>
    %205 = arith.mulf %203, %204 : vector<4x576xf32>
    %206 = vector.extract_strided_slice %190 {offsets = [0, 3], sizes = [4, 1], strides = [1, 1]} : vector<4x4xf32> to vector<4x1xf32>
    %207 = vector.extract_strided_slice %189 {offsets = [3, 0], sizes = [1, 576], strides = [1, 1]} : vector<4x576xf32> to vector<1x576xf32>
    %208 = vector.broadcast %206 : vector<4x1xf32> to vector<4x576xf32>
    %209 = vector.broadcast %207 : vector<1x576xf32> to vector<4x576xf32>
    %210 = arith.mulf %208, %209 : vector<4x576xf32>
    %211 = arith.addf %184, %195 : vector<4x576xf32>
    %212 = arith.addf %185, %200 : vector<4x576xf32>
    %213 = arith.addf %186, %205 : vector<4x576xf32>
    %214 = arith.addf %187, %210 : vector<4x576xf32>
    %c0_34 = arith.constant 0 : index
    %c0_35 = arith.constant 0 : index
    %c15 = arith.constant 15 : index
    %215 = vector.load %arg1[%c0_34, %c0_35, %c15] : memref<1x16x640xf32, #tpu.memory_space<vmem>>, vector<1x4x576xf32>
    %216 = vector.shape_cast %215 : vector<1x4x576xf32> to vector<4x576xf32>
    %c64 = arith.constant 64 : index
    %c0_36 = arith.constant 0 : index
    %217 = vector.load %arg2[%c64, %c0_36] : memref<72x4xf32, #tpu.memory_space<vmem>>, vector<4x4xf32>
    %218 = vector.extract_strided_slice %217 {offsets = [0, 0], sizes = [4, 1], strides = [1, 1]} : vector<4x4xf32> to vector<4x1xf32>
    %219 = vector.extract_strided_slice %216 {offsets = [0, 0], sizes = [1, 576], strides = [1, 1]} : vector<4x576xf32> to vector<1x576xf32>
    %220 = vector.broadcast %218 : vector<4x1xf32> to vector<4x576xf32>
    %221 = vector.broadcast %219 : vector<1x576xf32> to vector<4x576xf32>
    %222 = arith.mulf %220, %221 : vector<4x576xf32>
    %223 = vector.extract_strided_slice %217 {offsets = [0, 1], sizes = [4, 1], strides = [1, 1]} : vector<4x4xf32> to vector<4x1xf32>
    %224 = vector.extract_strided_slice %216 {offsets = [1, 0], sizes = [1, 576], strides = [1, 1]} : vector<4x576xf32> to vector<1x576xf32>
    %225 = vector.broadcast %223 : vector<4x1xf32> to vector<4x576xf32>
    %226 = vector.broadcast %224 : vector<1x576xf32> to vector<4x576xf32>
    %227 = arith.mulf %225, %226 : vector<4x576xf32>
    %228 = vector.extract_strided_slice %217 {offsets = [0, 2], sizes = [4, 1], strides = [1, 1]} : vector<4x4xf32> to vector<4x1xf32>
    %229 = vector.extract_strided_slice %216 {offsets = [2, 0], sizes = [1, 576], strides = [1, 1]} : vector<4x576xf32> to vector<1x576xf32>
    %230 = vector.broadcast %228 : vector<4x1xf32> to vector<4x576xf32>
    %231 = vector.broadcast %229 : vector<1x576xf32> to vector<4x576xf32>
    %232 = arith.mulf %230, %231 : vector<4x576xf32>
    %233 = vector.extract_strided_slice %217 {offsets = [0, 3], sizes = [4, 1], strides = [1, 1]} : vector<4x4xf32> to vector<4x1xf32>
    %234 = vector.extract_strided_slice %216 {offsets = [3, 0], sizes = [1, 576], strides = [1, 1]} : vector<4x576xf32> to vector<1x576xf32>
    %235 = vector.broadcast %233 : vector<4x1xf32> to vector<4x576xf32>
    %236 = vector.broadcast %234 : vector<1x576xf32> to vector<4x576xf32>
    %237 = arith.mulf %235, %236 : vector<4x576xf32>
    %238 = arith.addf %211, %222 : vector<4x576xf32>
    %239 = arith.addf %212, %227 : vector<4x576xf32>
    %240 = arith.addf %213, %232 : vector<4x576xf32>
    %241 = arith.addf %214, %237 : vector<4x576xf32>
    %242 = arith.addf %238, %239 : vector<4x576xf32>
    %243 = arith.addf %240, %241 : vector<4x576xf32>
    %244 = arith.addf %242, %243 : vector<4x576xf32>
    %245 = vector.broadcast %0 : vector<4x1xf32> to vector<4x576xf32>
    %246 = arith.addf %244, %245 : vector<4x576xf32>
    %cst = arith.constant 5.000000e-01 : f32
    %247 = vector.broadcast %cst : f32 to vector<4x576xf32>
    %248 = arith.mulf %246, %247 : vector<4x576xf32>
    %cst_37 = arith.constant 0.707106769 : f32
    %249 = vector.broadcast %cst_37 : f32 to vector<4x576xf32>
    %250 = arith.mulf %246, %249 : vector<4x576xf32>
    %cst_38 = arith.constant -4.000000e+00 : f32
    %cst_39 = arith.constant 4.000000e+00 : f32
    %251 = vector.broadcast %cst_38 : f32 to vector<4x576xf32>
    %252 = arith.maximumf %251, %250 : vector<4x576xf32>
    %253 = vector.broadcast %cst_39 : f32 to vector<4x576xf32>
    %254 = arith.minimumf %253, %252 : vector<4x576xf32>
    %255 = arith.mulf %254, %254 : vector<4x576xf32>
    %cst_40 = arith.constant 2.29050653E-4 : f32
    %256 = vector.broadcast %cst_40 : f32 to vector<4x576xf32>
    %257 = arith.mulf %256, %255 : vector<4x576xf32>
    %cst_41 = arith.constant 0.00340829091 : f32
    %258 = vector.broadcast %cst_41 : f32 to vector<4x576xf32>
    %259 = arith.addf %257, %258 : vector<4x576xf32>
    %260 = arith.mulf %259, %255 : vector<4x576xf32>
    %cst_42 = arith.constant 0.0509556942 : f32
    %261 = vector.broadcast %cst_42 : f32 to vector<4x576xf32>
    %262 = arith.addf %260, %261 : vector<4x576xf32>
    %263 = arith.mulf %262, %255 : vector<4x576xf32>
    %cst_43 = arith.constant 0.185208321 : f32
    %264 = vector.broadcast %cst_43 : f32 to vector<4x576xf32>
    %265 = arith.addf %263, %264 : vector<4x576xf32>
    %266 = arith.mulf %265, %255 : vector<4x576xf32>
    %cst_44 = arith.constant 1.12837911 : f32
    %267 = vector.broadcast %cst_44 : f32 to vector<4x576xf32>
    %268 = arith.addf %266, %267 : vector<4x576xf32>
    %cst_45 = arith.constant -1.17916031E-7 : f32
    %269 = vector.broadcast %cst_45 : f32 to vector<4x576xf32>
    %270 = arith.mulf %269, %255 : vector<4x576xf32>
    %cst_46 = arith.constant 2.35479656E-5 : f32
    %271 = vector.broadcast %cst_46 : f32 to vector<4x576xf32>
    %272 = arith.addf %270, %271 : vector<4x576xf32>
    %273 = arith.mulf %272, %255 : vector<4x576xf32>
    %cst_47 = arith.constant 0.00101796258 : f32
    %274 = vector.broadcast %cst_47 : f32 to vector<4x576xf32>
    %275 = arith.addf %273, %274 : vector<4x576xf32>
    %276 = arith.mulf %275, %255 : vector<4x576xf32>
    %cst_48 = arith.constant 0.0140704699 : f32
    %277 = vector.broadcast %cst_48 : f32 to vector<4x576xf32>
    %278 = arith.addf %276, %277 : vector<4x576xf32>
    %279 = arith.mulf %278, %255 : vector<4x576xf32>
    %cst_49 = arith.constant 0.110985048 : f32
    %280 = vector.broadcast %cst_49 : f32 to vector<4x576xf32>
    %281 = arith.addf %279, %280 : vector<4x576xf32>
    %282 = arith.mulf %281, %255 : vector<4x576xf32>
    %cst_50 = arith.constant 0.497469246 : f32
    %283 = vector.broadcast %cst_50 : f32 to vector<4x576xf32>
    %284 = arith.addf %282, %283 : vector<4x576xf32>
    %285 = arith.mulf %284, %255 : vector<4x576xf32>
    %cst_51 = arith.constant 1.000000e+00 : f32
    %286 = vector.broadcast %cst_51 : f32 to vector<4x576xf32>
    %287 = arith.addf %285, %286 : vector<4x576xf32>
    %288 = tpu.reciprocal %287 {approx = true} : vector<4x576xf32> -> vector<4x576xf32>
    %289 = arith.mulf %287, %288 : vector<4x576xf32>
    %cst_52 = arith.constant 2.000000e+00 : f32
    %290 = vector.broadcast %cst_52 : f32 to vector<4x576xf32>
    %291 = arith.subf %290, %289 : vector<4x576xf32>
    %292 = arith.mulf %288, %291 : vector<4x576xf32>
    %293 = arith.mulf %254, %268 : vector<4x576xf32>
    %294 = arith.mulf %293, %292 : vector<4x576xf32>
    %cst_53 = arith.constant 1.000000e+00 : f32
    %295 = vector.broadcast %cst_53 : f32 to vector<4x576xf32>
    %296 = arith.addf %294, %295 : vector<4x576xf32>
    %297 = arith.mulf %248, %296 : vector<4x576xf32>
    %cst_54 = arith.constant 5.000000e-01 : f32
    %298 = vector.broadcast %cst_54 : f32 to vector<4x576xf32>
    %299 = arith.mulf %297, %298 : vector<4x576xf32>
    %cst_55 = arith.constant 0.707106769 : f32
    %300 = vector.broadcast %cst_55 : f32 to vector<4x576xf32>
    %301 = arith.mulf %297, %300 : vector<4x576xf32>
    %cst_56 = arith.constant -4.000000e+00 : f32
    %cst_57 = arith.constant 4.000000e+00 : f32
    %302 = vector.broadcast %cst_56 : f32 to vector<4x576xf32>
    %303 = arith.maximumf %302, %301 : vector<4x576xf32>
    %304 = vector.broadcast %cst_57 : f32 to vector<4x576xf32>
    %305 = arith.minimumf %304, %303 : vector<4x576xf32>
    %306 = arith.mulf %305, %305 : vector<4x576xf32>
    %cst_58 = arith.constant 2.29050653E-4 : f32
    %307 = vector.broadcast %cst_58 : f32 to vector<4x576xf32>
    %308 = arith.mulf %307, %306 : vector<4x576xf32>
    %cst_59 = arith.constant 0.00340829091 : f32
    %309 = vector.broadcast %cst_59 : f32 to vector<4x576xf32>
    %310 = arith.addf %308, %309 : vector<4x576xf32>
    %311 = arith.mulf %310, %306 : vector<4x576xf32>
    %cst_60 = arith.constant 0.0509556942 : f32
    %312 = vector.broadcast %cst_60 : f32 to vector<4x576xf32>
    %313 = arith.addf %311, %312 : vector<4x576xf32>
    %314 = arith.mulf %313, %306 : vector<4x576xf32>
    %cst_61 = arith.constant 0.185208321 : f32
    %315 = vector.broadcast %cst_61 : f32 to vector<4x576xf32>
    %316 = arith.addf %314, %315 : vector<4x576xf32>
    %317 = arith.mulf %316, %306 : vector<4x576xf32>
    %cst_62 = arith.constant 1.12837911 : f32
    %318 = vector.broadcast %cst_62 : f32 to vector<4x576xf32>
    %319 = arith.addf %317, %318 : vector<4x576xf32>
    %cst_63 = arith.constant -1.17916031E-7 : f32
    %320 = vector.broadcast %cst_63 : f32 to vector<4x576xf32>
    %321 = arith.mulf %320, %306 : vector<4x576xf32>
    %cst_64 = arith.constant 2.35479656E-5 : f32
    %322 = vector.broadcast %cst_64 : f32 to vector<4x576xf32>
    %323 = arith.addf %321, %322 : vector<4x576xf32>
    %324 = arith.mulf %323, %306 : vector<4x576xf32>
    %cst_65 = arith.constant 0.00101796258 : f32
    %325 = vector.broadcast %cst_65 : f32 to vector<4x576xf32>
    %326 = arith.addf %324, %325 : vector<4x576xf32>
    %327 = arith.mulf %326, %306 : vector<4x576xf32>
    %cst_66 = arith.constant 0.0140704699 : f32
    %328 = vector.broadcast %cst_66 : f32 to vector<4x576xf32>
    %329 = arith.addf %327, %328 : vector<4x576xf32>
    %330 = arith.mulf %329, %306 : vector<4x576xf32>
    %cst_67 = arith.constant 0.110985048 : f32
    %331 = vector.broadcast %cst_67 : f32 to vector<4x576xf32>
    %332 = arith.addf %330, %331 : vector<4x576xf32>
    %333 = arith.mulf %332, %306 : vector<4x576xf32>
    %cst_68 = arith.constant 0.497469246 : f32
    %334 = vector.broadcast %cst_68 : f32 to vector<4x576xf32>
    %335 = arith.addf %333, %334 : vector<4x576xf32>
    %336 = arith.mulf %335, %306 : vector<4x576xf32>
    %cst_69 = arith.constant 1.000000e+00 : f32
    %337 = vector.broadcast %cst_69 : f32 to vector<4x576xf32>
    %338 = arith.addf %336, %337 : vector<4x576xf32>
    %339 = tpu.reciprocal %338 {approx = true} : vector<4x576xf32> -> vector<4x576xf32>
    %340 = arith.mulf %338, %339 : vector<4x576xf32>
    %cst_70 = arith.constant 2.000000e+00 : f32
    %341 = vector.broadcast %cst_70 : f32 to vector<4x576xf32>
    %342 = arith.subf %341, %340 : vector<4x576xf32>
    %343 = arith.mulf %339, %342 : vector<4x576xf32>
    %344 = arith.mulf %305, %319 : vector<4x576xf32>
    %345 = arith.mulf %344, %343 : vector<4x576xf32>
    %cst_71 = arith.constant 1.000000e+00 : f32
    %346 = vector.broadcast %cst_71 : f32 to vector<4x576xf32>
    %347 = arith.addf %345, %346 : vector<4x576xf32>
    %348 = arith.mulf %299, %347 : vector<4x576xf32>
    %349 = vector.broadcast %2 : vector<1x576xf32> to vector<4x576xf32>
    %350 = arith.mulf %348, %349 : vector<4x576xf32>
    %351 = vector.extract_strided_slice %350 {offsets = [0, 0], sizes = [4, 512], strides = [1, 1]} : vector<4x576xf32> to vector<4x512xf32>
    %c0_72 = arith.constant 0 : index
    %c0_73 = arith.constant 0 : index
    %352 = vector.load %arg4[%c0_72, %c0_73] : memref<200x4xf32, #tpu.memory_space<vmem>>, vector<5x4xf32>
    %353 = vector.extract_strided_slice %352 {offsets = [0, 0], sizes = [5, 1], strides = [1, 1]} : vector<5x4xf32> to vector<5x1xf32>
    %354 = vector.extract_strided_slice %351 {offsets = [0, 0], sizes = [1, 512], strides = [1, 1]} : vector<4x512xf32> to vector<1x512xf32>
    %355 = vector.broadcast %353 : vector<5x1xf32> to vector<5x512xf32>
    %356 = vector.broadcast %354 : vector<1x512xf32> to vector<5x512xf32>
    %357 = arith.mulf %355, %356 : vector<5x512xf32>
    %358 = vector.extract_strided_slice %352 {offsets = [0, 1], sizes = [5, 1], strides = [1, 1]} : vector<5x4xf32> to vector<5x1xf32>
    %359 = vector.extract_strided_slice %351 {offsets = [1, 0], sizes = [1, 512], strides = [1, 1]} : vector<4x512xf32> to vector<1x512xf32>
    %360 = vector.broadcast %358 : vector<5x1xf32> to vector<5x512xf32>
    %361 = vector.broadcast %359 : vector<1x512xf32> to vector<5x512xf32>
    %362 = arith.mulf %360, %361 : vector<5x512xf32>
    %363 = vector.extract_strided_slice %352 {offsets = [0, 2], sizes = [5, 1], strides = [1, 1]} : vector<5x4xf32> to vector<5x1xf32>
    %364 = vector.extract_strided_slice %351 {offsets = [2, 0], sizes = [1, 512], strides = [1, 1]} : vector<4x512xf32> to vector<1x512xf32>
    %365 = vector.broadcast %363 : vector<5x1xf32> to vector<5x512xf32>
    %366 = vector.broadcast %364 : vector<1x512xf32> to vector<5x512xf32>
    %367 = arith.mulf %365, %366 : vector<5x512xf32>
    %368 = vector.extract_strided_slice %352 {offsets = [0, 3], sizes = [5, 1], strides = [1, 1]} : vector<5x4xf32> to vector<5x1xf32>
    %369 = vector.extract_strided_slice %351 {offsets = [3, 0], sizes = [1, 512], strides = [1, 1]} : vector<4x512xf32> to vector<1x512xf32>
    %370 = vector.broadcast %368 : vector<5x1xf32> to vector<5x512xf32>
    %371 = vector.broadcast %369 : vector<1x512xf32> to vector<5x512xf32>
    %372 = arith.mulf %370, %371 : vector<5x512xf32>
    %373 = vector.extract_strided_slice %350 {offsets = [0, 1], sizes = [4, 512], strides = [1, 1]} : vector<4x576xf32> to vector<4x512xf32>
    %c8_74 = arith.constant 8 : index
    %c0_75 = arith.constant 0 : index
    %374 = vector.load %arg4[%c8_74, %c0_75] : memref<200x4xf32, #tpu.memory_space<vmem>>, vector<5x4xf32>
    %375 = vector.extract_strided_slice %374 {offsets = [0, 0], sizes = [5, 1], strides = [1, 1]} : vector<5x4xf32> to vector<5x1xf32>
    %376 = vector.extract_strided_slice %373 {offsets = [0, 0], sizes = [1, 512], strides = [1, 1]} : vector<4x512xf32> to vector<1x512xf32>
    %377 = vector.broadcast %375 : vector<5x1xf32> to vector<5x512xf32>
    %378 = vector.broadcast %376 : vector<1x512xf32> to vector<5x512xf32>
    %379 = arith.mulf %377, %378 : vector<5x512xf32>
    %380 = vector.extract_strided_slice %374 {offsets = [0, 1], sizes = [5, 1], strides = [1, 1]} : vector<5x4xf32> to vector<5x1xf32>
    %381 = vector.extract_strided_slice %373 {offsets = [1, 0], sizes = [1, 512], strides = [1, 1]} : vector<4x512xf32> to vector<1x512xf32>
    %382 = vector.broadcast %380 : vector<5x1xf32> to vector<5x512xf32>
    %383 = vector.broadcast %381 : vector<1x512xf32> to vector<5x512xf32>
    %384 = arith.mulf %382, %383 : vector<5x512xf32>
    %385 = vector.extract_strided_slice %374 {offsets = [0, 2], sizes = [5, 1], strides = [1, 1]} : vector<5x4xf32> to vector<5x1xf32>
    %386 = vector.extract_strided_slice %373 {offsets = [2, 0], sizes = [1, 512], strides = [1, 1]} : vector<4x512xf32> to vector<1x512xf32>
    %387 = vector.broadcast %385 : vector<5x1xf32> to vector<5x512xf32>
    %388 = vector.broadcast %386 : vector<1x512xf32> to vector<5x512xf32>
    %389 = arith.mulf %387, %388 : vector<5x512xf32>
    %390 = vector.extract_strided_slice %374 {offsets = [0, 3], sizes = [5, 1], strides = [1, 1]} : vector<5x4xf32> to vector<5x1xf32>
    %391 = vector.extract_strided_slice %373 {offsets = [3, 0], sizes = [1, 512], strides = [1, 1]} : vector<4x512xf32> to vector<1x512xf32>
    %392 = vector.broadcast %390 : vector<5x1xf32> to vector<5x512xf32>
    %393 = vector.broadcast %391 : vector<1x512xf32> to vector<5x512xf32>
    %394 = arith.mulf %392, %393 : vector<5x512xf32>
    %395 = arith.addf %357, %379 : vector<5x512xf32>
    %396 = arith.addf %362, %384 : vector<5x512xf32>
    %397 = arith.addf %367, %389 : vector<5x512xf32>
    %398 = arith.addf %372, %394 : vector<5x512xf32>
    %399 = vector.extract_strided_slice %350 {offsets = [0, 2], sizes = [4, 512], strides = [1, 1]} : vector<4x576xf32> to vector<4x512xf32>
    %c16_76 = arith.constant 16 : index
    %c0_77 = arith.constant 0 : index
    %400 = vector.load %arg4[%c16_76, %c0_77] : memref<200x4xf32, #tpu.memory_space<vmem>>, vector<5x4xf32>
    %401 = vector.extract_strided_slice %400 {offsets = [0, 0], sizes = [5, 1], strides = [1, 1]} : vector<5x4xf32> to vector<5x1xf32>
    %402 = vector.extract_strided_slice %399 {offsets = [0, 0], sizes = [1, 512], strides = [1, 1]} : vector<4x512xf32> to vector<1x512xf32>
    %403 = vector.broadcast %401 : vector<5x1xf32> to vector<5x512xf32>
    %404 = vector.broadcast %402 : vector<1x512xf32> to vector<5x512xf32>
    %405 = arith.mulf %403, %404 : vector<5x512xf32>
    %406 = vector.extract_strided_slice %400 {offsets = [0, 1], sizes = [5, 1], strides = [1, 1]} : vector<5x4xf32> to vector<5x1xf32>
    %407 = vector.extract_strided_slice %399 {offsets = [1, 0], sizes = [1, 512], strides = [1, 1]} : vector<4x512xf32> to vector<1x512xf32>
    %408 = vector.broadcast %406 : vector<5x1xf32> to vector<5x512xf32>
    %409 = vector.broadcast %407 : vector<1x512xf32> to vector<5x512xf32>
    %410 = arith.mulf %408, %409 : vector<5x512xf32>
    %411 = vector.extract_strided_slice %400 {offsets = [0, 2], sizes = [5, 1], strides = [1, 1]} : vector<5x4xf32> to vector<5x1xf32>
    %412 = vector.extract_strided_slice %399 {offsets = [2, 0], sizes = [1, 512], strides = [1, 1]} : vector<4x512xf32> to vector<1x512xf32>
    %413 = vector.broadcast %411 : vector<5x1xf32> to vector<5x512xf32>
    %414 = vector.broadcast %412 : vector<1x512xf32> to vector<5x512xf32>
    %415 = arith.mulf %413, %414 : vector<5x512xf32>
    %416 = vector.extract_strided_slice %400 {offsets = [0, 3], sizes = [5, 1], strides = [1, 1]} : vector<5x4xf32> to vector<5x1xf32>
    %417 = vector.extract_strided_slice %399 {offsets = [3, 0], sizes = [1, 512], strides = [1, 1]} : vector<4x512xf32> to vector<1x512xf32>
    %418 = vector.broadcast %416 : vector<5x1xf32> to vector<5x512xf32>
    %419 = vector.broadcast %417 : vector<1x512xf32> to vector<5x512xf32>
    %420 = arith.mulf %418, %419 : vector<5x512xf32>
    %421 = arith.addf %395, %405 : vector<5x512xf32>
    %422 = arith.addf %396, %410 : vector<5x512xf32>
    %423 = arith.addf %397, %415 : vector<5x512xf32>
    %424 = arith.addf %398, %420 : vector<5x512xf32>
    %425 = vector.extract_strided_slice %350 {offsets = [0, 3], sizes = [4, 512], strides = [1, 1]} : vector<4x576xf32> to vector<4x512xf32>
    %c24_78 = arith.constant 24 : index
    %c0_79 = arith.constant 0 : index
    %426 = vector.load %arg4[%c24_78, %c0_79] : memref<200x4xf32, #tpu.memory_space<vmem>>, vector<5x4xf32>
    %427 = vector.extract_strided_slice %426 {offsets = [0, 0], sizes = [5, 1], strides = [1, 1]} : vector<5x4xf32> to vector<5x1xf32>
    %428 = vector.extract_strided_slice %425 {offsets = [0, 0], sizes = [1, 512], strides = [1, 1]} : vector<4x512xf32> to vector<1x512xf32>
    %429 = vector.broadcast %427 : vector<5x1xf32> to vector<5x512xf32>
    %430 = vector.broadcast %428 : vector<1x512xf32> to vector<5x512xf32>
    %431 = arith.mulf %429, %430 : vector<5x512xf32>
    %432 = vector.extract_strided_slice %426 {offsets = [0, 1], sizes = [5, 1], strides = [1, 1]} : vector<5x4xf32> to vector<5x1xf32>
    %433 = vector.extract_strided_slice %425 {offsets = [1, 0], sizes = [1, 512], strides = [1, 1]} : vector<4x512xf32> to vector<1x512xf32>
    %434 = vector.broadcast %432 : vector<5x1xf32> to vector<5x512xf32>
    %435 = vector.broadcast %433 : vector<1x512xf32> to vector<5x512xf32>
    %436 = arith.mulf %434, %435 : vector<5x512xf32>
    %437 = vector.extract_strided_slice %426 {offsets = [0, 2], sizes = [5, 1], strides = [1, 1]} : vector<5x4xf32> to vector<5x1xf32>
    %438 = vector.extract_strided_slice %425 {offsets = [2, 0], sizes = [1, 512], strides = [1, 1]} : vector<4x512xf32> to vector<1x512xf32>
    %439 = vector.broadcast %437 : vector<5x1xf32> to vector<5x512xf32>
    %440 = vector.broadcast %438 : vector<1x512xf32> to vector<5x512xf32>
    %441 = arith.mulf %439, %440 : vector<5x512xf32>
    %442 = vector.extract_strided_slice %426 {offsets = [0, 3], sizes = [5, 1], strides = [1, 1]} : vector<5x4xf32> to vector<5x1xf32>
    %443 = vector.extract_strided_slice %425 {offsets = [3, 0], sizes = [1, 512], strides = [1, 1]} : vector<4x512xf32> to vector<1x512xf32>
    %444 = vector.broadcast %442 : vector<5x1xf32> to vector<5x512xf32>
    %445 = vector.broadcast %443 : vector<1x512xf32> to vector<5x512xf32>
    %446 = arith.mulf %444, %445 : vector<5x512xf32>
    %447 = arith.addf %421, %431 : vector<5x512xf32>
    %448 = arith.addf %422, %436 : vector<5x512xf32>
    %449 = arith.addf %423, %441 : vector<5x512xf32>
    %450 = arith.addf %424, %446 : vector<5x512xf32>
    %451 = vector.extract_strided_slice %350 {offsets = [0, 4], sizes = [4, 512], strides = [1, 1]} : vector<4x576xf32> to vector<4x512xf32>
    %c32_80 = arith.constant 32 : index
    %c0_81 = arith.constant 0 : index
    %452 = vector.load %arg4[%c32_80, %c0_81] : memref<200x4xf32, #tpu.memory_space<vmem>>, vector<5x4xf32>
    %453 = vector.extract_strided_slice %452 {offsets = [0, 0], sizes = [5, 1], strides = [1, 1]} : vector<5x4xf32> to vector<5x1xf32>
    %454 = vector.extract_strided_slice %451 {offsets = [0, 0], sizes = [1, 512], strides = [1, 1]} : vector<4x512xf32> to vector<1x512xf32>
    %455 = vector.broadcast %453 : vector<5x1xf32> to vector<5x512xf32>
    %456 = vector.broadcast %454 : vector<1x512xf32> to vector<5x512xf32>
    %457 = arith.mulf %455, %456 : vector<5x512xf32>
    %458 = vector.extract_strided_slice %452 {offsets = [0, 1], sizes = [5, 1], strides = [1, 1]} : vector<5x4xf32> to vector<5x1xf32>
    %459 = vector.extract_strided_slice %451 {offsets = [1, 0], sizes = [1, 512], strides = [1, 1]} : vector<4x512xf32> to vector<1x512xf32>
    %460 = vector.broadcast %458 : vector<5x1xf32> to vector<5x512xf32>
    %461 = vector.broadcast %459 : vector<1x512xf32> to vector<5x512xf32>
    %462 = arith.mulf %460, %461 : vector<5x512xf32>
    %463 = vector.extract_strided_slice %452 {offsets = [0, 2], sizes = [5, 1], strides = [1, 1]} : vector<5x4xf32> to vector<5x1xf32>
    %464 = vector.extract_strided_slice %451 {offsets = [2, 0], sizes = [1, 512], strides = [1, 1]} : vector<4x512xf32> to vector<1x512xf32>
    %465 = vector.broadcast %463 : vector<5x1xf32> to vector<5x512xf32>
    %466 = vector.broadcast %464 : vector<1x512xf32> to vector<5x512xf32>
    %467 = arith.mulf %465, %466 : vector<5x512xf32>
    %468 = vector.extract_strided_slice %452 {offsets = [0, 3], sizes = [5, 1], strides = [1, 1]} : vector<5x4xf32> to vector<5x1xf32>
    %469 = vector.extract_strided_slice %451 {offsets = [3, 0], sizes = [1, 512], strides = [1, 1]} : vector<4x512xf32> to vector<1x512xf32>
    %470 = vector.broadcast %468 : vector<5x1xf32> to vector<5x512xf32>
    %471 = vector.broadcast %469 : vector<1x512xf32> to vector<5x512xf32>
    %472 = arith.mulf %470, %471 : vector<5x512xf32>
    %473 = arith.addf %447, %457 : vector<5x512xf32>
    %474 = arith.addf %448, %462 : vector<5x512xf32>
    %475 = arith.addf %449, %467 : vector<5x512xf32>
    %476 = arith.addf %450, %472 : vector<5x512xf32>
    %477 = vector.extract_strided_slice %350 {offsets = [0, 14], sizes = [4, 512], strides = [1, 1]} : vector<4x576xf32> to vector<4x512xf32>
    %c40_82 = arith.constant 40 : index
    %c0_83 = arith.constant 0 : index
    %478 = vector.load %arg4[%c40_82, %c0_83] : memref<200x4xf32, #tpu.memory_space<vmem>>, vector<5x4xf32>
    %479 = vector.extract_strided_slice %478 {offsets = [0, 0], sizes = [5, 1], strides = [1, 1]} : vector<5x4xf32> to vector<5x1xf32>
    %480 = vector.extract_strided_slice %477 {offsets = [0, 0], sizes = [1, 512], strides = [1, 1]} : vector<4x512xf32> to vector<1x512xf32>
    %481 = vector.broadcast %479 : vector<5x1xf32> to vector<5x512xf32>
    %482 = vector.broadcast %480 : vector<1x512xf32> to vector<5x512xf32>
    %483 = arith.mulf %481, %482 : vector<5x512xf32>
    %484 = vector.extract_strided_slice %478 {offsets = [0, 1], sizes = [5, 1], strides = [1, 1]} : vector<5x4xf32> to vector<5x1xf32>
    %485 = vector.extract_strided_slice %477 {offsets = [1, 0], sizes = [1, 512], strides = [1, 1]} : vector<4x512xf32> to vector<1x512xf32>
    %486 = vector.broadcast %484 : vector<5x1xf32> to vector<5x512xf32>
    %487 = vector.broadcast %485 : vector<1x512xf32> to vector<5x512xf32>
    %488 = arith.mulf %486, %487 : vector<5x512xf32>
    %489 = vector.extract_strided_slice %478 {offsets = [0, 2], sizes = [5, 1], strides = [1, 1]} : vector<5x4xf32> to vector<5x1xf32>
    %490 = vector.extract_strided_slice %477 {offsets = [2, 0], sizes = [1, 512], strides = [1, 1]} : vector<4x512xf32> to vector<1x512xf32>
    %491 = vector.broadcast %489 : vector<5x1xf32> to vector<5x512xf32>
    %492 = vector.broadcast %490 : vector<1x512xf32> to vector<5x512xf32>
    %493 = arith.mulf %491, %492 : vector<5x512xf32>
    %494 = vector.extract_strided_slice %478 {offsets = [0, 3], sizes = [5, 1], strides = [1, 1]} : vector<5x4xf32> to vector<5x1xf32>
    %495 = vector.extract_strided_slice %477 {offsets = [3, 0], sizes = [1, 512], strides = [1, 1]} : vector<4x512xf32> to vector<1x512xf32>
    %496 = vector.broadcast %494 : vector<5x1xf32> to vector<5x512xf32>
    %497 = vector.broadcast %495 : vector<1x512xf32> to vector<5x512xf32>
    %498 = arith.mulf %496, %497 : vector<5x512xf32>
    %499 = arith.addf %473, %483 : vector<5x512xf32>
    %500 = arith.addf %474, %488 : vector<5x512xf32>
    %501 = arith.addf %475, %493 : vector<5x512xf32>
    %502 = arith.addf %476, %498 : vector<5x512xf32>
    %503 = vector.extract_strided_slice %350 {offsets = [0, 15], sizes = [4, 512], strides = [1, 1]} : vector<4x576xf32> to vector<4x512xf32>
    %c48_84 = arith.constant 48 : index
    %c0_85 = arith.constant 0 : index
    %504 = vector.load %arg4[%c48_84, %c0_85] : memref<200x4xf32, #tpu.memory_space<vmem>>, vector<5x4xf32>
    %505 = vector.extract_strided_slice %504 {offsets = [0, 0], sizes = [5, 1], strides = [1, 1]} : vector<5x4xf32> to vector<5x1xf32>
    %506 = vector.extract_strided_slice %503 {offsets = [0, 0], sizes = [1, 512], strides = [1, 1]} : vector<4x512xf32> to vector<1x512xf32>
    %507 = vector.broadcast %505 : vector<5x1xf32> to vector<5x512xf32>
    %508 = vector.broadcast %506 : vector<1x512xf32> to vector<5x512xf32>
    %509 = arith.mulf %507, %508 : vector<5x512xf32>
    %510 = vector.extract_strided_slice %504 {offsets = [0, 1], sizes = [5, 1], strides = [1, 1]} : vector<5x4xf32> to vector<5x1xf32>
    %511 = vector.extract_strided_slice %503 {offsets = [1, 0], sizes = [1, 512], strides = [1, 1]} : vector<4x512xf32> to vector<1x512xf32>
    %512 = vector.broadcast %510 : vector<5x1xf32> to vector<5x512xf32>
    %513 = vector.broadcast %511 : vector<1x512xf32> to vector<5x512xf32>
    %514 = arith.mulf %512, %513 : vector<5x512xf32>
    %515 = vector.extract_strided_slice %504 {offsets = [0, 2], sizes = [5, 1], strides = [1, 1]} : vector<5x4xf32> to vector<5x1xf32>
    %516 = vector.extract_strided_slice %503 {offsets = [2, 0], sizes = [1, 512], strides = [1, 1]} : vector<4x512xf32> to vector<1x512xf32>
    %517 = vector.broadcast %515 : vector<5x1xf32> to vector<5x512xf32>
    %518 = vector.broadcast %516 : vector<1x512xf32> to vector<5x512xf32>
    %519 = arith.mulf %517, %518 : vector<5x512xf32>
    %520 = vector.extract_strided_slice %504 {offsets = [0, 3], sizes = [5, 1], strides = [1, 1]} : vector<5x4xf32> to vector<5x1xf32>
    %521 = vector.extract_strided_slice %503 {offsets = [3, 0], sizes = [1, 512], strides = [1, 1]} : vector<4x512xf32> to vector<1x512xf32>
    %522 = vector.broadcast %520 : vector<5x1xf32> to vector<5x512xf32>
    %523 = vector.broadcast %521 : vector<1x512xf32> to vector<5x512xf32>
    %524 = arith.mulf %522, %523 : vector<5x512xf32>
    %525 = arith.addf %499, %509 : vector<5x512xf32>
    %526 = arith.addf %500, %514 : vector<5x512xf32>
    %527 = arith.addf %501, %519 : vector<5x512xf32>
    %528 = arith.addf %502, %524 : vector<5x512xf32>
    %529 = vector.extract_strided_slice %350 {offsets = [0, 16], sizes = [4, 512], strides = [1, 1]} : vector<4x576xf32> to vector<4x512xf32>
    %c56_86 = arith.constant 56 : index
    %c0_87 = arith.constant 0 : index
    %530 = vector.load %arg4[%c56_86, %c0_87] : memref<200x4xf32, #tpu.memory_space<vmem>>, vector<5x4xf32>
    %531 = vector.extract_strided_slice %530 {offsets = [0, 0], sizes = [5, 1], strides = [1, 1]} : vector<5x4xf32> to vector<5x1xf32>
    %532 = vector.extract_strided_slice %529 {offsets = [0, 0], sizes = [1, 512], strides = [1, 1]} : vector<4x512xf32> to vector<1x512xf32>
    %533 = vector.broadcast %531 : vector<5x1xf32> to vector<5x512xf32>
    %534 = vector.broadcast %532 : vector<1x512xf32> to vector<5x512xf32>
    %535 = arith.mulf %533, %534 : vector<5x512xf32>
    %536 = vector.extract_strided_slice %530 {offsets = [0, 1], sizes = [5, 1], strides = [1, 1]} : vector<5x4xf32> to vector<5x1xf32>
    %537 = vector.extract_strided_slice %529 {offsets = [1, 0], sizes = [1, 512], strides = [1, 1]} : vector<4x512xf32> to vector<1x512xf32>
    %538 = vector.broadcast %536 : vector<5x1xf32> to vector<5x512xf32>
    %539 = vector.broadcast %537 : vector<1x512xf32> to vector<5x512xf32>
    %540 = arith.mulf %538, %539 : vector<5x512xf32>
    %541 = vector.extract_strided_slice %530 {offsets = [0, 2], sizes = [5, 1], strides = [1, 1]} : vector<5x4xf32> to vector<5x1xf32>
    %542 = vector.extract_strided_slice %529 {offsets = [2, 0], sizes = [1, 512], strides = [1, 1]} : vector<4x512xf32> to vector<1x512xf32>
    %543 = vector.broadcast %541 : vector<5x1xf32> to vector<5x512xf32>
    %544 = vector.broadcast %542 : vector<1x512xf32> to vector<5x512xf32>
    %545 = arith.mulf %543, %544 : vector<5x512xf32>
    %546 = vector.extract_strided_slice %530 {offsets = [0, 3], sizes = [5, 1], strides = [1, 1]} : vector<5x4xf32> to vector<5x1xf32>
    %547 = vector.extract_strided_slice %529 {offsets = [3, 0], sizes = [1, 512], strides = [1, 1]} : vector<4x512xf32> to vector<1x512xf32>
    %548 = vector.broadcast %546 : vector<5x1xf32> to vector<5x512xf32>
    %549 = vector.broadcast %547 : vector<1x512xf32> to vector<5x512xf32>
    %550 = arith.mulf %548, %549 : vector<5x512xf32>
    %551 = arith.addf %525, %535 : vector<5x512xf32>
    %552 = arith.addf %526, %540 : vector<5x512xf32>
    %553 = arith.addf %527, %545 : vector<5x512xf32>
    %554 = arith.addf %528, %550 : vector<5x512xf32>
    %555 = vector.extract_strided_slice %350 {offsets = [0, 17], sizes = [4, 512], strides = [1, 1]} : vector<4x576xf32> to vector<4x512xf32>
    %c64_88 = arith.constant 64 : index
    %c0_89 = arith.constant 0 : index
    %556 = vector.load %arg4[%c64_88, %c0_89] : memref<200x4xf32, #tpu.memory_space<vmem>>, vector<5x4xf32>
    %557 = vector.extract_strided_slice %556 {offsets = [0, 0], sizes = [5, 1], strides = [1, 1]} : vector<5x4xf32> to vector<5x1xf32>
    %558 = vector.extract_strided_slice %555 {offsets = [0, 0], sizes = [1, 512], strides = [1, 1]} : vector<4x512xf32> to vector<1x512xf32>
    %559 = vector.broadcast %557 : vector<5x1xf32> to vector<5x512xf32>
    %560 = vector.broadcast %558 : vector<1x512xf32> to vector<5x512xf32>
    %561 = arith.mulf %559, %560 : vector<5x512xf32>
    %562 = vector.extract_strided_slice %556 {offsets = [0, 1], sizes = [5, 1], strides = [1, 1]} : vector<5x4xf32> to vector<5x1xf32>
    %563 = vector.extract_strided_slice %555 {offsets = [1, 0], sizes = [1, 512], strides = [1, 1]} : vector<4x512xf32> to vector<1x512xf32>
    %564 = vector.broadcast %562 : vector<5x1xf32> to vector<5x512xf32>
    %565 = vector.broadcast %563 : vector<1x512xf32> to vector<5x512xf32>
    %566 = arith.mulf %564, %565 : vector<5x512xf32>
    %567 = vector.extract_strided_slice %556 {offsets = [0, 2], sizes = [5, 1], strides = [1, 1]} : vector<5x4xf32> to vector<5x1xf32>
    %568 = vector.extract_strided_slice %555 {offsets = [2, 0], sizes = [1, 512], strides = [1, 1]} : vector<4x512xf32> to vector<1x512xf32>
    %569 = vector.broadcast %567 : vector<5x1xf32> to vector<5x512xf32>
    %570 = vector.broadcast %568 : vector<1x512xf32> to vector<5x512xf32>
    %571 = arith.mulf %569, %570 : vector<5x512xf32>
    %572 = vector.extract_strided_slice %556 {offsets = [0, 3], sizes = [5, 1], strides = [1, 1]} : vector<5x4xf32> to vector<5x1xf32>
    %573 = vector.extract_strided_slice %555 {offsets = [3, 0], sizes = [1, 512], strides = [1, 1]} : vector<4x512xf32> to vector<1x512xf32>
    %574 = vector.broadcast %572 : vector<5x1xf32> to vector<5x512xf32>
    %575 = vector.broadcast %573 : vector<1x512xf32> to vector<5x512xf32>
    %576 = arith.mulf %574, %575 : vector<5x512xf32>
    %577 = arith.addf %551, %561 : vector<5x512xf32>
    %578 = arith.addf %552, %566 : vector<5x512xf32>
    %579 = arith.addf %553, %571 : vector<5x512xf32>
    %580 = arith.addf %554, %576 : vector<5x512xf32>
    %581 = vector.extract_strided_slice %350 {offsets = [0, 18], sizes = [4, 512], strides = [1, 1]} : vector<4x576xf32> to vector<4x512xf32>
    %c72 = arith.constant 72 : index
    %c0_90 = arith.constant 0 : index
    %582 = vector.load %arg4[%c72, %c0_90] : memref<200x4xf32, #tpu.memory_space<vmem>>, vector<5x4xf32>
    %583 = vector.extract_strided_slice %582 {offsets = [0, 0], sizes = [5, 1], strides = [1, 1]} : vector<5x4xf32> to vector<5x1xf32>
    %584 = vector.extract_strided_slice %581 {offsets = [0, 0], sizes = [1, 512], strides = [1, 1]} : vector<4x512xf32> to vector<1x512xf32>
    %585 = vector.broadcast %583 : vector<5x1xf32> to vector<5x512xf32>
    %586 = vector.broadcast %584 : vector<1x512xf32> to vector<5x512xf32>
    %587 = arith.mulf %585, %586 : vector<5x512xf32>
    %588 = vector.extract_strided_slice %582 {offsets = [0, 1], sizes = [5, 1], strides = [1, 1]} : vector<5x4xf32> to vector<5x1xf32>
    %589 = vector.extract_strided_slice %581 {offsets = [1, 0], sizes = [1, 512], strides = [1, 1]} : vector<4x512xf32> to vector<1x512xf32>
    %590 = vector.broadcast %588 : vector<5x1xf32> to vector<5x512xf32>
    %591 = vector.broadcast %589 : vector<1x512xf32> to vector<5x512xf32>
    %592 = arith.mulf %590, %591 : vector<5x512xf32>
    %593 = vector.extract_strided_slice %582 {offsets = [0, 2], sizes = [5, 1], strides = [1, 1]} : vector<5x4xf32> to vector<5x1xf32>
    %594 = vector.extract_strided_slice %581 {offsets = [2, 0], sizes = [1, 512], strides = [1, 1]} : vector<4x512xf32> to vector<1x512xf32>
    %595 = vector.broadcast %593 : vector<5x1xf32> to vector<5x512xf32>
    %596 = vector.broadcast %594 : vector<1x512xf32> to vector<5x512xf32>
    %597 = arith.mulf %595, %596 : vector<5x512xf32>
    %598 = vector.extract_strided_slice %582 {offsets = [0, 3], sizes = [5, 1], strides = [1, 1]} : vector<5x4xf32> to vector<5x1xf32>
    %599 = vector.extract_strided_slice %581 {offsets = [3, 0], sizes = [1, 512], strides = [1, 1]} : vector<4x512xf32> to vector<1x512xf32>
    %600 = vector.broadcast %598 : vector<5x1xf32> to vector<5x512xf32>
    %601 = vector.broadcast %599 : vector<1x512xf32> to vector<5x512xf32>
    %602 = arith.mulf %600, %601 : vector<5x512xf32>
    %603 = arith.addf %577, %587 : vector<5x512xf32>
    %604 = arith.addf %578, %592 : vector<5x512xf32>
    %605 = arith.addf %579, %597 : vector<5x512xf32>
    %606 = arith.addf %580, %602 : vector<5x512xf32>
    %607 = vector.extract_strided_slice %350 {offsets = [0, 28], sizes = [4, 512], strides = [1, 1]} : vector<4x576xf32> to vector<4x512xf32>
    %c80 = arith.constant 80 : index
    %c0_91 = arith.constant 0 : index
    %608 = vector.load %arg4[%c80, %c0_91] : memref<200x4xf32, #tpu.memory_space<vmem>>, vector<5x4xf32>
    %609 = vector.extract_strided_slice %608 {offsets = [0, 0], sizes = [5, 1], strides = [1, 1]} : vector<5x4xf32> to vector<5x1xf32>
    %610 = vector.extract_strided_slice %607 {offsets = [0, 0], sizes = [1, 512], strides = [1, 1]} : vector<4x512xf32> to vector<1x512xf32>
    %611 = vector.broadcast %609 : vector<5x1xf32> to vector<5x512xf32>
    %612 = vector.broadcast %610 : vector<1x512xf32> to vector<5x512xf32>
    %613 = arith.mulf %611, %612 : vector<5x512xf32>
    %614 = vector.extract_strided_slice %608 {offsets = [0, 1], sizes = [5, 1], strides = [1, 1]} : vector<5x4xf32> to vector<5x1xf32>
    %615 = vector.extract_strided_slice %607 {offsets = [1, 0], sizes = [1, 512], strides = [1, 1]} : vector<4x512xf32> to vector<1x512xf32>
    %616 = vector.broadcast %614 : vector<5x1xf32> to vector<5x512xf32>
    %617 = vector.broadcast %615 : vector<1x512xf32> to vector<5x512xf32>
    %618 = arith.mulf %616, %617 : vector<5x512xf32>
    %619 = vector.extract_strided_slice %608 {offsets = [0, 2], sizes = [5, 1], strides = [1, 1]} : vector<5x4xf32> to vector<5x1xf32>
    %620 = vector.extract_strided_slice %607 {offsets = [2, 0], sizes = [1, 512], strides = [1, 1]} : vector<4x512xf32> to vector<1x512xf32>
    %621 = vector.broadcast %619 : vector<5x1xf32> to vector<5x512xf32>
    %622 = vector.broadcast %620 : vector<1x512xf32> to vector<5x512xf32>
    %623 = arith.mulf %621, %622 : vector<5x512xf32>
    %624 = vector.extract_strided_slice %608 {offsets = [0, 3], sizes = [5, 1], strides = [1, 1]} : vector<5x4xf32> to vector<5x1xf32>
    %625 = vector.extract_strided_slice %607 {offsets = [3, 0], sizes = [1, 512], strides = [1, 1]} : vector<4x512xf32> to vector<1x512xf32>
    %626 = vector.broadcast %624 : vector<5x1xf32> to vector<5x512xf32>
    %627 = vector.broadcast %625 : vector<1x512xf32> to vector<5x512xf32>
    %628 = arith.mulf %626, %627 : vector<5x512xf32>
    %629 = arith.addf %603, %613 : vector<5x512xf32>
    %630 = arith.addf %604, %618 : vector<5x512xf32>
    %631 = arith.addf %605, %623 : vector<5x512xf32>
    %632 = arith.addf %606, %628 : vector<5x512xf32>
    %633 = vector.extract_strided_slice %350 {offsets = [0, 29], sizes = [4, 512], strides = [1, 1]} : vector<4x576xf32> to vector<4x512xf32>
    %c88 = arith.constant 88 : index
    %c0_92 = arith.constant 0 : index
    %634 = vector.load %arg4[%c88, %c0_92] : memref<200x4xf32, #tpu.memory_space<vmem>>, vector<5x4xf32>
    %635 = vector.extract_strided_slice %634 {offsets = [0, 0], sizes = [5, 1], strides = [1, 1]} : vector<5x4xf32> to vector<5x1xf32>
    %636 = vector.extract_strided_slice %633 {offsets = [0, 0], sizes = [1, 512], strides = [1, 1]} : vector<4x512xf32> to vector<1x512xf32>
    %637 = vector.broadcast %635 : vector<5x1xf32> to vector<5x512xf32>
    %638 = vector.broadcast %636 : vector<1x512xf32> to vector<5x512xf32>
    %639 = arith.mulf %637, %638 : vector<5x512xf32>
    %640 = vector.extract_strided_slice %634 {offsets = [0, 1], sizes = [5, 1], strides = [1, 1]} : vector<5x4xf32> to vector<5x1xf32>
    %641 = vector.extract_strided_slice %633 {offsets = [1, 0], sizes = [1, 512], strides = [1, 1]} : vector<4x512xf32> to vector<1x512xf32>
    %642 = vector.broadcast %640 : vector<5x1xf32> to vector<5x512xf32>
    %643 = vector.broadcast %641 : vector<1x512xf32> to vector<5x512xf32>
    %644 = arith.mulf %642, %643 : vector<5x512xf32>
    %645 = vector.extract_strided_slice %634 {offsets = [0, 2], sizes = [5, 1], strides = [1, 1]} : vector<5x4xf32> to vector<5x1xf32>
    %646 = vector.extract_strided_slice %633 {offsets = [2, 0], sizes = [1, 512], strides = [1, 1]} : vector<4x512xf32> to vector<1x512xf32>
    %647 = vector.broadcast %645 : vector<5x1xf32> to vector<5x512xf32>
    %648 = vector.broadcast %646 : vector<1x512xf32> to vector<5x512xf32>
    %649 = arith.mulf %647, %648 : vector<5x512xf32>
    %650 = vector.extract_strided_slice %634 {offsets = [0, 3], sizes = [5, 1], strides = [1, 1]} : vector<5x4xf32> to vector<5x1xf32>
    %651 = vector.extract_strided_slice %633 {offsets = [3, 0], sizes = [1, 512], strides = [1, 1]} : vector<4x512xf32> to vector<1x512xf32>
    %652 = vector.broadcast %650 : vector<5x1xf32> to vector<5x512xf32>
    %653 = vector.broadcast %651 : vector<1x512xf32> to vector<5x512xf32>
    %654 = arith.mulf %652, %653 : vector<5x512xf32>
    %655 = arith.addf %629, %639 : vector<5x512xf32>
    %656 = arith.addf %630, %644 : vector<5x512xf32>
    %657 = arith.addf %631, %649 : vector<5x512xf32>
    %658 = arith.addf %632, %654 : vector<5x512xf32>
    %659 = vector.extract_strided_slice %350 {offsets = [0, 30], sizes = [4, 512], strides = [1, 1]} : vector<4x576xf32> to vector<4x512xf32>
    %c96 = arith.constant 96 : index
    %c0_93 = arith.constant 0 : index
    %660 = vector.load %arg4[%c96, %c0_93] : memref<200x4xf32, #tpu.memory_space<vmem>>, vector<5x4xf32>
    %661 = vector.extract_strided_slice %660 {offsets = [0, 0], sizes = [5, 1], strides = [1, 1]} : vector<5x4xf32> to vector<5x1xf32>
    %662 = vector.extract_strided_slice %659 {offsets = [0, 0], sizes = [1, 512], strides = [1, 1]} : vector<4x512xf32> to vector<1x512xf32>
    %663 = vector.broadcast %661 : vector<5x1xf32> to vector<5x512xf32>
    %664 = vector.broadcast %662 : vector<1x512xf32> to vector<5x512xf32>
    %665 = arith.mulf %663, %664 : vector<5x512xf32>
    %666 = vector.extract_strided_slice %660 {offsets = [0, 1], sizes = [5, 1], strides = [1, 1]} : vector<5x4xf32> to vector<5x1xf32>
    %667 = vector.extract_strided_slice %659 {offsets = [1, 0], sizes = [1, 512], strides = [1, 1]} : vector<4x512xf32> to vector<1x512xf32>
    %668 = vector.broadcast %666 : vector<5x1xf32> to vector<5x512xf32>
    %669 = vector.broadcast %667 : vector<1x512xf32> to vector<5x512xf32>
    %670 = arith.mulf %668, %669 : vector<5x512xf32>
    %671 = vector.extract_strided_slice %660 {offsets = [0, 2], sizes = [5, 1], strides = [1, 1]} : vector<5x4xf32> to vector<5x1xf32>
    %672 = vector.extract_strided_slice %659 {offsets = [2, 0], sizes = [1, 512], strides = [1, 1]} : vector<4x512xf32> to vector<1x512xf32>
    %673 = vector.broadcast %671 : vector<5x1xf32> to vector<5x512xf32>
    %674 = vector.broadcast %672 : vector<1x512xf32> to vector<5x512xf32>
    %675 = arith.mulf %673, %674 : vector<5x512xf32>
    %676 = vector.extract_strided_slice %660 {offsets = [0, 3], sizes = [5, 1], strides = [1, 1]} : vector<5x4xf32> to vector<5x1xf32>
    %677 = vector.extract_strided_slice %659 {offsets = [3, 0], sizes = [1, 512], strides = [1, 1]} : vector<4x512xf32> to vector<1x512xf32>
    %678 = vector.broadcast %676 : vector<5x1xf32> to vector<5x512xf32>
    %679 = vector.broadcast %677 : vector<1x512xf32> to vector<5x512xf32>
    %680 = arith.mulf %678, %679 : vector<5x512xf32>
    %681 = arith.addf %655, %665 : vector<5x512xf32>
    %682 = arith.addf %656, %670 : vector<5x512xf32>
    %683 = arith.addf %657, %675 : vector<5x512xf32>
    %684 = arith.addf %658, %680 : vector<5x512xf32>
    %685 = vector.extract_strided_slice %350 {offsets = [0, 31], sizes = [4, 512], strides = [1, 1]} : vector<4x576xf32> to vector<4x512xf32>
    %c104 = arith.constant 104 : index
    %c0_94 = arith.constant 0 : index
    %686 = vector.load %arg4[%c104, %c0_94] : memref<200x4xf32, #tpu.memory_space<vmem>>, vector<5x4xf32>
    %687 = vector.extract_strided_slice %686 {offsets = [0, 0], sizes = [5, 1], strides = [1, 1]} : vector<5x4xf32> to vector<5x1xf32>
    %688 = vector.extract_strided_slice %685 {offsets = [0, 0], sizes = [1, 512], strides = [1, 1]} : vector<4x512xf32> to vector<1x512xf32>
    %689 = vector.broadcast %687 : vector<5x1xf32> to vector<5x512xf32>
    %690 = vector.broadcast %688 : vector<1x512xf32> to vector<5x512xf32>
    %691 = arith.mulf %689, %690 : vector<5x512xf32>
    %692 = vector.extract_strided_slice %686 {offsets = [0, 1], sizes = [5, 1], strides = [1, 1]} : vector<5x4xf32> to vector<5x1xf32>
    %693 = vector.extract_strided_slice %685 {offsets = [1, 0], sizes = [1, 512], strides = [1, 1]} : vector<4x512xf32> to vector<1x512xf32>
    %694 = vector.broadcast %692 : vector<5x1xf32> to vector<5x512xf32>
    %695 = vector.broadcast %693 : vector<1x512xf32> to vector<5x512xf32>
    %696 = arith.mulf %694, %695 : vector<5x512xf32>
    %697 = vector.extract_strided_slice %686 {offsets = [0, 2], sizes = [5, 1], strides = [1, 1]} : vector<5x4xf32> to vector<5x1xf32>
    %698 = vector.extract_strided_slice %685 {offsets = [2, 0], sizes = [1, 512], strides = [1, 1]} : vector<4x512xf32> to vector<1x512xf32>
    %699 = vector.broadcast %697 : vector<5x1xf32> to vector<5x512xf32>
    %700 = vector.broadcast %698 : vector<1x512xf32> to vector<5x512xf32>
    %701 = arith.mulf %699, %700 : vector<5x512xf32>
    %702 = vector.extract_strided_slice %686 {offsets = [0, 3], sizes = [5, 1], strides = [1, 1]} : vector<5x4xf32> to vector<5x1xf32>
    %703 = vector.extract_strided_slice %685 {offsets = [3, 0], sizes = [1, 512], strides = [1, 1]} : vector<4x512xf32> to vector<1x512xf32>
    %704 = vector.broadcast %702 : vector<5x1xf32> to vector<5x512xf32>
    %705 = vector.broadcast %703 : vector<1x512xf32> to vector<5x512xf32>
    %706 = arith.mulf %704, %705 : vector<5x512xf32>
    %707 = arith.addf %681, %691 : vector<5x512xf32>
    %708 = arith.addf %682, %696 : vector<5x512xf32>
    %709 = arith.addf %683, %701 : vector<5x512xf32>
    %710 = arith.addf %684, %706 : vector<5x512xf32>
    %711 = vector.extract_strided_slice %350 {offsets = [0, 32], sizes = [4, 512], strides = [1, 1]} : vector<4x576xf32> to vector<4x512xf32>
    %c112 = arith.constant 112 : index
    %c0_95 = arith.constant 0 : index
    %712 = vector.load %arg4[%c112, %c0_95] : memref<200x4xf32, #tpu.memory_space<vmem>>, vector<5x4xf32>
    %713 = vector.extract_strided_slice %712 {offsets = [0, 0], sizes = [5, 1], strides = [1, 1]} : vector<5x4xf32> to vector<5x1xf32>
    %714 = vector.extract_strided_slice %711 {offsets = [0, 0], sizes = [1, 512], strides = [1, 1]} : vector<4x512xf32> to vector<1x512xf32>
    %715 = vector.broadcast %713 : vector<5x1xf32> to vector<5x512xf32>
    %716 = vector.broadcast %714 : vector<1x512xf32> to vector<5x512xf32>
    %717 = arith.mulf %715, %716 : vector<5x512xf32>
    %718 = vector.extract_strided_slice %712 {offsets = [0, 1], sizes = [5, 1], strides = [1, 1]} : vector<5x4xf32> to vector<5x1xf32>
    %719 = vector.extract_strided_slice %711 {offsets = [1, 0], sizes = [1, 512], strides = [1, 1]} : vector<4x512xf32> to vector<1x512xf32>
    %720 = vector.broadcast %718 : vector<5x1xf32> to vector<5x512xf32>
    %721 = vector.broadcast %719 : vector<1x512xf32> to vector<5x512xf32>
    %722 = arith.mulf %720, %721 : vector<5x512xf32>
    %723 = vector.extract_strided_slice %712 {offsets = [0, 2], sizes = [5, 1], strides = [1, 1]} : vector<5x4xf32> to vector<5x1xf32>
    %724 = vector.extract_strided_slice %711 {offsets = [2, 0], sizes = [1, 512], strides = [1, 1]} : vector<4x512xf32> to vector<1x512xf32>
    %725 = vector.broadcast %723 : vector<5x1xf32> to vector<5x512xf32>
    %726 = vector.broadcast %724 : vector<1x512xf32> to vector<5x512xf32>
    %727 = arith.mulf %725, %726 : vector<5x512xf32>
    %728 = vector.extract_strided_slice %712 {offsets = [0, 3], sizes = [5, 1], strides = [1, 1]} : vector<5x4xf32> to vector<5x1xf32>
    %729 = vector.extract_strided_slice %711 {offsets = [3, 0], sizes = [1, 512], strides = [1, 1]} : vector<4x512xf32> to vector<1x512xf32>
    %730 = vector.broadcast %728 : vector<5x1xf32> to vector<5x512xf32>
    %731 = vector.broadcast %729 : vector<1x512xf32> to vector<5x512xf32>
    %732 = arith.mulf %730, %731 : vector<5x512xf32>
    %733 = arith.addf %707, %717 : vector<5x512xf32>
    %734 = arith.addf %708, %722 : vector<5x512xf32>
    %735 = arith.addf %709, %727 : vector<5x512xf32>
    %736 = arith.addf %710, %732 : vector<5x512xf32>
    %737 = vector.extract_strided_slice %350 {offsets = [0, 42], sizes = [4, 512], strides = [1, 1]} : vector<4x576xf32> to vector<4x512xf32>
    %c120 = arith.constant 120 : index
    %c0_96 = arith.constant 0 : index
    %738 = vector.load %arg4[%c120, %c0_96] : memref<200x4xf32, #tpu.memory_space<vmem>>, vector<5x4xf32>
    %739 = vector.extract_strided_slice %738 {offsets = [0, 0], sizes = [5, 1], strides = [1, 1]} : vector<5x4xf32> to vector<5x1xf32>
    %740 = vector.extract_strided_slice %737 {offsets = [0, 0], sizes = [1, 512], strides = [1, 1]} : vector<4x512xf32> to vector<1x512xf32>
    %741 = vector.broadcast %739 : vector<5x1xf32> to vector<5x512xf32>
    %742 = vector.broadcast %740 : vector<1x512xf32> to vector<5x512xf32>
    %743 = arith.mulf %741, %742 : vector<5x512xf32>
    %744 = vector.extract_strided_slice %738 {offsets = [0, 1], sizes = [5, 1], strides = [1, 1]} : vector<5x4xf32> to vector<5x1xf32>
    %745 = vector.extract_strided_slice %737 {offsets = [1, 0], sizes = [1, 512], strides = [1, 1]} : vector<4x512xf32> to vector<1x512xf32>
    %746 = vector.broadcast %744 : vector<5x1xf32> to vector<5x512xf32>
    %747 = vector.broadcast %745 : vector<1x512xf32> to vector<5x512xf32>
    %748 = arith.mulf %746, %747 : vector<5x512xf32>
    %749 = vector.extract_strided_slice %738 {offsets = [0, 2], sizes = [5, 1], strides = [1, 1]} : vector<5x4xf32> to vector<5x1xf32>
    %750 = vector.extract_strided_slice %737 {offsets = [2, 0], sizes = [1, 512], strides = [1, 1]} : vector<4x512xf32> to vector<1x512xf32>
    %751 = vector.broadcast %749 : vector<5x1xf32> to vector<5x512xf32>
    %752 = vector.broadcast %750 : vector<1x512xf32> to vector<5x512xf32>
    %753 = arith.mulf %751, %752 : vector<5x512xf32>
    %754 = vector.extract_strided_slice %738 {offsets = [0, 3], sizes = [5, 1], strides = [1, 1]} : vector<5x4xf32> to vector<5x1xf32>
    %755 = vector.extract_strided_slice %737 {offsets = [3, 0], sizes = [1, 512], strides = [1, 1]} : vector<4x512xf32> to vector<1x512xf32>
    %756 = vector.broadcast %754 : vector<5x1xf32> to vector<5x512xf32>
    %757 = vector.broadcast %755 : vector<1x512xf32> to vector<5x512xf32>
    %758 = arith.mulf %756, %757 : vector<5x512xf32>
    %759 = arith.addf %733, %743 : vector<5x512xf32>
    %760 = arith.addf %734, %748 : vector<5x512xf32>
    %761 = arith.addf %735, %753 : vector<5x512xf32>
    %762 = arith.addf %736, %758 : vector<5x512xf32>
    %763 = vector.extract_strided_slice %350 {offsets = [0, 43], sizes = [4, 512], strides = [1, 1]} : vector<4x576xf32> to vector<4x512xf32>
    %c128 = arith.constant 128 : index
    %c0_97 = arith.constant 0 : index
    %764 = vector.load %arg4[%c128, %c0_97] : memref<200x4xf32, #tpu.memory_space<vmem>>, vector<5x4xf32>
    %765 = vector.extract_strided_slice %764 {offsets = [0, 0], sizes = [5, 1], strides = [1, 1]} : vector<5x4xf32> to vector<5x1xf32>
    %766 = vector.extract_strided_slice %763 {offsets = [0, 0], sizes = [1, 512], strides = [1, 1]} : vector<4x512xf32> to vector<1x512xf32>
    %767 = vector.broadcast %765 : vector<5x1xf32> to vector<5x512xf32>
    %768 = vector.broadcast %766 : vector<1x512xf32> to vector<5x512xf32>
    %769 = arith.mulf %767, %768 : vector<5x512xf32>
    %770 = vector.extract_strided_slice %764 {offsets = [0, 1], sizes = [5, 1], strides = [1, 1]} : vector<5x4xf32> to vector<5x1xf32>
    %771 = vector.extract_strided_slice %763 {offsets = [1, 0], sizes = [1, 512], strides = [1, 1]} : vector<4x512xf32> to vector<1x512xf32>
    %772 = vector.broadcast %770 : vector<5x1xf32> to vector<5x512xf32>
    %773 = vector.broadcast %771 : vector<1x512xf32> to vector<5x512xf32>
    %774 = arith.mulf %772, %773 : vector<5x512xf32>
    %775 = vector.extract_strided_slice %764 {offsets = [0, 2], sizes = [5, 1], strides = [1, 1]} : vector<5x4xf32> to vector<5x1xf32>
    %776 = vector.extract_strided_slice %763 {offsets = [2, 0], sizes = [1, 512], strides = [1, 1]} : vector<4x512xf32> to vector<1x512xf32>
    %777 = vector.broadcast %775 : vector<5x1xf32> to vector<5x512xf32>
    %778 = vector.broadcast %776 : vector<1x512xf32> to vector<5x512xf32>
    %779 = arith.mulf %777, %778 : vector<5x512xf32>
    %780 = vector.extract_strided_slice %764 {offsets = [0, 3], sizes = [5, 1], strides = [1, 1]} : vector<5x4xf32> to vector<5x1xf32>
    %781 = vector.extract_strided_slice %763 {offsets = [3, 0], sizes = [1, 512], strides = [1, 1]} : vector<4x512xf32> to vector<1x512xf32>
    %782 = vector.broadcast %780 : vector<5x1xf32> to vector<5x512xf32>
    %783 = vector.broadcast %781 : vector<1x512xf32> to vector<5x512xf32>
    %784 = arith.mulf %782, %783 : vector<5x512xf32>
    %785 = arith.addf %759, %769 : vector<5x512xf32>
    %786 = arith.addf %760, %774 : vector<5x512xf32>
    %787 = arith.addf %761, %779 : vector<5x512xf32>
    %788 = arith.addf %762, %784 : vector<5x512xf32>
    %789 = vector.extract_strided_slice %350 {offsets = [0, 44], sizes = [4, 512], strides = [1, 1]} : vector<4x576xf32> to vector<4x512xf32>
    %c136 = arith.constant 136 : index
    %c0_98 = arith.constant 0 : index
    %790 = vector.load %arg4[%c136, %c0_98] : memref<200x4xf32, #tpu.memory_space<vmem>>, vector<5x4xf32>
    %791 = vector.extract_strided_slice %790 {offsets = [0, 0], sizes = [5, 1], strides = [1, 1]} : vector<5x4xf32> to vector<5x1xf32>
    %792 = vector.extract_strided_slice %789 {offsets = [0, 0], sizes = [1, 512], strides = [1, 1]} : vector<4x512xf32> to vector<1x512xf32>
    %793 = vector.broadcast %791 : vector<5x1xf32> to vector<5x512xf32>
    %794 = vector.broadcast %792 : vector<1x512xf32> to vector<5x512xf32>
    %795 = arith.mulf %793, %794 : vector<5x512xf32>
    %796 = vector.extract_strided_slice %790 {offsets = [0, 1], sizes = [5, 1], strides = [1, 1]} : vector<5x4xf32> to vector<5x1xf32>
    %797 = vector.extract_strided_slice %789 {offsets = [1, 0], sizes = [1, 512], strides = [1, 1]} : vector<4x512xf32> to vector<1x512xf32>
    %798 = vector.broadcast %796 : vector<5x1xf32> to vector<5x512xf32>
    %799 = vector.broadcast %797 : vector<1x512xf32> to vector<5x512xf32>
    %800 = arith.mulf %798, %799 : vector<5x512xf32>
    %801 = vector.extract_strided_slice %790 {offsets = [0, 2], sizes = [5, 1], strides = [1, 1]} : vector<5x4xf32> to vector<5x1xf32>
    %802 = vector.extract_strided_slice %789 {offsets = [2, 0], sizes = [1, 512], strides = [1, 1]} : vector<4x512xf32> to vector<1x512xf32>
    %803 = vector.broadcast %801 : vector<5x1xf32> to vector<5x512xf32>
    %804 = vector.broadcast %802 : vector<1x512xf32> to vector<5x512xf32>
    %805 = arith.mulf %803, %804 : vector<5x512xf32>
    %806 = vector.extract_strided_slice %790 {offsets = [0, 3], sizes = [5, 1], strides = [1, 1]} : vector<5x4xf32> to vector<5x1xf32>
    %807 = vector.extract_strided_slice %789 {offsets = [3, 0], sizes = [1, 512], strides = [1, 1]} : vector<4x512xf32> to vector<1x512xf32>
    %808 = vector.broadcast %806 : vector<5x1xf32> to vector<5x512xf32>
    %809 = vector.broadcast %807 : vector<1x512xf32> to vector<5x512xf32>
    %810 = arith.mulf %808, %809 : vector<5x512xf32>
    %811 = arith.addf %785, %795 : vector<5x512xf32>
    %812 = arith.addf %786, %800 : vector<5x512xf32>
    %813 = arith.addf %787, %805 : vector<5x512xf32>
    %814 = arith.addf %788, %810 : vector<5x512xf32>
    %815 = vector.extract_strided_slice %350 {offsets = [0, 45], sizes = [4, 512], strides = [1, 1]} : vector<4x576xf32> to vector<4x512xf32>
    %c144 = arith.constant 144 : index
    %c0_99 = arith.constant 0 : index
    %816 = vector.load %arg4[%c144, %c0_99] : memref<200x4xf32, #tpu.memory_space<vmem>>, vector<5x4xf32>
    %817 = vector.extract_strided_slice %816 {offsets = [0, 0], sizes = [5, 1], strides = [1, 1]} : vector<5x4xf32> to vector<5x1xf32>
    %818 = vector.extract_strided_slice %815 {offsets = [0, 0], sizes = [1, 512], strides = [1, 1]} : vector<4x512xf32> to vector<1x512xf32>
    %819 = vector.broadcast %817 : vector<5x1xf32> to vector<5x512xf32>
    %820 = vector.broadcast %818 : vector<1x512xf32> to vector<5x512xf32>
    %821 = arith.mulf %819, %820 : vector<5x512xf32>
    %822 = vector.extract_strided_slice %816 {offsets = [0, 1], sizes = [5, 1], strides = [1, 1]} : vector<5x4xf32> to vector<5x1xf32>
    %823 = vector.extract_strided_slice %815 {offsets = [1, 0], sizes = [1, 512], strides = [1, 1]} : vector<4x512xf32> to vector<1x512xf32>
    %824 = vector.broadcast %822 : vector<5x1xf32> to vector<5x512xf32>
    %825 = vector.broadcast %823 : vector<1x512xf32> to vector<5x512xf32>
    %826 = arith.mulf %824, %825 : vector<5x512xf32>
    %827 = vector.extract_strided_slice %816 {offsets = [0, 2], sizes = [5, 1], strides = [1, 1]} : vector<5x4xf32> to vector<5x1xf32>
    %828 = vector.extract_strided_slice %815 {offsets = [2, 0], sizes = [1, 512], strides = [1, 1]} : vector<4x512xf32> to vector<1x512xf32>
    %829 = vector.broadcast %827 : vector<5x1xf32> to vector<5x512xf32>
    %830 = vector.broadcast %828 : vector<1x512xf32> to vector<5x512xf32>
    %831 = arith.mulf %829, %830 : vector<5x512xf32>
    %832 = vector.extract_strided_slice %816 {offsets = [0, 3], sizes = [5, 1], strides = [1, 1]} : vector<5x4xf32> to vector<5x1xf32>
    %833 = vector.extract_strided_slice %815 {offsets = [3, 0], sizes = [1, 512], strides = [1, 1]} : vector<4x512xf32> to vector<1x512xf32>
    %834 = vector.broadcast %832 : vector<5x1xf32> to vector<5x512xf32>
    %835 = vector.broadcast %833 : vector<1x512xf32> to vector<5x512xf32>
    %836 = arith.mulf %834, %835 : vector<5x512xf32>
    %837 = arith.addf %811, %821 : vector<5x512xf32>
    %838 = arith.addf %812, %826 : vector<5x512xf32>
    %839 = arith.addf %813, %831 : vector<5x512xf32>
    %840 = arith.addf %814, %836 : vector<5x512xf32>
    %841 = vector.extract_strided_slice %350 {offsets = [0, 46], sizes = [4, 512], strides = [1, 1]} : vector<4x576xf32> to vector<4x512xf32>
    %c152 = arith.constant 152 : index
    %c0_100 = arith.constant 0 : index
    %842 = vector.load %arg4[%c152, %c0_100] : memref<200x4xf32, #tpu.memory_space<vmem>>, vector<5x4xf32>
    %843 = vector.extract_strided_slice %842 {offsets = [0, 0], sizes = [5, 1], strides = [1, 1]} : vector<5x4xf32> to vector<5x1xf32>
    %844 = vector.extract_strided_slice %841 {offsets = [0, 0], sizes = [1, 512], strides = [1, 1]} : vector<4x512xf32> to vector<1x512xf32>
    %845 = vector.broadcast %843 : vector<5x1xf32> to vector<5x512xf32>
    %846 = vector.broadcast %844 : vector<1x512xf32> to vector<5x512xf32>
    %847 = arith.mulf %845, %846 : vector<5x512xf32>
    %848 = vector.extract_strided_slice %842 {offsets = [0, 1], sizes = [5, 1], strides = [1, 1]} : vector<5x4xf32> to vector<5x1xf32>
    %849 = vector.extract_strided_slice %841 {offsets = [1, 0], sizes = [1, 512], strides = [1, 1]} : vector<4x512xf32> to vector<1x512xf32>
    %850 = vector.broadcast %848 : vector<5x1xf32> to vector<5x512xf32>
    %851 = vector.broadcast %849 : vector<1x512xf32> to vector<5x512xf32>
    %852 = arith.mulf %850, %851 : vector<5x512xf32>
    %853 = vector.extract_strided_slice %842 {offsets = [0, 2], sizes = [5, 1], strides = [1, 1]} : vector<5x4xf32> to vector<5x1xf32>
    %854 = vector.extract_strided_slice %841 {offsets = [2, 0], sizes = [1, 512], strides = [1, 1]} : vector<4x512xf32> to vector<1x512xf32>
    %855 = vector.broadcast %853 : vector<5x1xf32> to vector<5x512xf32>
    %856 = vector.broadcast %854 : vector<1x512xf32> to vector<5x512xf32>
    %857 = arith.mulf %855, %856 : vector<5x512xf32>
    %858 = vector.extract_strided_slice %842 {offsets = [0, 3], sizes = [5, 1], strides = [1, 1]} : vector<5x4xf32> to vector<5x1xf32>
    %859 = vector.extract_strided_slice %841 {offsets = [3, 0], sizes = [1, 512], strides = [1, 1]} : vector<4x512xf32> to vector<1x512xf32>
    %860 = vector.broadcast %858 : vector<5x1xf32> to vector<5x512xf32>
    %861 = vector.broadcast %859 : vector<1x512xf32> to vector<5x512xf32>
    %862 = arith.mulf %860, %861 : vector<5x512xf32>
    %863 = arith.addf %837, %847 : vector<5x512xf32>
    %864 = arith.addf %838, %852 : vector<5x512xf32>
    %865 = arith.addf %839, %857 : vector<5x512xf32>
    %866 = arith.addf %840, %862 : vector<5x512xf32>
    %867 = vector.extract_strided_slice %350 {offsets = [0, 56], sizes = [4, 512], strides = [1, 1]} : vector<4x576xf32> to vector<4x512xf32>
    %c160 = arith.constant 160 : index
    %c0_101 = arith.constant 0 : index
    %868 = vector.load %arg4[%c160, %c0_101] : memref<200x4xf32, #tpu.memory_space<vmem>>, vector<5x4xf32>
    %869 = vector.extract_strided_slice %868 {offsets = [0, 0], sizes = [5, 1], strides = [1, 1]} : vector<5x4xf32> to vector<5x1xf32>
    %870 = vector.extract_strided_slice %867 {offsets = [0, 0], sizes = [1, 512], strides = [1, 1]} : vector<4x512xf32> to vector<1x512xf32>
    %871 = vector.broadcast %869 : vector<5x1xf32> to vector<5x512xf32>
    %872 = vector.broadcast %870 : vector<1x512xf32> to vector<5x512xf32>
    %873 = arith.mulf %871, %872 : vector<5x512xf32>
    %874 = vector.extract_strided_slice %868 {offsets = [0, 1], sizes = [5, 1], strides = [1, 1]} : vector<5x4xf32> to vector<5x1xf32>
    %875 = vector.extract_strided_slice %867 {offsets = [1, 0], sizes = [1, 512], strides = [1, 1]} : vector<4x512xf32> to vector<1x512xf32>
    %876 = vector.broadcast %874 : vector<5x1xf32> to vector<5x512xf32>
    %877 = vector.broadcast %875 : vector<1x512xf32> to vector<5x512xf32>
    %878 = arith.mulf %876, %877 : vector<5x512xf32>
    %879 = vector.extract_strided_slice %868 {offsets = [0, 2], sizes = [5, 1], strides = [1, 1]} : vector<5x4xf32> to vector<5x1xf32>
    %880 = vector.extract_strided_slice %867 {offsets = [2, 0], sizes = [1, 512], strides = [1, 1]} : vector<4x512xf32> to vector<1x512xf32>
    %881 = vector.broadcast %879 : vector<5x1xf32> to vector<5x512xf32>
    %882 = vector.broadcast %880 : vector<1x512xf32> to vector<5x512xf32>
    %883 = arith.mulf %881, %882 : vector<5x512xf32>
    %884 = vector.extract_strided_slice %868 {offsets = [0, 3], sizes = [5, 1], strides = [1, 1]} : vector<5x4xf32> to vector<5x1xf32>
    %885 = vector.extract_strided_slice %867 {offsets = [3, 0], sizes = [1, 512], strides = [1, 1]} : vector<4x512xf32> to vector<1x512xf32>
    %886 = vector.broadcast %884 : vector<5x1xf32> to vector<5x512xf32>
    %887 = vector.broadcast %885 : vector<1x512xf32> to vector<5x512xf32>
    %888 = arith.mulf %886, %887 : vector<5x512xf32>
    %889 = arith.addf %863, %873 : vector<5x512xf32>
    %890 = arith.addf %864, %878 : vector<5x512xf32>
    %891 = arith.addf %865, %883 : vector<5x512xf32>
    %892 = arith.addf %866, %888 : vector<5x512xf32>
    %893 = vector.extract_strided_slice %350 {offsets = [0, 57], sizes = [4, 512], strides = [1, 1]} : vector<4x576xf32> to vector<4x512xf32>
    %c168 = arith.constant 168 : index
    %c0_102 = arith.constant 0 : index
    %894 = vector.load %arg4[%c168, %c0_102] : memref<200x4xf32, #tpu.memory_space<vmem>>, vector<5x4xf32>
    %895 = vector.extract_strided_slice %894 {offsets = [0, 0], sizes = [5, 1], strides = [1, 1]} : vector<5x4xf32> to vector<5x1xf32>
    %896 = vector.extract_strided_slice %893 {offsets = [0, 0], sizes = [1, 512], strides = [1, 1]} : vector<4x512xf32> to vector<1x512xf32>
    %897 = vector.broadcast %895 : vector<5x1xf32> to vector<5x512xf32>
    %898 = vector.broadcast %896 : vector<1x512xf32> to vector<5x512xf32>
    %899 = arith.mulf %897, %898 : vector<5x512xf32>
    %900 = vector.extract_strided_slice %894 {offsets = [0, 1], sizes = [5, 1], strides = [1, 1]} : vector<5x4xf32> to vector<5x1xf32>
    %901 = vector.extract_strided_slice %893 {offsets = [1, 0], sizes = [1, 512], strides = [1, 1]} : vector<4x512xf32> to vector<1x512xf32>
    %902 = vector.broadcast %900 : vector<5x1xf32> to vector<5x512xf32>
    %903 = vector.broadcast %901 : vector<1x512xf32> to vector<5x512xf32>
    %904 = arith.mulf %902, %903 : vector<5x512xf32>
    %905 = vector.extract_strided_slice %894 {offsets = [0, 2], sizes = [5, 1], strides = [1, 1]} : vector<5x4xf32> to vector<5x1xf32>
    %906 = vector.extract_strided_slice %893 {offsets = [2, 0], sizes = [1, 512], strides = [1, 1]} : vector<4x512xf32> to vector<1x512xf32>
    %907 = vector.broadcast %905 : vector<5x1xf32> to vector<5x512xf32>
    %908 = vector.broadcast %906 : vector<1x512xf32> to vector<5x512xf32>
    %909 = arith.mulf %907, %908 : vector<5x512xf32>
    %910 = vector.extract_strided_slice %894 {offsets = [0, 3], sizes = [5, 1], strides = [1, 1]} : vector<5x4xf32> to vector<5x1xf32>
    %911 = vector.extract_strided_slice %893 {offsets = [3, 0], sizes = [1, 512], strides = [1, 1]} : vector<4x512xf32> to vector<1x512xf32>
    %912 = vector.broadcast %910 : vector<5x1xf32> to vector<5x512xf32>
    %913 = vector.broadcast %911 : vector<1x512xf32> to vector<5x512xf32>
    %914 = arith.mulf %912, %913 : vector<5x512xf32>
    %915 = arith.addf %889, %899 : vector<5x512xf32>
    %916 = arith.addf %890, %904 : vector<5x512xf32>
    %917 = arith.addf %891, %909 : vector<5x512xf32>
    %918 = arith.addf %892, %914 : vector<5x512xf32>
    %919 = vector.extract_strided_slice %350 {offsets = [0, 58], sizes = [4, 512], strides = [1, 1]} : vector<4x576xf32> to vector<4x512xf32>
    %c176 = arith.constant 176 : index
    %c0_103 = arith.constant 0 : index
    %920 = vector.load %arg4[%c176, %c0_103] : memref<200x4xf32, #tpu.memory_space<vmem>>, vector<5x4xf32>
    %921 = vector.extract_strided_slice %920 {offsets = [0, 0], sizes = [5, 1], strides = [1, 1]} : vector<5x4xf32> to vector<5x1xf32>
    %922 = vector.extract_strided_slice %919 {offsets = [0, 0], sizes = [1, 512], strides = [1, 1]} : vector<4x512xf32> to vector<1x512xf32>
    %923 = vector.broadcast %921 : vector<5x1xf32> to vector<5x512xf32>
    %924 = vector.broadcast %922 : vector<1x512xf32> to vector<5x512xf32>
    %925 = arith.mulf %923, %924 : vector<5x512xf32>
    %926 = vector.extract_strided_slice %920 {offsets = [0, 1], sizes = [5, 1], strides = [1, 1]} : vector<5x4xf32> to vector<5x1xf32>
    %927 = vector.extract_strided_slice %919 {offsets = [1, 0], sizes = [1, 512], strides = [1, 1]} : vector<4x512xf32> to vector<1x512xf32>
    %928 = vector.broadcast %926 : vector<5x1xf32> to vector<5x512xf32>
    %929 = vector.broadcast %927 : vector<1x512xf32> to vector<5x512xf32>
    %930 = arith.mulf %928, %929 : vector<5x512xf32>
    %931 = vector.extract_strided_slice %920 {offsets = [0, 2], sizes = [5, 1], strides = [1, 1]} : vector<5x4xf32> to vector<5x1xf32>
    %932 = vector.extract_strided_slice %919 {offsets = [2, 0], sizes = [1, 512], strides = [1, 1]} : vector<4x512xf32> to vector<1x512xf32>
    %933 = vector.broadcast %931 : vector<5x1xf32> to vector<5x512xf32>
    %934 = vector.broadcast %932 : vector<1x512xf32> to vector<5x512xf32>
    %935 = arith.mulf %933, %934 : vector<5x512xf32>
    %936 = vector.extract_strided_slice %920 {offsets = [0, 3], sizes = [5, 1], strides = [1, 1]} : vector<5x4xf32> to vector<5x1xf32>
    %937 = vector.extract_strided_slice %919 {offsets = [3, 0], sizes = [1, 512], strides = [1, 1]} : vector<4x512xf32> to vector<1x512xf32>
    %938 = vector.broadcast %936 : vector<5x1xf32> to vector<5x512xf32>
    %939 = vector.broadcast %937 : vector<1x512xf32> to vector<5x512xf32>
    %940 = arith.mulf %938, %939 : vector<5x512xf32>
    %941 = arith.addf %915, %925 : vector<5x512xf32>
    %942 = arith.addf %916, %930 : vector<5x512xf32>
    %943 = arith.addf %917, %935 : vector<5x512xf32>
    %944 = arith.addf %918, %940 : vector<5x512xf32>
    %945 = vector.extract_strided_slice %350 {offsets = [0, 59], sizes = [4, 512], strides = [1, 1]} : vector<4x576xf32> to vector<4x512xf32>
    %c184 = arith.constant 184 : index
    %c0_104 = arith.constant 0 : index
    %946 = vector.load %arg4[%c184, %c0_104] : memref<200x4xf32, #tpu.memory_space<vmem>>, vector<5x4xf32>
    %947 = vector.extract_strided_slice %946 {offsets = [0, 0], sizes = [5, 1], strides = [1, 1]} : vector<5x4xf32> to vector<5x1xf32>
    %948 = vector.extract_strided_slice %945 {offsets = [0, 0], sizes = [1, 512], strides = [1, 1]} : vector<4x512xf32> to vector<1x512xf32>
    %949 = vector.broadcast %947 : vector<5x1xf32> to vector<5x512xf32>
    %950 = vector.broadcast %948 : vector<1x512xf32> to vector<5x512xf32>
    %951 = arith.mulf %949, %950 : vector<5x512xf32>
    %952 = vector.extract_strided_slice %946 {offsets = [0, 1], sizes = [5, 1], strides = [1, 1]} : vector<5x4xf32> to vector<5x1xf32>
    %953 = vector.extract_strided_slice %945 {offsets = [1, 0], sizes = [1, 512], strides = [1, 1]} : vector<4x512xf32> to vector<1x512xf32>
    %954 = vector.broadcast %952 : vector<5x1xf32> to vector<5x512xf32>
    %955 = vector.broadcast %953 : vector<1x512xf32> to vector<5x512xf32>
    %956 = arith.mulf %954, %955 : vector<5x512xf32>
    %957 = vector.extract_strided_slice %946 {offsets = [0, 2], sizes = [5, 1], strides = [1, 1]} : vector<5x4xf32> to vector<5x1xf32>
    %958 = vector.extract_strided_slice %945 {offsets = [2, 0], sizes = [1, 512], strides = [1, 1]} : vector<4x512xf32> to vector<1x512xf32>
    %959 = vector.broadcast %957 : vector<5x1xf32> to vector<5x512xf32>
    %960 = vector.broadcast %958 : vector<1x512xf32> to vector<5x512xf32>
    %961 = arith.mulf %959, %960 : vector<5x512xf32>
    %962 = vector.extract_strided_slice %946 {offsets = [0, 3], sizes = [5, 1], strides = [1, 1]} : vector<5x4xf32> to vector<5x1xf32>
    %963 = vector.extract_strided_slice %945 {offsets = [3, 0], sizes = [1, 512], strides = [1, 1]} : vector<4x512xf32> to vector<1x512xf32>
    %964 = vector.broadcast %962 : vector<5x1xf32> to vector<5x512xf32>
    %965 = vector.broadcast %963 : vector<1x512xf32> to vector<5x512xf32>
    %966 = arith.mulf %964, %965 : vector<5x512xf32>
    %967 = arith.addf %941, %951 : vector<5x512xf32>
    %968 = arith.addf %942, %956 : vector<5x512xf32>
    %969 = arith.addf %943, %961 : vector<5x512xf32>
    %970 = arith.addf %944, %966 : vector<5x512xf32>
    %971 = vector.extract_strided_slice %350 {offsets = [0, 60], sizes = [4, 512], strides = [1, 1]} : vector<4x576xf32> to vector<4x512xf32>
    %c192 = arith.constant 192 : index
    %c0_105 = arith.constant 0 : index
    %972 = vector.load %arg4[%c192, %c0_105] : memref<200x4xf32, #tpu.memory_space<vmem>>, vector<5x4xf32>
    %973 = vector.extract_strided_slice %972 {offsets = [0, 0], sizes = [5, 1], strides = [1, 1]} : vector<5x4xf32> to vector<5x1xf32>
    %974 = vector.extract_strided_slice %971 {offsets = [0, 0], sizes = [1, 512], strides = [1, 1]} : vector<4x512xf32> to vector<1x512xf32>
    %975 = vector.broadcast %973 : vector<5x1xf32> to vector<5x512xf32>
    %976 = vector.broadcast %974 : vector<1x512xf32> to vector<5x512xf32>
    %977 = arith.mulf %975, %976 : vector<5x512xf32>
    %978 = vector.extract_strided_slice %972 {offsets = [0, 1], sizes = [5, 1], strides = [1, 1]} : vector<5x4xf32> to vector<5x1xf32>
    %979 = vector.extract_strided_slice %971 {offsets = [1, 0], sizes = [1, 512], strides = [1, 1]} : vector<4x512xf32> to vector<1x512xf32>
    %980 = vector.broadcast %978 : vector<5x1xf32> to vector<5x512xf32>
    %981 = vector.broadcast %979 : vector<1x512xf32> to vector<5x512xf32>
    %982 = arith.mulf %980, %981 : vector<5x512xf32>
    %983 = vector.extract_strided_slice %972 {offsets = [0, 2], sizes = [5, 1], strides = [1, 1]} : vector<5x4xf32> to vector<5x1xf32>
    %984 = vector.extract_strided_slice %971 {offsets = [2, 0], sizes = [1, 512], strides = [1, 1]} : vector<4x512xf32> to vector<1x512xf32>
    %985 = vector.broadcast %983 : vector<5x1xf32> to vector<5x512xf32>
    %986 = vector.broadcast %984 : vector<1x512xf32> to vector<5x512xf32>
    %987 = arith.mulf %985, %986 : vector<5x512xf32>
    %988 = vector.extract_strided_slice %972 {offsets = [0, 3], sizes = [5, 1], strides = [1, 1]} : vector<5x4xf32> to vector<5x1xf32>
    %989 = vector.extract_strided_slice %971 {offsets = [3, 0], sizes = [1, 512], strides = [1, 1]} : vector<4x512xf32> to vector<1x512xf32>
    %990 = vector.broadcast %988 : vector<5x1xf32> to vector<5x512xf32>
    %991 = vector.broadcast %989 : vector<1x512xf32> to vector<5x512xf32>
    %992 = arith.mulf %990, %991 : vector<5x512xf32>
    %993 = arith.addf %967, %977 : vector<5x512xf32>
    %994 = arith.addf %968, %982 : vector<5x512xf32>
    %995 = arith.addf %969, %987 : vector<5x512xf32>
    %996 = arith.addf %970, %992 : vector<5x512xf32>
    %997 = arith.addf %993, %994 : vector<5x512xf32>
    %998 = arith.addf %995, %996 : vector<5x512xf32>
    %999 = arith.addf %997, %998 : vector<5x512xf32>
    %1000 = vector.broadcast %1 : vector<5x1xf32> to vector<5x512xf32>
    %1001 = arith.addf %999, %1000 : vector<5x512xf32>
    %c0_106 = arith.constant 0 : index
    %c0_107 = arith.constant 0 : index
    %c0_108 = arith.constant 0 : index
    %1002 = vector.load %arg7[%c0_106, %c0_107, %c0_108] : memref<1x5x512xf32, #tpu.memory_space<vmem>>, vector<1x5x512xf32>
    %1003 = vector.shape_cast %1002 : vector<1x5x512xf32> to vector<5x512xf32>
    %1004 = vector.shape_cast %1001 : vector<5x512xf32> to vector<1x5x512xf32>
    tpu.vector_store %arg7[%c0_106, %c0_107, %c0_108], %1004 {strides = array<i32>} : memref<1x5x512xf32, #tpu.memory_space<vmem>>, vector<1x5x512xf32>,
    return
  }
  func.func @transform_0(%arg0: i32) -> (i32, i32, i32) {
    %c0_i32 = arith.constant 0 : i32
    %c0_i32_0 = arith.constant 0 : i32
    %c0_i32_1 = arith.constant 0 : i32
    return %arg0, %c0_i32, %c0_i32_0 : i32, i32, i32
  }
  func.func @transform_1(%arg0: i32) -> (i32, i32) {
    %c0_i32 = arith.constant 0 : i32
    %c0_i32_0 = arith.constant 0 : i32
    %c0_i32_1 = arith.constant 0 : i32
    return %c0_i32, %c0_i32_0 : i32, i32
  }
  func.func @transform_2(%arg0: i32) -> (i32, i32) {
    %c0_i32 = arith.constant 0 : i32
    %c0_i32_0 = arith.constant 0 : i32
    %c0_i32_1 = arith.constant 0 : i32
    return %c0_i32, %c0_i32_0 : i32, i32
  }
  func.func @transform_3(%arg0: i32) -> (i32, i32) {
    %c0_i32 = arith.constant 0 : i32
    %c0_i32_0 = arith.constant 0 : i32
    %c0_i32_1 = arith.constant 0 : i32
    return %c0_i32, %c0_i32_0 : i32, i32
  }
  func.func @transform_4(%arg0: i32) -> (i32, i32) {
    %c0_i32 = arith.constant 0 : i32
    %c0_i32_0 = arith.constant 0 : i32
    %c0_i32_1 = arith.constant 0 : i32
    return %c0_i32, %c0_i32_0 : i32, i32
  }
  func.func @transform_5(%arg0: i32) -> (i32, i32) {
    %c0_i32 = arith.constant 0 : i32
    %c0_i32_0 = arith.constant 0 : i32
    %c0_i32_1 = arith.constant 0 : i32
    return %c0_i32, %c0_i32_0 : i32, i32
  }
  func.func @transform_6(%arg0: i32) -> (i32, i32, i32) {
    %c0_i32 = arith.constant 0 : i32
    %c0_i32_0 = arith.constant 0 : i32
    %c0_i32_1 = arith.constant 0 : i32
    return %arg0, %c0_i32, %c0_i32_0 : i32, i32, i32
  }
}

</mosaic_0001>

<llo_original>
// kernel: model_forward.1
$region0: #{model_forward.1}
  #allocation0 [shape = 'u32[]', space=smem, size = 0x4, offset = 0x4, fixed_abs, tag = 'smem constant byte address 0x4 - core index']
  #allocation1 [shape = 'u32[144,128]{1,0:T(1,128)}', space=vmem, size = 0x12000, scoped, tag = 'internal scratch']
  %s0 = inlined_call_operand.vmem [shape: f32[2,16,640], index: 0, kind: input, shape index: {}]
  %s1 = inlined_call_operand.vmem [shape: f32[72,4], index: 1, kind: input, shape index: {}]
  %s2 = inlined_call_operand.vmem [shape: f32[4,1], index: 2, kind: input, shape index: {}]
  %s3 = inlined_call_operand.vmem [shape: f32[200,4], index: 3, kind: input, shape index: {}]
  %s4 = inlined_call_operand.vmem [shape: f32[5,1], index: 4, kind: input, shape index: {}]
  %s5 = inlined_call_operand.vmem [shape: f32[1,576], index: 5, kind: input, shape index: {}]
  %s6 = inlined_call_operand.vmem [shape: f32[2,5,512], index: 6, kind: output, shape index: {}]
  %s7 = sld [smem:[#allocation0]]
  $region57: #{model_forward.1} parent=0
    _
  %s9 = ssub.s32 1, %s7
  %s10 = scalar_select 0, %s9, %s7
  loop: start=0, step=1, limit=4
  $region2: #{model_forward.1} parent=0 // loop_pre_header
    _
  $region3: #{model_forward.1} parent=0 // loop_header
    %s12 = sphi 0, %s16
    %p13 = scmp.ge.s32.totalorder %s12, 4
    %s22 = sphi 0, %s24
    %s25 = sphi 0, %s22
    %s26 = sphi 0, %s25
    %s42 = sphi 0, %s26
    %s46 = sphi 0, %s46
    %s48 = sphi 0, %s46
    %s49 = sphi 0, %s48
    %s63 = sphi 0, %s49
    %s67 = sphi 0, %s67
    %s69 = sphi 0, %s67
    %s70 = sphi 0, %s69
    %s84 = sphi 0, %s70
    %s88 = sphi 0, %s88
    %s90 = sphi 0, %s88
    %s91 = sphi 0, %s90
    %s105 = sphi 0, %s91
    %s109 = sphi 0, %s109
    %s111 = sphi 0, %s109
    %s112 = sphi 0, %s111
    %s126 = sphi 0, %s112
    %s130 = sphi 0, %s130
    %s132 = sphi 0, %s130
    %s133 = sphi 0, %s132
    %s147 = sphi 0, %s133
    %s153 = sphi 0, %s155
    %s156 = sphi 0, %s153
    %s157 = sphi 0, %s156
    %s173 = sphi 0, %s157
  $region4: #{model_forward.1} parent=0 // loop_header_branch
    %15 = sbr.rel (%p13) target = $region8
  $region5: #{model_forward.1} parent=0 // loop_body
    %s17 = ssub.s32 %s12, 1
    %s18 = ssub.s32 %s12, 2
    %s19 = sadd.s32 %s12, 1
    %s20 = ssub.s32 %s12, %s19
    %p21 = scmp.eq.s32.totalorder %s20, 0
    %s23 = sadd.s32 %s22, 1
    %s24 = scalar_select %p21, %s22, %s23
    %p27 = pneg %p21
    %p28 = scmp.eq.s32.totalorder %s12, 1
    %p29 = por %p27, %p28
    %p30 = scmp.ne.s32.totalorder %s22, %s25
    %p31 = scmp.eq.s32.totalorder %s12, 0
    %p32 = por %p30, %p31
    %p33 = scmp.ne.s32.totalorder %s22, %s25
    %p34 = scmp.eq.s32.totalorder %s17, 1
    %p35 = por %p33, %p34
    %p36 = scmp.ne.s32.totalorder %s25, %s26
    %p37 = scmp.eq.s32.totalorder %s17, 0
    %p38 = por %p36, %p37
    %p39 = scmp.ne.s32.totalorder %s25, %s26
    %p40 = scmp.eq.s32.totalorder %s18, 1
    %p41 = por %p39, %p40
    %p43 = scmp.ne.s32.totalorder %s26, %s42
    %p44 = scmp.eq.s32.totalorder %s18, 0
    %p45 = por %p43, %p44
    %s47 = sadd.s32 %s46, 1
    %p50 = scmp.eq.s32.totalorder %s12, 1
    %p51 = scmp.ne.s32.totalorder %s46, %s48
    %p52 = scmp.eq.s32.totalorder %s12, 0
    %p53 = por %p51, %p52
    %p54 = scmp.ne.s32.totalorder %s46, %s48
    %p55 = scmp.eq.s32.totalorder %s17, 1
    %p56 = por %p54, %p55
    %p57 = scmp.ne.s32.totalorder %s48, %s49
    %p58 = scmp.eq.s32.totalorder %s17, 0
    %p59 = por %p57, %p58
    %p60 = scmp.ne.s32.totalorder %s48, %s49
    %p61 = scmp.eq.s32.totalorder %s18, 1
    %p62 = por %p60, %p61
    %p64 = scmp.ne.s32.totalorder %s49, %s63
    %p65 = scmp.eq.s32.totalorder %s18, 0
    %p66 = por %p64, %p65
    %s68 = sadd.s32 %s67, 1
    %p71 = scmp.eq.s32.totalorder %s12, 1
    %p72 = scmp.ne.s32.totalorder %s67, %s69
    %p73 = scmp.eq.s32.totalorder %s12, 0
    %p74 = por %p72, %p73
    %p75 = scmp.ne.s32.totalorder %s67, %s69
    %p76 = scmp.eq.s32.totalorder %s17, 1
    %p77 = por %p75, %p76
    %p78 = scmp.ne.s32.totalorder %s69, %s70
    %p79 = scmp.eq.s32.totalorder %s17, 0
    %p80 = por %p78, %p79
    %p81 = scmp.ne.s32.totalorder %s69, %s70
    %p82 = scmp.eq.s32.totalorder %s18, 1
    %p83 = por %p81, %p82
    %p85 = scmp.ne.s32.totalorder %s70, %s84
    %p86 = scmp.eq.s32.totalorder %s18, 0
    %p87 = por %p85, %p86
    %s89 = sadd.s32 %s88, 1
    %p92 = scmp.eq.s32.totalorder %s12, 1
    %p93 = scmp.ne.s32.totalorder %s88, %s90
    %p94 = scmp.eq.s32.totalorder %s12, 0
    %p95 = por %p93, %p94
    %p96 = scmp.ne.s32.totalorder %s88, %s90
    %p97 = scmp.eq.s32.totalorder %s17, 1
    %p98 = por %p96, %p97
    %p99 = scmp.ne.s32.totalorder %s90, %s91
    %p100 = scmp.eq.s32.totalorder %s17, 0
    %p101 = por %p99, %p100
    %p102 = scmp.ne.s32.totalorder %s90, %s91
    %p103 = scmp.eq.s32.totalorder %s18, 1
    %p104 = por %p102, %p103
    %p106 = scmp.ne.s32.totalorder %s91, %s105
    %p107 = scmp.eq.s32.totalorder %s18, 0
    %p108 = por %p106, %p107
    %s110 = sadd.s32 %s109, 1
    %p113 = scmp.eq.s32.totalorder %s12, 1
    %p114 = scmp.ne.s32.totalorder %s109, %s111
    %p115 = scmp.eq.s32.totalorder %s12, 0
    %p116 = por %p114, %p115
    %p117 = scmp.ne.s32.totalorder %s109, %s111
    %p118 = scmp.eq.s32.totalorder %s17, 1
    %p119 = por %p117, %p118
    %p120 = scmp.ne.s32.totalorder %s111, %s112
    %p121 = scmp.eq.s32.totalorder %s17, 0
    %p122 = por %p120, %p121
    %p123 = scmp.ne.s32.totalorder %s111, %s112
    %p124 = scmp.eq.s32.totalorder %s18, 1
    %p125 = por %p123, %p124
    %p127 = scmp.ne.s32.totalorder %s112, %s126
    %p128 = scmp.eq.s32.totalorder %s18, 0
    %p129 = por %p127, %p128
    %s131 = sadd.s32 %s130, 1
    %p134 = scmp.eq.s32.totalorder %s12, 1
    %p135 = scmp.ne.s32.totalorder %s130, %s132
    %p136 = scmp.eq.s32.totalorder %s12, 0
    %p137 = por %p135, %p136
    %p138 = scmp.ne.s32.totalorder %s130, %s132
    %p139 = scmp.eq.s32.totalorder %s17, 1
    %p140 = por %p138, %p139
    %p141 = scmp.ne.s32.totalorder %s132, %s133
    %p142 = scmp.eq.s32.totalorder %s17, 0
    %p143 = por %p141, %p142
    %p144 = scmp.ne.s32.totalorder %s132, %s133
    %p145 = scmp.eq.s32.totalorder %s18, 1
    %p146 = por %p144, %p145
    %p148 = scmp.ne.s32.totalorder %s133, %s147
    %p149 = scmp.eq.s32.totalorder %s18, 0
    %p150 = por %p148, %p149
    %s151 = ssub.s32 %s12, %s19
    %p152 = scmp.eq.s32.totalorder %s151, 0
    %s154 = sadd.s32 %s153, 1
    %s155 = scalar_select %p152, %s153, %s154
    %p158 = pneg %p152
    %p159 = scmp.eq.s32.totalorder %s12, 1
    %p160 = por %p158, %p159
    %p161 = scmp.ne.s32.totalorder %s153, %s156
    %p162 = scmp.eq.s32.totalorder %s12, 0
    %p163 = por %p161, %p162
    %p164 = scmp.ne.s32.totalorder %s153, %s156
    %p165 = scmp.eq.s32.totalorder %s17, 1
    %p166 = por %p164, %p165
    %p167 = scmp.ne.s32.totalorder %s156, %s157
    %p168 = scmp.eq.s32.totalorder %s17, 0
    %p169 = por %p167, %p168
    %p170 = scmp.ne.s32.totalorder %s156, %s157
    %p171 = scmp.eq.s32.totalorder %s18, 1
    %p172 = por %p170, %p171
    %p174 = scmp.ne.s32.totalorder %s157, %s173
    %p175 = scmp.eq.s32.totalorder %s18, 0
    %p176 = por %p174, %p175
    %p177 = scmp.le.s32.totalorder 1, %s12
    %p178 = scmp.lt.s32.totalorder %s12, 3
    %p179 = pnand %p177, %p178
    %p180 = pneg %p179
    // Predicated region
    $region9: #{model_forward.1} parent=5 // pred_check
      _
    $region10: #{model_forward.1} parent=5 // pred_check_branch
      %182 = sbr.rel (%p179) target = $region12
    $region11: #{model_forward.1} parent=5 // pred_region
      %s183 = ssub.s32 %s12, 1
      // Predicated region
      $region13: #{model_forward.1} parent=11 // pred_check
        %p184 = pneg %p59
      $region14: #{model_forward.1} parent=11 // pred_check_branch
        %186 = sbr.rel (%p184) target = $region16
      $region15: #{model_forward.1} parent=11 // pred_region
        _
      $region16: #{model_forward.1} parent=11 // pred_fallthru
        _
      // Predicated region
      $region17: #{model_forward.1} parent=11 // pred_check
        %p187 = pneg %p80
      $region18: #{model_forward.1} parent=11 // pred_check_branch
        %189 = sbr.rel (%p187) target = $region20
      $region19: #{model_forward.1} parent=11 // pred_region
        _
      $region20: #{model_forward.1} parent=11 // pred_fallthru
        _
      // Predicated region
      $region21: #{model_forward.1} parent=11 // pred_check
        %p190 = pneg %p101
      $region22: #{model_forward.1} parent=11 // pred_check_branch
        %192 = sbr.rel (%p190) target = $region24
      $region23: #{model_forward.1} parent=11 // pred_region
        _
      $region24: #{model_forward.1} parent=11 // pred_fallthru
        _
      // Predicated region
      $region25: #{model_forward.1} parent=11 // pred_check
        %p193 = pneg %p122
      $region26: #{model_forward.1} parent=11 // pred_check_branch
        %195 = sbr.rel (%p193) target = $region28
      $region27: #{model_forward.1} parent=11 // pred_region
        _
      $region28: #{model_forward.1} parent=11 // pred_fallthru
        _
      // Predicated region
      $region29: #{model_forward.1} parent=11 // pred_check
        %p196 = pneg %p143
      $region30: #{model_forward.1} parent=11 // pred_check_branch
        %198 = sbr.rel (%p196) target = $region32
      $region31: #{model_forward.1} parent=11 // pred_region
        _
      $region32: #{model_forward.1} parent=11 // pred_fallthru
        _
    $region12: #{model_forward.1} parent=5 // pred_fallthru
      _
    %p199 = scmp.lt.s32.totalorder %s12, 2
    // Predicated region
    $region33: #{model_forward.1} parent=5 // pred_check
      %p200 = pneg %p199
    $region34: #{model_forward.1} parent=5 // pred_check_branch
      %202 = sbr.rel (%p200) target = $region36
    $region35: #{model_forward.1} parent=5 // pred_region
      // Predicated region
      $region37: #{model_forward.1} parent=35 // pred_check
        %p203 = pneg %p32
      $region38: #{model_forward.1} parent=35 // pred_check_branch
        %205 = sbr.rel (%p203) target = $region40
      $region39: #{model_forward.1} parent=35 // pred_region
        %p206 = scmp.lt.s32.totalorder %s12, 1
        %s207 = scalar_select %p206, %s12, 1
        %s208 = smul.addr %s207, 10
        %s209 = smul.addr %s208, 8
        %s210 = scalar_lea.vmem %s0, %s209
      $region40: #{model_forward.1} parent=35 // pred_fallthru
        _
    $region36: #{model_forward.1} parent=5 // pred_fallthru
      _
    %p211 = scmp.le.s32.totalorder 1, %s12
    %p212 = scmp.lt.s32.totalorder %s12, 3
    %p213 = pnand %p211, %p212
    %p214 = pneg %p213
    // Predicated region
    $region41: #{model_forward.1} parent=5 // pred_check
      _
    $region42: #{model_forward.1} parent=5 // pred_check_branch
      %216 = sbr.rel (%p213) target = $region44
    $region43: #{model_forward.1} parent=5 // pred_region
      %s217 = ssub.s32 %s12, 1
      %p218 = scmp.lt.s32.totalorder %s17, 1
      %s219 = scalar_select %p218, %s17, 1
      %s220 = smul.addr %s219, 10
      %s221 = smul.addr %s220, 8
      %s222 = scalar_lea.vmem %s0, %s221
      %p223 = pneg %p38
      %p224 = pneg %p35
      %p225 = pneg %p59
      %p226 = pneg %p56
      %p227 = pneg %p80
      %p228 = pneg %p77
      %p229 = pneg %p101
      %p230 = pneg %p98
      %p231 = pneg %p122
      %p232 = pneg %p119
      %p233 = pneg %p143
      %p234 = pneg %p140
      %p235 = pneg %p169
      %p236 = pneg %p166
      %p237 = scmp.lt.s32.totalorder %s17, 1
      %s238 = scalar_select %p237, %s17, 1
      %s239 = smul.addr %s238, 4
      %s240 = smul.addr %s239, 8
      %s241 = scalar_lea.vmem %s6, %s240
      %p242 = scmp.lt.s32.totalorder %s17, 1
      %s243 = scalar_select %p242, %s17, 1
      %s244 = smul.addr %s243, 10
      %s245 = smul.addr %s244, 8
      %s246 = scalar_lea.vmem %s0, %s245
      %p247 = scmp.lt.s32.totalorder %s17, 1
      %s248 = scalar_select %p247, %s17, 1
      %s249 = smul.addr %s248, 4
      %s250 = smul.addr %s249, 8
      %s251 = scalar_lea.vmem %s6, %s250
      %v252 = vld [vmem:[%s2] sm:$0xf]
      %v253 = vld [vmem:[%s4] sm:$0x1f]
      %v254 = vld [vmem:[%s5] sm:$0x1f]
      %v255 = vld [vmem:[%s246] sm:$0xf]
      %v256 = vld [vmem:[%s246 + $0x8] sm:$0xf]
      %v257 = vld [vmem:[%s246 + $0x10] sm:$0xf]
      %v258 = vld [vmem:[%s246 + $0x18] sm:$0xf]
      %v259 = vld [vmem:[%s246 + $0x20] sm:$0xf]
      %v260 = vld [vmem:[%s1] sm:$0xf]
      %262 = vset.pattern.permute.xlu0 0
      %263 = vperm.xlu0 %262, %v260
      %v264 = vpop.permute.xlu0 %263
      %v266 = vlaneseq
      %v267 = vshrl.u32 %v266, 7
      %v268 = vsub.s32 0, %v267
      %v269 = vrot.slane %v255, %v268
      %v270 = vlaneseq
      %v271 = vshrl.u32 %v270, 7
      %v272 = vsub.s32 0, %v271
      %v273 = vrot.slane %v256, %v272
      %v274 = vlaneseq
      %v275 = vshrl.u32 %v274, 7
      %v276 = vsub.s32 0, %v275
      %v277 = vrot.slane %v257, %v276
      %v278 = vlaneseq
      %v279 = vshrl.u32 %v278, 7
      %v280 = vsub.s32 0, %v279
      %v281 = vrot.slane %v258, %v280
      %v282 = vlaneseq
      %v283 = vshrl.u32 %v282, 7
      %v284 = vsub.s32 0, %v283
      %v285 = vrot.slane %v259, %v284
      %v286 = vmul.f32 %v264, %v269
      %v287 = vmul.f32 %v264, %v273
      %v288 = vmul.f32 %v264, %v277
      %v289 = vmul.f32 %v264, %v281
      %v290 = vmul.f32 %v264, %v285
      %291 = vset.pattern.permute.xlu0 1
      %292 = vperm.xlu0 %291, %v260
      %v293 = vpop.permute.xlu0 %292
      %v295 = vlaneseq
      %v296 = vshrl.u32 %v295, 7
      %v297 = vsub.s32 1, %v296
      %v298 = vrot.slane %v255, %v297
      %v299 = vlaneseq
      %v300 = vshrl.u32 %v299, 7
      %v301 = vsub.s32 1, %v300
      %v302 = vrot.slane %v256, %v301
      %v303 = vlaneseq
      %v304 = vshrl.u32 %v303, 7
      %v305 = vsub.s32 1, %v304
      %v306 = vrot.slane %v257, %v305
      %v307 = vlaneseq
      %v308 = vshrl.u32 %v307, 7
      %v309 = vsub.s32 1, %v308
      %v310 = vrot.slane %v258, %v309
      %v311 = vlaneseq
      %v312 = vshrl.u32 %v311, 7
      %v313 = vsub.s32 1, %v312
      %v314 = vrot.slane %v259, %v313
      %v315 = vmul.f32 %v293, %v298
      %v316 = vmul.f32 %v293, %v302
      %v317 = vmul.f32 %v293, %v306
      %v318 = vmul.f32 %v293, %v310
      %v319 = vmul.f32 %v293, %v314
      %320 = vset.pattern.permute.xlu0 2
      %321 = vperm.xlu0 %320, %v260
      %v322 = vpop.permute.xlu0 %321
      %v324 = vlaneseq
      %v325 = vshrl.u32 %v324, 7
      %v326 = vsub.s32 2, %v325
      %v327 = vrot.slane %v255, %v326
      %v328 = vlaneseq
      %v329 = vshrl.u32 %v328, 7
      %v330 = vsub.s32 2, %v329
      %v331 = vrot.slane %v256, %v330
      %v332 = vlaneseq
      %v333 = vshrl.u32 %v332, 7
      %v334 = vsub.s32 2, %v333
      %v335 = vrot.slane %v257, %v334
      %v336 = vlaneseq
      %v337 = vshrl.u32 %v336, 7
      %v338 = vsub.s32 2, %v337
      %v339 = vrot.slane %v258, %v338
      %v340 = vlaneseq
      %v341 = vshrl.u32 %v340, 7
      %v342 = vsub.s32 2, %v341
      %v343 = vrot.slane %v259, %v342
      %v344 = vmul.f32 %v322, %v327
      %v345 = vmul.f32 %v322, %v331
      %v346 = vmul.f32 %v322, %v335
      %v347 = vmul.f32 %v322, %v339
      %v348 = vmul.f32 %v322, %v343
      %349 = vset.pattern.permute.xlu0 3
      %350 = vperm.xlu0 %349, %v260
      %v351 = vpop.permute.xlu0 %350
      %v353 = vlaneseq
      %v354 = vshrl.u32 %v353, 7
      %v355 = vsub.s32 3, %v354
      %v356 = vrot.slane %v255, %v355
      %v357 = vlaneseq
      %v358 = vshrl.u32 %v357, 7
      %v359 = vsub.s32 3, %v358
      %v360 = vrot.slane %v256, %v359
      %v361 = vlaneseq
      %v362 = vshrl.u32 %v361, 7
      %v363 = vsub.s32 3, %v362
      %v364 = vrot.slane %v257, %v363
      %v365 = vlaneseq
      %v366 = vshrl.u32 %v365, 7
      %v367 = vsub.s32 3, %v366
      %v368 = vrot.slane %v258, %v367
      %v369 = vlaneseq
      %v370 = vshrl.u32 %v369, 7
      %v371 = vsub.s32 3, %v370
      %v372 = vrot.slane %v259, %v371
      %v373 = vmul.f32 %v351, %v356
      %v374 = vmul.f32 %v351, %v360
      %v375 = vmul.f32 %v351, %v364
      %v376 = vmul.f32 %v351, %v368
      %v377 = vmul.f32 %v351, %v372
      %v378 = vld [vmem:[%s246] sm:$0xf0]
      %v379 = vld [vmem:[%s246 + $0x8] sm:$0xf0]
      %v380 = vld [vmem:[%s246 + $0x10] sm:$0xf0]
      %v381 = vld [vmem:[%s246 + $0x18] sm:$0xf0]
      %v382 = vld [vmem:[%s246 + $0x20] sm:$0xf0]
      %v383 = vld [vmem:[%s1 + $0x8] sm:$0xf]
      %385 = vset.pattern.permute.xlu0 0
      %386 = vperm.xlu0 %385, %v383
      %v387 = vpop.permute.xlu0 %386
      %v389 = vlaneseq
      %v390 = vshrl.u32 %v389, 7
      %v391 = vsub.s32 4, %v390
      %v392 = vrot.slane %v378, %v391
      %v393 = vlaneseq
      %v394 = vshrl.u32 %v393, 7
      %v395 = vsub.s32 4, %v394
      %v396 = vrot.slane %v379, %v395
      %v397 = vlaneseq
      %v398 = vshrl.u32 %v397, 7
      %v399 = vsub.s32 4, %v398
      %v400 = vrot.slane %v380, %v399
      %v401 = vlaneseq
      %v402 = vshrl.u32 %v401, 7
      %v403 = vsub.s32 4, %v402
      %v404 = vrot.slane %v381, %v403
      %v405 = vlaneseq
      %v406 = vshrl.u32 %v405, 7
      %v407 = vsub.s32 4, %v406
      %v408 = vrot.slane %v382, %v407
      %v409 = vmul.f32 %v387, %v392
      %v410 = vmul.f32 %v387, %v396
      %v411 = vmul.f32 %v387, %v400
      %v412 = vmul.f32 %v387, %v404
      %v413 = vmul.f32 %v387, %v408
      %414 = vset.pattern.permute.xlu0 1
      %415 = vperm.xlu0 %414, %v383
      %v416 = vpop.permute.xlu0 %415
      %v418 = vlaneseq
      %v419 = vshrl.u32 %v418, 7
      %v420 = vsub.s32 5, %v419
      %v421 = vrot.slane %v378, %v420
      %v422 = vlaneseq
      %v423 = vshrl.u32 %v422, 7
      %v424 = vsub.s32 5, %v423
      %v425 = vrot.slane %v379, %v424
      %v426 = vlaneseq
      %v427 = vshrl.u32 %v426, 7
      %v428 = vsub.s32 5, %v427
      %v429 = vrot.slane %v380, %v428
      %v430 = vlaneseq
      %v431 = vshrl.u32 %v430, 7
      %v432 = vsub.s32 5, %v431
      %v433 = vrot.slane %v381, %v432
      %v434 = vlaneseq
      %v435 = vshrl.u32 %v434, 7
      %v436 = vsub.s32 5, %v435
      %v437 = vrot.slane %v382, %v436
      %v438 = vmul.f32 %v416, %v421
      %v439 = vmul.f32 %v416, %v425
      %v440 = vmul.f32 %v416, %v429
      %v441 = vmul.f32 %v416, %v433
      %v442 = vmul.f32 %v416, %v437
      %443 = vset.pattern.permute.xlu0 2
      %444 = vperm.xlu0 %443, %v383
      %v445 = vpop.permute.xlu0 %444
      %v447 = vlaneseq
      %v448 = vshrl.u32 %v447, 7
      %v449 = vsub.s32 6, %v448
      %v450 = vrot.slane %v378, %v449
      %v451 = vlaneseq
      %v452 = vshrl.u32 %v451, 7
      %v453 = vsub.s32 6, %v452
      %v454 = vrot.slane %v379, %v453
      %v455 = vlaneseq
      %v456 = vshrl.u32 %v455, 7
      %v457 = vsub.s32 6, %v456
      %v458 = vrot.slane %v380, %v457
      %v459 = vlaneseq
      %v460 = vshrl.u32 %v459, 7
      %v461 = vsub.s32 6, %v460
      %v462 = vrot.slane %v381, %v461
      %v463 = vlaneseq
      %v464 = vshrl.u32 %v463, 7
      %v465 = vsub.s32 6, %v464
      %v466 = vrot.slane %v382, %v465
      %v467 = vmul.f32 %v445, %v450
      %v468 = vmul.f32 %v445, %v454
      %v469 = vmul.f32 %v445, %v458
      %v470 = vmul.f32 %v445, %v462
      %v471 = vmul.f32 %v445, %v466
      %472 = vset.pattern.permute.xlu0 3
      %473 = vperm.xlu0 %472, %v383
      %v474 = vpop.permute.xlu0 %473
      %v476 = vlaneseq
      %v477 = vshrl.u32 %v476, 7
      %v478 = vsub.s32 7, %v477
      %v479 = vrot.slane %v378, %v478
      %v480 = vlaneseq
      %v481 = vshrl.u32 %v480, 7
      %v482 = vsub.s32 7, %v481
      %v483 = vrot.slane %v379, %v482
      %v484 = vlaneseq
      %v485 = vshrl.u32 %v484, 7
      %v486 = vsub.s32 7, %v485
      %v487 = vrot.slane %v380, %v486
      %v488 = vlaneseq
      %v489 = vshrl.u32 %v488, 7
      %v490 = vsub.s32 7, %v489
      %v491 = vrot.slane %v381, %v490
      %v492 = vlaneseq
      %v493 = vshrl.u32 %v492, 7
      %v494 = vsub.s32 7, %v493
      %v495 = vrot.slane %v382, %v494
      %v496 = vmul.f32 %v474, %v479
      %v497 = vmul.f32 %v474, %v483
      %v498 = vmul.f32 %v474, %v487
      %v499 = vmul.f32 %v474, %v491
      %v500 = vmul.f32 %v474, %v495
      %v501 = vadd.f32 %v286, %v409
      %v502 = vadd.f32 %v287, %v410
      %v503 = vadd.f32 %v288, %v411
      %v504 = vadd.f32 %v289, %v412
      %v505 = vadd.f32 %v290, %v413
      %v506 = vadd.f32 %v315, %v438
      %v507 = vadd.f32 %v316, %v439
      %v508 = vadd.f32 %v317, %v440
      %v509 = vadd.f32 %v318, %v441
      %v510 = vadd.f32 %v319, %v442
      %v511 = vadd.f32 %v344, %v467
      %v512 = vadd.f32 %v345, %v468
      %v513 = vadd.f32 %v346, %v469
      %v514 = vadd.f32 %v347, %v470
      %v515 = vadd.f32 %v348, %v471
      %v516 = vadd.f32 %v373, %v496
      %v517 = vadd.f32 %v374, %v497
      %v518 = vadd.f32 %v375, %v498
      %v519 = vadd.f32 %v376, %v499
      %v520 = vadd.f32 %v377, %v500
      %v521 = vld [vmem:[%s1 + $0x10] sm:$0xf]
      %523 = vset.pattern.permute.xlu0 0
      %524 = vperm.xlu0 %523, %v521
      %v525 = vpop.permute.xlu0 %524
      %v527 = vmul.f32 %v525, %v269
      %v528 = vmul.f32 %v525, %v273
      %v529 = vmul.f32 %v525, %v277
      %v530 = vmul.f32 %v525, %v281
      %v531 = vmul.f32 %v525, %v285
      %532 = vset.pattern.permute.xlu0 1
      %533 = vperm.xlu0 %532, %v521
      %v534 = vpop.permute.xlu0 %533
      %v536 = vmul.f32 %v534, %v298
      %v537 = vmul.f32 %v534, %v302
      %v538 = vmul.f32 %v534, %v306
      %v539 = vmul.f32 %v534, %v310
      %v540 = vmul.f32 %v534, %v314
      %541 = vset.pattern.permute.xlu0 2
      %542 = vperm.xlu0 %541, %v521
      %v543 = vpop.permute.xlu0 %542
      %v545 = vmul.f32 %v543, %v327
      %v546 = vmul.f32 %v543, %v331
      %v547 = vmul.f32 %v543, %v335
      %v548 = vmul.f32 %v543, %v339
      %v549 = vmul.f32 %v543, %v343
      %550 = vset.pattern.permute.xlu0 3
      %551 = vperm.xlu0 %550, %v521
      %v552 = vpop.permute.xlu0 %551
      %v554 = vmul.f32 %v552, %v356
      %v555 = vmul.f32 %v552, %v360
      %v556 = vmul.f32 %v552, %v364
      %v557 = vmul.f32 %v552, %v368
      %v558 = vmul.f32 %v552, %v372
      %564 = vrot.lane.b32.xlu0 %v527, 127
      %v565 = vpop.permute.xlu0 %564
      %566 = vrot.lane.b32.xlu0 %v528, 127
      %v567 = vpop.permute.xlu0 %566
      %568 = vrot.lane.b32.xlu0 %v529, 127
      %v569 = vpop.permute.xlu0 %568
      %570 = vrot.lane.b32.xlu0 %v530, 127
      %v571 = vpop.permute.xlu0 %570
      %572 = vrot.lane.b32.xlu0 %v531, 127
      %v573 = vpop.permute.xlu0 %572
      %vm574 = vcmask 1039360
      %v575 = vsel %vm574, %v565, %v567
      %v576 = vsel %vm574, %v567, %v569
      %v577 = vsel %vm574, %v569, %v571
      %v578 = vsel %vm574, %v571, %v573
      %v584 = vadd.f32 %v501, %v575
      %v585 = vadd.f32 %v502, %v576
      %v586 = vadd.f32 %v503, %v577
      %v587 = vadd.f32 %v504, %v578
      %v588 = vadd.f32 %v505, %v573
      %594 = vrot.lane.b32.xlu0 %v536, 127
      %v595 = vpop.permute.xlu0 %594
      %596 = vrot.lane.b32.xlu0 %v537, 127
      %v597 = vpop.permute.xlu0 %596
      %598 = vrot.lane.b32.xlu0 %v538, 127
      %v599 = vpop.permute.xlu0 %598
      %600 = vrot.lane.b32.xlu0 %v539, 127
      %v601 = vpop.permute.xlu0 %600
      %602 = vrot.lane.b32.xlu0 %v540, 127
      %v603 = vpop.permute.xlu0 %602
      %v604 = vsel %vm574, %v595, %v597
      %v605 = vsel %vm574, %v597, %v599
      %v606 = vsel %vm574, %v599, %v601
      %v607 = vsel %vm574, %v601, %v603
      %v613 = vadd.f32 %v506, %v604
      %v614 = vadd.f32 %v507, %v605
      %v615 = vadd.f32 %v508, %v606
      %v616 = vadd.f32 %v509, %v607
      %v617 = vadd.f32 %v510, %v603
      %623 = vrot.lane.b32.xlu0 %v545, 127
      %v624 = vpop.permute.xlu0 %623
      %625 = vrot.lane.b32.xlu0 %v546, 127
      %v626 = vpop.permute.xlu0 %625
      %627 = vrot.lane.b32.xlu0 %v547, 127
      %v628 = vpop.permute.xlu0 %627
      %629 = vrot.lane.b32.xlu0 %v548, 127
      %v630 = vpop.permute.xlu0 %629
      %631 = vrot.lane.b32.xlu0 %v549, 127
      %v632 = vpop.permute.xlu0 %631
      %v633 = vsel %vm574, %v624, %v626
      %v634 = vsel %vm574, %v626, %v628
      %v635 = vsel %vm574, %v628, %v630
      %v636 = vsel %vm574, %v630, %v632
      %v642 = vadd.f32 %v511, %v633
      %v643 = vadd.f32 %v512, %v634
      %v644 = vadd.f32 %v513, %v635
      %v645 = vadd.f32 %v514, %v636
      %v646 = vadd.f32 %v515, %v632
      %652 = vrot.lane.b32.xlu0 %v554, 127
      %v653 = vpop.permute.xlu0 %652
      %654 = vrot.lane.b32.xlu0 %v555, 127
      %v655 = vpop.permute.xlu0 %654
      %656 = vrot.lane.b32.xlu0 %v556, 127
      %v657 = vpop.permute.xlu0 %656
      %658 = vrot.lane.b32.xlu0 %v557, 127
      %v659 = vpop.permute.xlu0 %658
      %660 = vrot.lane.b32.xlu0 %v558, 127
      %v661 = vpop.permute.xlu0 %660
      %v662 = vsel %vm574, %v653, %v655
      %v663 = vsel %vm574, %v655, %v657
      %v664 = vsel %vm574, %v657, %v659
      %v665 = vsel %vm574, %v659, %v661
      %v671 = vadd.f32 %v516, %v662
      %v672 = vadd.f32 %v517, %v663
      %v673 = vadd.f32 %v518, %v664
      %v674 = vadd.f32 %v519, %v665
      %v675 = vadd.f32 %v520, %v661
      %v676 = vld [vmem:[%s246 + $0x28] sm:$0xf]
      %v677 = vld [vmem:[%s246 + $0x30] sm:$0xf]
      %v678 = vld [vmem:[%s246 + $0x38] sm:$0xf]
      %v679 = vld [vmem:[%s246 + $0x40] sm:$0xf]
      %v680 = vld [vmem:[%s246 + $0x48] sm:$0xf]
      %v681 = vld [vmem:[%s1 + $0x18] sm:$0xf]
      %683 = vset.pattern.permute.xlu0 0
      %684 = vperm.xlu0 %683, %v681
      %v685 = vpop.permute.xlu0 %684
      %v687 = vlaneseq
      %v688 = vshrl.u32 %v687, 7
      %v689 = vsub.s32 0, %v688
      %v690 = vrot.slane %v676, %v689
      %v691 = vlaneseq
      %v692 = vshrl.u32 %v691, 7
      %v693 = vsub.s32 0, %v692
      %v694 = vrot.slane %v677, %v693
      %v695 = vlaneseq
      %v696 = vshrl.u32 %v695, 7
      %v697 = vsub.s32 0, %v696
      %v698 = vrot.slane %v678, %v697
      %v699 = vlaneseq
      %v700 = vshrl.u32 %v699, 7
      %v701 = vsub.s32 0, %v700
      %v702 = vrot.slane %v679, %v701
      %v703 = vlaneseq
      %v704 = vshrl.u32 %v703, 7
      %v705 = vsub.s32 0, %v704
      %v706 = vrot.slane %v680, %v705
      %v707 = vmul.f32 %v685, %v690
      %v708 = vmul.f32 %v685, %v694
      %v709 = vmul.f32 %v685, %v698
      %v710 = vmul.f32 %v685, %v702
      %v711 = vmul.f32 %v685, %v706
      %712 = vset.pattern.permute.xlu0 1
      %713 = vperm.xlu0 %712, %v681
      %v714 = vpop.permute.xlu0 %713
      %v716 = vlaneseq
      %v717 = vshrl.u32 %v716, 7
      %v718 = vsub.s32 1, %v717
      %v719 = vrot.slane %v676, %v718
      %v720 = vlaneseq
      %v721 = vshrl.u32 %v720, 7
      %v722 = vsub.s32 1, %v721
      %v723 = vrot.slane %v677, %v722
      %v724 = vlaneseq
      %v725 = vshrl.u32 %v724, 7
      %v726 = vsub.s32 1, %v725
      %v727 = vrot.slane %v678, %v726
      %v728 = vlaneseq
      %v729 = vshrl.u32 %v728, 7
      %v730 = vsub.s32 1, %v729
      %v731 = vrot.slane %v679, %v730
      %v732 = vlaneseq
      %v733 = vshrl.u32 %v732, 7
      %v734 = vsub.s32 1, %v733
      %v735 = vrot.slane %v680, %v734
      %v736 = vmul.f32 %v714, %v719
      %v737 = vmul.f32 %v714, %v723
      %v738 = vmul.f32 %v714, %v727
      %v739 = vmul.f32 %v714, %v731
      %v740 = vmul.f32 %v714, %v735
      %741 = vset.pattern.permute.xlu0 2
      %742 = vperm.xlu0 %741, %v681
      %v743 = vpop.permute.xlu0 %742
      %v745 = vlaneseq
      %v746 = vshrl.u32 %v745, 7
      %v747 = vsub.s32 2, %v746
      %v748 = vrot.slane %v676, %v747
      %v749 = vlaneseq
      %v750 = vshrl.u32 %v749, 7
      %v751 = vsub.s32 2, %v750
      %v752 = vrot.slane %v677, %v751
      %v753 = vlaneseq
      %v754 = vshrl.u32 %v753, 7
      %v755 = vsub.s32 2, %v754
      %v756 = vrot.slane %v678, %v755
      %v757 = vlaneseq
      %v758 = vshrl.u32 %v757, 7
      %v759 = vsub.s32 2, %v758
      %v760 = vrot.slane %v679, %v759
      %v761 = vlaneseq
      %v762 = vshrl.u32 %v761, 7
      %v763 = vsub.s32 2, %v762
      %v764 = vrot.slane %v680, %v763
      %v765 = vmul.f32 %v743, %v748
      %v766 = vmul.f32 %v743, %v752
      %v767 = vmul.f32 %v743, %v756
      %v768 = vmul.f32 %v743, %v760
      %v769 = vmul.f32 %v743, %v764
      %770 = vset.pattern.permute.xlu0 3
      %771 = vperm.xlu0 %770, %v681
      %v772 = vpop.permute.xlu0 %771
      %v774 = vlaneseq
      %v775 = vshrl.u32 %v774, 7
      %v776 = vsub.s32 3, %v775
      %v777 = vrot.slane %v676, %v776
      %v778 = vlaneseq
      %v779 = vshrl.u32 %v778, 7
      %v780 = vsub.s32 3, %v779
      %v781 = vrot.slane %v677, %v780
      %v782 = vlaneseq
      %v783 = vshrl.u32 %v782, 7
      %v784 = vsub.s32 3, %v783
      %v785 = vrot.slane %v678, %v784
      %v786 = vlaneseq
      %v787 = vshrl.u32 %v786, 7
      %v788 = vsub.s32 3, %v787
      %v789 = vrot.slane %v679, %v788
      %v790 = vlaneseq
      %v791 = vshrl.u32 %v790, 7
      %v792 = vsub.s32 3, %v791
      %v793 = vrot.slane %v680, %v792
      %v794 = vmul.f32 %v772, %v777
      %v795 = vmul.f32 %v772, %v781
      %v796 = vmul.f32 %v772, %v785
      %v797 = vmul.f32 %v772, %v789
      %v798 = vmul.f32 %v772, %v793
      %v799 = vadd.f32 %v584, %v707
      %v800 = vadd.f32 %v585, %v708
      %v801 = vadd.f32 %v586, %v709
      %v802 = vadd.f32 %v587, %v710
      %v803 = vadd.f32 %v588, %v711
      %v804 = vadd.f32 %v613, %v736
      %v805 = vadd.f32 %v614, %v737
      %v806 = vadd.f32 %v615, %v738
      %v807 = vadd.f32 %v616, %v739
      %v808 = vadd.f32 %v617, %v740
      %v809 = vadd.f32 %v642, %v765
      %v810 = vadd.f32 %v643, %v766
      %v811 = vadd.f32 %v644, %v767
      %v812 = vadd.f32 %v645, %v768
      %v813 = vadd.f32 %v646, %v769
      %v814 = vadd.f32 %v671, %v794
      %v815 = vadd.f32 %v672, %v795
      %v816 = vadd.f32 %v673, %v796
      %v817 = vadd.f32 %v674, %v797
      %v818 = vadd.f32 %v675, %v798
      %v819 = vld [vmem:[%s246 + $0x28] sm:$0xf0]
      %v820 = vld [vmem:[%s246 + $0x30] sm:$0xf0]
      %v821 = vld [vmem:[%s246 + $0x38] sm:$0xf0]
      %v822 = vld [vmem:[%s246 + $0x40] sm:$0xf0]
      %v823 = vld [vmem:[%s246 + $0x48] sm:$0xf0]
      %v824 = vld [vmem:[%s1 + $0x20] sm:$0xf]
      %826 = vset.pattern.permute.xlu0 0
      %827 = vperm.xlu0 %826, %v824
      %v828 = vpop.permute.xlu0 %827
      %v830 = vlaneseq
      %v831 = vshrl.u32 %v830, 7
      %v832 = vsub.s32 4, %v831
      %v833 = vrot.slane %v819, %v832
      %v834 = vlaneseq
      %v835 = vshrl.u32 %v834, 7
      %v836 = vsub.s32 4, %v835
      %v837 = vrot.slane %v820, %v836
      %v838 = vlaneseq
      %v839 = vshrl.u32 %v838, 7
      %v840 = vsub.s32 4, %v839
      %v841 = vrot.slane %v821, %v840
      %v842 = vlaneseq
      %v843 = vshrl.u32 %v842, 7
      %v844 = vsub.s32 4, %v843
      %v845 = vrot.slane %v822, %v844
      %v846 = vlaneseq
      %v847 = vshrl.u32 %v846, 7
      %v848 = vsub.s32 4, %v847
      %v849 = vrot.slane %v823, %v848
      %v850 = vmul.f32 %v828, %v833
      %v851 = vmul.f32 %v828, %v837
      %v852 = vmul.f32 %v828, %v841
      %v853 = vmul.f32 %v828, %v845
      %v854 = vmul.f32 %v828, %v849
      %855 = vset.pattern.permute.xlu0 1
      %856 = vperm.xlu0 %855, %v824
      %v857 = vpop.permute.xlu0 %856
      %v859 = vlaneseq
      %v860 = vshrl.u32 %v859, 7
      %v861 = vsub.s32 5, %v860
      %v862 = vrot.slane %v819, %v861
      %v863 = vlaneseq
      %v864 = vshrl.u32 %v863, 7
      %v865 = vsub.s32 5, %v864
      %v866 = vrot.slane %v820, %v865
      %v867 = vlaneseq
      %v868 = vshrl.u32 %v867, 7
      %v869 = vsub.s32 5, %v868
      %v870 = vrot.slane %v821, %v869
      %v871 = vlaneseq
      %v872 = vshrl.u32 %v871, 7
      %v873 = vsub.s32 5, %v872
      %v874 = vrot.slane %v822, %v873
      %v875 = vlaneseq
      %v876 = vshrl.u32 %v875, 7
      %v877 = vsub.s32 5, %v876
      %v878 = vrot.slane %v823, %v877
      %v879 = vmul.f32 %v857, %v862
      %v880 = vmul.f32 %v857, %v866
      %v881 = vmul.f32 %v857, %v870
      %v882 = vmul.f32 %v857, %v874
      %v883 = vmul.f32 %v857, %v878
      %884 = vset.pattern.permute.xlu0 2
      %885 = vperm.xlu0 %884, %v824
      %v886 = vpop.permute.xlu0 %885
      %v888 = vlaneseq
      %v889 = vshrl.u32 %v888, 7
      %v890 = vsub.s32 6, %v889
      %v891 = vrot.slane %v819, %v890
      %v892 = vlaneseq
      %v893 = vshrl.u32 %v892, 7
      %v894 = vsub.s32 6, %v893
      %v895 = vrot.slane %v820, %v894
      %v896 = vlaneseq
      %v897 = vshrl.u32 %v896, 7
      %v898 = vsub.s32 6, %v897
      %v899 = vrot.slane %v821, %v898
      %v900 = vlaneseq
      %v901 = vshrl.u32 %v900, 7
      %v902 = vsub.s32 6, %v901
      %v903 = vrot.slane %v822, %v902
      %v904 = vlaneseq
      %v905 = vshrl.u32 %v904, 7
      %v906 = vsub.s32 6, %v905
      %v907 = vrot.slane %v823, %v906
      %v908 = vmul.f32 %v886, %v891
      %v909 = vmul.f32 %v886, %v895
      %v910 = vmul.f32 %v886, %v899
      %v911 = vmul.f32 %v886, %v903
      %v912 = vmul.f32 %v886, %v907
      %913 = vset.pattern.permute.xlu0 3
      %914 = vperm.xlu0 %913, %v824
      %v915 = vpop.permute.xlu0 %914
      %v917 = vlaneseq
      %v918 = vshrl.u32 %v917, 7
      %v919 = vsub.s32 7, %v918
      %v920 = vrot.slane %v819, %v919
      %v921 = vlaneseq
      %v922 = vshrl.u32 %v921, 7
      %v923 = vsub.s32 7, %v922
      %v924 = vrot.slane %v820, %v923
      %v925 = vlaneseq
      %v926 = vshrl.u32 %v925, 7
      %v927 = vsub.s32 7, %v926
      %v928 = vrot.slane %v821, %v927
      %v929 = vlaneseq
      %v930 = vshrl.u32 %v929, 7
      %v931 = vsub.s32 7, %v930
      %v932 = vrot.slane %v822, %v931
      %v933 = vlaneseq
      %v934 = vshrl.u32 %v933, 7
      %v935 = vsub.s32 7, %v934
      %v936 = vrot.slane %v823, %v935
      %v937 = vmul.f32 %v915, %v920
      %v938 = vmul.f32 %v915, %v924
      %v939 = vmul.f32 %v915, %v928
      %v940 = vmul.f32 %v915, %v932
      %v941 = vmul.f32 %v915, %v936
      %v942 = vadd.f32 %v799, %v850
      %v943 = vadd.f32 %v800, %v851
      %v944 = vadd.f32 %v801, %v852
      %v945 = vadd.f32 %v802, %v853
      %v946 = vadd.f32 %v803, %v854
      %v947 = vadd.f32 %v804, %v879
      %v948 = vadd.f32 %v805, %v880
      %v949 = vadd.f32 %v806, %v881
      %v950 = vadd.f32 %v807, %v882
      %v951 = vadd.f32 %v808, %v883
      %v952 = vadd.f32 %v809, %v908
      %v953 = vadd.f32 %v810, %v909
      %v954 = vadd.f32 %v811, %v910
      %v955 = vadd.f32 %v812, %v911
      %v956 = vadd.f32 %v813, %v912
      %v957 = vadd.f32 %v814, %v937
      %v958 = vadd.f32 %v815, %v938
      %v959 = vadd.f32 %v816, %v939
      %v960 = vadd.f32 %v817, %v940
      %v961 = vadd.f32 %v818, %v941
      %v962 = vld [vmem:[%s1 + $0x28] sm:$0xf]
      %964 = vset.pattern.permute.xlu0 0
      %965 = vperm.xlu0 %964, %v962
      %v966 = vpop.permute.xlu0 %965
      %v968 = vmul.f32 %v966, %v690
      %v969 = vmul.f32 %v966, %v694
      %v970 = vmul.f32 %v966, %v698
      %v971 = vmul.f32 %v966, %v702
      %v972 = vmul.f32 %v966, %v706
      %973 = vset.pattern.permute.xlu0 1
      %974 = vperm.xlu0 %973, %v962
      %v975 = vpop.permute.xlu0 %974
      %v977 = vmul.f32 %v975, %v719
      %v978 = vmul.f32 %v975, %v723
      %v979 = vmul.f32 %v975, %v727
      %v980 = vmul.f32 %v975, %v731
      %v981 = vmul.f32 %v975, %v735
      %982 = vset.pattern.permute.xlu0 2
      %983 = vperm.xlu0 %982, %v962
      %v984 = vpop.permute.xlu0 %983
      %v986 = vmul.f32 %v984, %v748
      %v987 = vmul.f32 %v984, %v752
      %v988 = vmul.f32 %v984, %v756
      %v989 = vmul.f32 %v984, %v760
      %v990 = vmul.f32 %v984, %v764
      %991 = vset.pattern.permute.xlu0 3
      %992 = vperm.xlu0 %991, %v962
      %v993 = vpop.permute.xlu0 %992
      %v995 = vmul.f32 %v993, %v777
      %v996 = vmul.f32 %v993, %v781
      %v997 = vmul.f32 %v993, %v785
      %v998 = vmul.f32 %v993, %v789
      %v999 = vmul.f32 %v993, %v793
      %1005 = vrot.lane.b32.xlu0 %v968, 127
      %v1006 = vpop.permute.xlu0 %1005
      %1007 = vrot.lane.b32.xlu0 %v969, 127
      %v1008 = vpop.permute.xlu0 %1007
      %1009 = vrot.lane.b32.xlu0 %v970, 127
      %v1010 = vpop.permute.xlu0 %1009
      %1011 = vrot.lane.b32.xlu0 %v971, 127
      %v1012 = vpop.permute.xlu0 %1011
      %1013 = vrot.lane.b32.xlu0 %v972, 127
      %v1014 = vpop.permute.xlu0 %1013
      %v1015 = vsel %vm574, %v1006, %v1008
      %v1016 = vsel %vm574, %v1008, %v1010
      %v1017 = vsel %vm574, %v1010, %v1012
      %v1018 = vsel %vm574, %v1012, %v1014
      %v1024 = vadd.f32 %v942, %v1015
      %v1025 = vadd.f32 %v943, %v1016
      %v1026 = vadd.f32 %v944, %v1017
      %v1027 = vadd.f32 %v945, %v1018
      %v1028 = vadd.f32 %v946, %v1014
      %1034 = vrot.lane.b32.xlu0 %v977, 127
      %v1035 = vpop.permute.xlu0 %1034
      %1036 = vrot.lane.b32.xlu0 %v978, 127
      %v1037 = vpop.permute.xlu0 %1036
      %1038 = vrot.lane.b32.xlu0 %v979, 127
      %v1039 = vpop.permute.xlu0 %1038
      %1040 = vrot.lane.b32.xlu0 %v980, 127
      %v1041 = vpop.permute.xlu0 %1040
      %1042 = vrot.lane.b32.xlu0 %v981, 127
      %v1043 = vpop.permute.xlu0 %1042
      %v1044 = vsel %vm574, %v1035, %v1037
      %v1045 = vsel %vm574, %v1037, %v1039
      %v1046 = vsel %vm574, %v1039, %v1041
      %v1047 = vsel %vm574, %v1041, %v1043
      %v1053 = vadd.f32 %v947, %v1044
      %v1054 = vadd.f32 %v948, %v1045
      %v1055 = vadd.f32 %v949, %v1046
      %v1056 = vadd.f32 %v950, %v1047
      %v1057 = vadd.f32 %v951, %v1043
      %1063 = vrot.lane.b32.xlu0 %v986, 127
      %v1064 = vpop.permute.xlu0 %1063
      %1065 = vrot.lane.b32.xlu0 %v987, 127
      %v1066 = vpop.permute.xlu0 %1065
      %1067 = vrot.lane.b32.xlu0 %v988, 127
      %v1068 = vpop.permute.xlu0 %1067
      %1069 = vrot.lane.b32.xlu0 %v989, 127
      %v1070 = vpop.permute.xlu0 %1069
      %1071 = vrot.lane.b32.xlu0 %v990, 127
      %v1072 = vpop.permute.xlu0 %1071
      %v1073 = vsel %vm574, %v1064, %v1066
      %v1074 = vsel %vm574, %v1066, %v1068
      %v1075 = vsel %vm574, %v1068, %v1070
      %v1076 = vsel %vm574, %v1070, %v1072
      %v1082 = vadd.f32 %v952, %v1073
      %v1083 = vadd.f32 %v953, %v1074
      %v1084 = vadd.f32 %v954, %v1075
      %v1085 = vadd.f32 %v955, %v1076
      %v1086 = vadd.f32 %v956, %v1072
      %1092 = vrot.lane.b32.xlu0 %v995, 127
      %v1093 = vpop.permute.xlu0 %1092
      %1094 = vrot.lane.b32.xlu0 %v996, 127
      %v1095 = vpop.permute.xlu0 %1094
      %1096 = vrot.lane.b32.xlu0 %v997, 127
      %v1097 = vpop.permute.xlu0 %1096
      %1098 = vrot.lane.b32.xlu0 %v998, 127
      %v1099 = vpop.permute.xlu0 %1098
      %1100 = vrot.lane.b32.xlu0 %v999, 127
      %v1101 = vpop.permute.xlu0 %1100
      %v1102 = vsel %vm574, %v1093, %v1095
      %v1103 = vsel %vm574, %v1095, %v1097
      %v1104 = vsel %vm574, %v1097, %v1099
      %v1105 = vsel %vm574, %v1099, %v1101
      %v1111 = vadd.f32 %v957, %v1102
      %v1112 = vadd.f32 %v958, %v1103
      %v1113 = vadd.f32 %v959, %v1104
      %v1114 = vadd.f32 %v960, %v1105
      %v1115 = vadd.f32 %v961, %v1101
      %v1116 = vld [vmem:[%s1 + $0x30] sm:$0xf]
      %1118 = vset.pattern.permute.xlu0 0
      %1119 = vperm.xlu0 %1118, %v1116
      %v1120 = vpop.permute.xlu0 %1119
      %v1122 = vmul.f32 %v1120, %v269
      %v1123 = vmul.f32 %v1120, %v273
      %v1124 = vmul.f32 %v1120, %v277
      %v1125 = vmul.f32 %v1120, %v281
      %v1126 = vmul.f32 %v1120, %v285
      %1127 = vset.pattern.permute.xlu0 1
      %1128 = vperm.xlu0 %1127, %v1116
      %v1129 = vpop.permute.xlu0 %1128
      %v1131 = vmul.f32 %v1129, %v298
      %v1132 = vmul.f32 %v1129, %v302
      %v1133 = vmul.f32 %v1129, %v306
      %v1134 = vmul.f32 %v1129, %v310
      %v1135 = vmul.f32 %v1129, %v314
      %1136 = vset.pattern.permute.xlu0 2
      %1137 = vperm.xlu0 %1136, %v1116
      %v1138 = vpop.permute.xlu0 %1137
      %v1140 = vmul.f32 %v1138, %v327
      %v1141 = vmul.f32 %v1138, %v331
      %v1142 = vmul.f32 %v1138, %v335
      %v1143 = vmul.f32 %v1138, %v339
      %v1144 = vmul.f32 %v1138, %v343
      %1145 = vset.pattern.permute.xlu0 3
      %1146 = vperm.xlu0 %1145, %v1116
      %v1147 = vpop.permute.xlu0 %1146
      %v1149 = vmul.f32 %v1147, %v356
      %v1150 = vmul.f32 %v1147, %v360
      %v1151 = vmul.f32 %v1147, %v364
      %v1152 = vmul.f32 %v1147, %v368
      %v1153 = vmul.f32 %v1147, %v372
      %1159 = vrot.lane.b32.xlu0 %v1122, 114
      %v1160 = vpop.permute.xlu0 %1159
      %1161 = vrot.lane.b32.xlu0 %v1123, 114
      %v1162 = vpop.permute.xlu0 %1161
      %1163 = vrot.lane.b32.xlu0 %v1124, 114
      %v1164 = vpop.permute.xlu0 %1163
      %1165 = vrot.lane.b32.xlu0 %v1125, 114
      %v1166 = vpop.permute.xlu0 %1165
      %1167 = vrot.lane.b32.xlu0 %v1126, 114
      %v1168 = vpop.permute.xlu0 %1167
      %vm1169 = vcmask 932864
      %v1170 = vsel %vm1169, %v1160, %v1162
      %v1171 = vsel %vm1169, %v1162, %v1164
      %v1172 = vsel %vm1169, %v1164, %v1166
      %v1173 = vsel %vm1169, %v1166, %v1168
      %v1179 = vadd.f32 %v1024, %v1170
      %v1180 = vadd.f32 %v1025, %v1171
      %v1181 = vadd.f32 %v1026, %v1172
      %v1182 = vadd.f32 %v1027, %v1173
      %v1183 = vadd.f32 %v1028, %v1168
      %1189 = vrot.lane.b32.xlu0 %v1131, 114
      %v1190 = vpop.permute.xlu0 %1189
      %1191 = vrot.lane.b32.xlu0 %v1132, 114
      %v1192 = vpop.permute.xlu0 %1191
      %1193 = vrot.lane.b32.xlu0 %v1133, 114
      %v1194 = vpop.permute.xlu0 %1193
      %1195 = vrot.lane.b32.xlu0 %v1134, 114
      %v1196 = vpop.permute.xlu0 %1195
      %1197 = vrot.lane.b32.xlu0 %v1135, 114
      %v1198 = vpop.permute.xlu0 %1197
      %v1199 = vsel %vm1169, %v1190, %v1192
      %v1200 = vsel %vm1169, %v1192, %v1194
      %v1201 = vsel %vm1169, %v1194, %v1196
      %v1202 = vsel %vm1169, %v1196, %v1198
      %v1208 = vadd.f32 %v1053, %v1199
      %v1209 = vadd.f32 %v1054, %v1200
      %v1210 = vadd.f32 %v1055, %v1201
      %v1211 = vadd.f32 %v1056, %v1202
      %v1212 = vadd.f32 %v1057, %v1198
      %1218 = vrot.lane.b32.xlu0 %v1140, 114
      %v1219 = vpop.permute.xlu0 %1218
      %1220 = vrot.lane.b32.xlu0 %v1141, 114
      %v1221 = vpop.permute.xlu0 %1220
      %1222 = vrot.lane.b32.xlu0 %v1142, 114
      %v1223 = vpop.permute.xlu0 %1222
      %1224 = vrot.lane.b32.xlu0 %v1143, 114
      %v1225 = vpop.permute.xlu0 %1224
      %1226 = vrot.lane.b32.xlu0 %v1144, 114
      %v1227 = vpop.permute.xlu0 %1226
      %v1228 = vsel %vm1169, %v1219, %v1221
      %v1229 = vsel %vm1169, %v1221, %v1223
      %v1230 = vsel %vm1169, %v1223, %v1225
      %v1231 = vsel %vm1169, %v1225, %v1227
      %v1237 = vadd.f32 %v1082, %v1228
      %v1238 = vadd.f32 %v1083, %v1229
      %v1239 = vadd.f32 %v1084, %v1230
      %v1240 = vadd.f32 %v1085, %v1231
      %v1241 = vadd.f32 %v1086, %v1227
      %1247 = vrot.lane.b32.xlu0 %v1149, 114
      %v1248 = vpop.permute.xlu0 %1247
      %1249 = vrot.lane.b32.xlu0 %v1150, 114
      %v1250 = vpop.permute.xlu0 %1249
      %1251 = vrot.lane.b32.xlu0 %v1151, 114
      %v1252 = vpop.permute.xlu0 %1251
      %1253 = vrot.lane.b32.xlu0 %v1152, 114
      %v1254 = vpop.permute.xlu0 %1253
      %1255 = vrot.lane.b32.xlu0 %v1153, 114
      %v1256 = vpop.permute.xlu0 %1255
      %v1257 = vsel %vm1169, %v1248, %v1250
      %v1258 = vsel %vm1169, %v1250, %v1252
      %v1259 = vsel %vm1169, %v1252, %v1254
      %v1260 = vsel %vm1169, %v1254, %v1256
      %v1266 = vadd.f32 %v1111, %v1257
      %v1267 = vadd.f32 %v1112, %v1258
      %v1268 = vadd.f32 %v1113, %v1259
      %v1269 = vadd.f32 %v1114, %v1260
      %v1270 = vadd.f32 %v1115, %v1256
      %v1271 = vld [vmem:[%s1 + $0x38] sm:$0xf]
      %1273 = vset.pattern.permute.xlu0 0
      %1274 = vperm.xlu0 %1273, %v1271
      %v1275 = vpop.permute.xlu0 %1274
      %v1277 = vmul.f32 %v1275, %v392
      %v1278 = vmul.f32 %v1275, %v396
      %v1279 = vmul.f32 %v1275, %v400
      %v1280 = vmul.f32 %v1275, %v404
      %v1281 = vmul.f32 %v1275, %v408
      %1282 = vset.pattern.permute.xlu0 1
      %1283 = vperm.xlu0 %1282, %v1271
      %v1284 = vpop.permute.xlu0 %1283
      %v1286 = vmul.f32 %v1284, %v421
      %v1287 = vmul.f32 %v1284, %v425
      %v1288 = vmul.f32 %v1284, %v429
      %v1289 = vmul.f32 %v1284, %v433
      %v1290 = vmul.f32 %v1284, %v437
      %1291 = vset.pattern.permute.xlu0 2
      %1292 = vperm.xlu0 %1291, %v1271
      %v1293 = vpop.permute.xlu0 %1292
      %v1295 = vmul.f32 %v1293, %v450
      %v1296 = vmul.f32 %v1293, %v454
      %v1297 = vmul.f32 %v1293, %v458
      %v1298 = vmul.f32 %v1293, %v462
      %v1299 = vmul.f32 %v1293, %v466
      %1300 = vset.pattern.permute.xlu0 3
      %1301 = vperm.xlu0 %1300, %v1271
      %v1302 = vpop.permute.xlu0 %1301
      %v1304 = vmul.f32 %v1302, %v479
      %v1305 = vmul.f32 %v1302, %v483
      %v1306 = vmul.f32 %v1302, %v487
      %v1307 = vmul.f32 %v1302, %v491
      %v1308 = vmul.f32 %v1302, %v495
      %1314 = vrot.lane.b32.xlu0 %v1277, 114
      %v1315 = vpop.permute.xlu0 %1314
      %1316 = vrot.lane.b32.xlu0 %v1278, 114
      %v1317 = vpop.permute.xlu0 %1316
      %1318 = vrot.lane.b32.xlu0 %v1279, 114
      %v1319 = vpop.permute.xlu0 %1318
      %1320 = vrot.lane.b32.xlu0 %v1280, 114
      %v1321 = vpop.permute.xlu0 %1320
      %1322 = vrot.lane.b32.xlu0 %v1281, 114
      %v1323 = vpop.permute.xlu0 %1322
      %v1324 = vsel %vm1169, %v1315, %v1317
      %v1325 = vsel %vm1169, %v1317, %v1319
      %v1326 = vsel %vm1169, %v1319, %v1321
      %v1327 = vsel %vm1169, %v1321, %v1323
      %v1333 = vadd.f32 %v1179, %v1324
      %v1334 = vadd.f32 %v1180, %v1325
      %v1335 = vadd.f32 %v1181, %v1326
      %v1336 = vadd.f32 %v1182, %v1327
      %v1337 = vadd.f32 %v1183, %v1323
      %1343 = vrot.lane.b32.xlu0 %v1286, 114
      %v1344 = vpop.permute.xlu0 %1343
      %1345 = vrot.lane.b32.xlu0 %v1287, 114
      %v1346 = vpop.permute.xlu0 %1345
      %1347 = vrot.lane.b32.xlu0 %v1288, 114
      %v1348 = vpop.permute.xlu0 %1347
      %1349 = vrot.lane.b32.xlu0 %v1289, 114
      %v1350 = vpop.permute.xlu0 %1349
      %1351 = vrot.lane.b32.xlu0 %v1290, 114
      %v1352 = vpop.permute.xlu0 %1351
      %v1353 = vsel %vm1169, %v1344, %v1346
      %v1354 = vsel %vm1169, %v1346, %v1348
      %v1355 = vsel %vm1169, %v1348, %v1350
      %v1356 = vsel %vm1169, %v1350, %v1352
      %v1362 = vadd.f32 %v1208, %v1353
      %v1363 = vadd.f32 %v1209, %v1354
      %v1364 = vadd.f32 %v1210, %v1355
      %v1365 = vadd.f32 %v1211, %v1356
      %v1366 = vadd.f32 %v1212, %v1352
      %1372 = vrot.lane.b32.xlu0 %v1295, 114
      %v1373 = vpop.permute.xlu0 %1372
      %1374 = vrot.lane.b32.xlu0 %v1296, 114
      %v1375 = vpop.permute.xlu0 %1374
      %1376 = vrot.lane.b32.xlu0 %v1297, 114
      %v1377 = vpop.permute.xlu0 %1376
      %1378 = vrot.lane.b32.xlu0 %v1298, 114
      %v1379 = vpop.permute.xlu0 %1378
      %1380 = vrot.lane.b32.xlu0 %v1299, 114
      %v1381 = vpop.permute.xlu0 %1380
      %v1382 = vsel %vm1169, %v1373, %v1375
      %v1383 = vsel %vm1169, %v1375, %v1377
      %v1384 = vsel %vm1169, %v1377, %v1379
      %v1385 = vsel %vm1169, %v1379, %v1381
      %v1391 = vadd.f32 %v1237, %v1382
      %v1392 = vadd.f32 %v1238, %v1383
      %v1393 = vadd.f32 %v1239, %v1384
      %v1394 = vadd.f32 %v1240, %v1385
      %v1395 = vadd.f32 %v1241, %v1381
      %1401 = vrot.lane.b32.xlu0 %v1304, 114
      %v1402 = vpop.permute.xlu0 %1401
      %1403 = vrot.lane.b32.xlu0 %v1305, 114
      %v1404 = vpop.permute.xlu0 %1403
      %1405 = vrot.lane.b32.xlu0 %v1306, 114
      %v1406 = vpop.permute.xlu0 %1405
      %1407 = vrot.lane.b32.xlu0 %v1307, 114
      %v1408 = vpop.permute.xlu0 %1407
      %1409 = vrot.lane.b32.xlu0 %v1308, 114
      %v1410 = vpop.permute.xlu0 %1409
      %v1411 = vsel %vm1169, %v1402, %v1404
      %v1412 = vsel %vm1169, %v1404, %v1406
      %v1413 = vsel %vm1169, %v1406, %v1408
      %v1414 = vsel %vm1169, %v1408, %v1410
      %v1420 = vadd.f32 %v1266, %v1411
      %v1421 = vadd.f32 %v1267, %v1412
      %v1422 = vadd.f32 %v1268, %v1413
      %v1423 = vadd.f32 %v1269, %v1414
      %v1424 = vadd.f32 %v1270, %v1410
      %v1425 = vld [vmem:[%s1 + $0x40] sm:$0xf]
      %1427 = vset.pattern.permute.xlu0 0
      %1428 = vperm.xlu0 %1427, %v1425
      %v1429 = vpop.permute.xlu0 %1428
      %v1431 = vmul.f32 %v1429, %v269
      %v1432 = vmul.f32 %v1429, %v273
      %v1433 = vmul.f32 %v1429, %v277
      %v1434 = vmul.f32 %v1429, %v281
      %v1435 = vmul.f32 %v1429, %v285
      %1436 = vset.pattern.permute.xlu0 1
      %1437 = vperm.xlu0 %1436, %v1425
      %v1438 = vpop.permute.xlu0 %1437
      %v1440 = vmul.f32 %v1438, %v298
      %v1441 = vmul.f32 %v1438, %v302
      %v1442 = vmul.f32 %v1438, %v306
      %v1443 = vmul.f32 %v1438, %v310
      %v1444 = vmul.f32 %v1438, %v314
      %1445 = vset.pattern.permute.xlu0 2
      %1446 = vperm.xlu0 %1445, %v1425
      %v1447 = vpop.permute.xlu0 %1446
      %v1449 = vmul.f32 %v1447, %v327
      %v1450 = vmul.f32 %v1447, %v331
      %v1451 = vmul.f32 %v1447, %v335
      %v1452 = vmul.f32 %v1447, %v339
      %v1453 = vmul.f32 %v1447, %v343
      %1454 = vset.pattern.permute.xlu0 3
      %1455 = vperm.xlu0 %1454, %v1425
      %v1456 = vpop.permute.xlu0 %1455
      %v1458 = vmul.f32 %v1456, %v356
      %v1459 = vmul.f32 %v1456, %v360
      %v1460 = vmul.f32 %v1456, %v364
      %v1461 = vmul.f32 %v1456, %v368
      %v1462 = vmul.f32 %v1456, %v372
      %1468 = vrot.lane.b32.xlu0 %v1431, 113
      %v1469 = vpop.permute.xlu0 %1468
      %1470 = vrot.lane.b32.xlu0 %v1432, 113
      %v1471 = vpop.permute.xlu0 %1470
      %1472 = vrot.lane.b32.xlu0 %v1433, 113
      %v1473 = vpop.permute.xlu0 %1472
      %1474 = vrot.lane.b32.xlu0 %v1434, 113
      %v1475 = vpop.permute.xlu0 %1474
      %1476 = vrot.lane.b32.xlu0 %v1435, 113
      %v1477 = vpop.permute.xlu0 %1476
      %vm1478 = vcmask 924672
      %v1479 = vsel %vm1478, %v1469, %v1471
      %v1480 = vsel %vm1478, %v1471, %v1473
      %v1481 = vsel %vm1478, %v1473, %v1475
      %v1482 = vsel %vm1478, %v1475, %v1477
      %v1488 = vadd.f32 %v1333, %v1479
      %v1489 = vadd.f32 %v1334, %v1480
      %v1490 = vadd.f32 %v1335, %v1481
      %v1491 = vadd.f32 %v1336, %v1482
      %v1492 = vadd.f32 %v1337, %v1477
      %1498 = vrot.lane.b32.xlu0 %v1440, 113
      %v1499 = vpop.permute.xlu0 %1498
      %1500 = vrot.lane.b32.xlu0 %v1441, 113
      %v1501 = vpop.permute.xlu0 %1500
      %1502 = vrot.lane.b32.xlu0 %v1442, 113
      %v1503 = vpop.permute.xlu0 %1502
      %1504 = vrot.lane.b32.xlu0 %v1443, 113
      %v1505 = vpop.permute.xlu0 %1504
      %1506 = vrot.lane.b32.xlu0 %v1444, 113
      %v1507 = vpop.permute.xlu0 %1506
      %v1508 = vsel %vm1478, %v1499, %v1501
      %v1509 = vsel %vm1478, %v1501, %v1503
      %v1510 = vsel %vm1478, %v1503, %v1505
      %v1511 = vsel %vm1478, %v1505, %v1507
      %v1517 = vadd.f32 %v1362, %v1508
      %v1518 = vadd.f32 %v1363, %v1509
      %v1519 = vadd.f32 %v1364, %v1510
      %v1520 = vadd.f32 %v1365, %v1511
      %v1521 = vadd.f32 %v1366, %v1507
      %1527 = vrot.lane.b32.xlu0 %v1449, 113
      %v1528 = vpop.permute.xlu0 %1527
      %1529 = vrot.lane.b32.xlu0 %v1450, 113
      %v1530 = vpop.permute.xlu0 %1529
      %1531 = vrot.lane.b32.xlu0 %v1451, 113
      %v1532 = vpop.permute.xlu0 %1531
      %1533 = vrot.lane.b32.xlu0 %v1452, 113
      %v1534 = vpop.permute.xlu0 %1533
      %1535 = vrot.lane.b32.xlu0 %v1453, 113
      %v1536 = vpop.permute.xlu0 %1535
      %v1537 = vsel %vm1478, %v1528, %v1530
      %v1538 = vsel %vm1478, %v1530, %v1532
      %v1539 = vsel %vm1478, %v1532, %v1534
      %v1540 = vsel %vm1478, %v1534, %v1536
      %v1546 = vadd.f32 %v1391, %v1537
      %v1547 = vadd.f32 %v1392, %v1538
      %v1548 = vadd.f32 %v1393, %v1539
      %v1549 = vadd.f32 %v1394, %v1540
      %v1550 = vadd.f32 %v1395, %v1536
      %1556 = vrot.lane.b32.xlu0 %v1458, 113
      %v1557 = vpop.permute.xlu0 %1556
      %1558 = vrot.lane.b32.xlu0 %v1459, 113
      %v1559 = vpop.permute.xlu0 %1558
      %1560 = vrot.lane.b32.xlu0 %v1460, 113
      %v1561 = vpop.permute.xlu0 %1560
      %1562 = vrot.lane.b32.xlu0 %v1461, 113
      %v1563 = vpop.permute.xlu0 %1562
      %1564 = vrot.lane.b32.xlu0 %v1462, 113
      %v1565 = vpop.permute.xlu0 %1564
      %v1566 = vsel %vm1478, %v1557, %v1559
      %v1567 = vsel %vm1478, %v1559, %v1561
      %v1568 = vsel %vm1478, %v1561, %v1563
      %v1569 = vsel %vm1478, %v1563, %v1565
      %v1575 = vadd.f32 %v1420, %v1566
      %v1576 = vadd.f32 %v1421, %v1567
      %v1577 = vadd.f32 %v1422, %v1568
      %v1578 = vadd.f32 %v1423, %v1569
      %v1579 = vadd.f32 %v1424, %v1565
      %v1580 = vadd.f32 %v1488, %v1517
      %v1581 = vadd.f32 %v1489, %v1518
      %v1582 = vadd.f32 %v1490, %v1519
      %v1583 = vadd.f32 %v1491, %v1520
      %v1584 = vadd.f32 %v1492, %v1521
      %v1585 = vadd.f32 %v1546, %v1575
      %v1586 = vadd.f32 %v1547, %v1576
      %v1587 = vadd.f32 %v1548, %v1577
      %v1588 = vadd.f32 %v1549, %v1578
      %v1589 = vadd.f32 %v1550, %v1579
      %v1590 = vadd.f32 %v1580, %v1585
      %v1591 = vadd.f32 %v1581, %v1586
      %v1592 = vadd.f32 %v1582, %v1587
      %v1593 = vadd.f32 %v1583, %v1588
      %v1594 = vadd.f32 %v1584, %v1589
      %1596 = vset.pattern.permute.xlu0 0
      %1597 = vperm.xlu0 %1596, %v252
      %v1598 = vpop.permute.xlu0 %1597
      %v1600 = vadd.f32 %v1590, %v1598
      %v1601 = vadd.f32 %v1591, %v1598
      %v1602 = vadd.f32 %v1592, %v1598
      %v1603 = vadd.f32 %v1593, %v1598
      %v1604 = vadd.f32 %v1594, %v1598
      %v1605 = vmul.f32 %v1600, 0.5
      %v1606 = vmul.f32 %v1601, 0.5
      %v1607 = vmul.f32 %v1602, 0.5
      %v1608 = vmul.f32 %v1603, 0.5
      %v1609 = vmul.f32 %v1604, 0.5
      %v1610 = vmul.f32 %v1600, 0.70710677
      %v1611 = vmul.f32 %v1601, 0.70710677
      %v1612 = vmul.f32 %v1602, 0.70710677
      %v1613 = vmul.f32 %v1603, 0.70710677
      %v1614 = vmul.f32 %v1604, 0.70710677
      %v1615 = vmax.f32 %v1610, -4.0
      %v1616 = vmax.f32 %v1611, -4.0
      %v1617 = vmax.f32 %v1612, -4.0
      %v1618 = vmax.f32 %v1613, -4.0
      %v1619 = vmax.f32 %v1614, -4.0
      %v1620 = vmin.f32 %v1615, 4.0
      %v1621 = vmin.f32 %v1616, 4.0
      %v1622 = vmin.f32 %v1617, 4.0
      %v1623 = vmin.f32 %v1618, 4.0
      %v1624 = vmin.f32 %v1619, 4.0
      %v1625 = vmul.f32 %v1620, %v1620
      %v1626 = vmul.f32 %v1621, %v1621
      %v1627 = vmul.f32 %v1622, %v1622
      %v1628 = vmul.f32 %v1623, %v1623
      %v1629 = vmul.f32 %v1624, %v1624
      %v1630 = vmul.f32 %v1625, 0.00022905065
      %v1631 = vmul.f32 %v1626, 0.00022905065
      %v1632 = vmul.f32 %v1627, 0.00022905065
      %v1633 = vmul.f32 %v1628, 0.00022905065
      %v1634 = vmul.f32 %v1629, 0.00022905065
      %v1635 = vadd.f32 %v1630, 0.003408291
      %v1636 = vadd.f32 %v1631, 0.003408291
      %v1637 = vadd.f32 %v1632, 0.003408291
      %v1638 = vadd.f32 %v1633, 0.003408291
      %v1639 = vadd.f32 %v1634, 0.003408291
      %v1640 = vmul.f32 %v1635, %v1625
      %v1641 = vmul.f32 %v1636, %v1626
      %v1642 = vmul.f32 %v1637, %v1627
      %v1643 = vmul.f32 %v1638, %v1628
      %v1644 = vmul.f32 %v1639, %v1629
      %v1645 = vadd.f32 %v1640, 0.050955694
      %v1646 = vadd.f32 %v1641, 0.050955694
      %v1647 = vadd.f32 %v1642, 0.050955694
      %v1648 = vadd.f32 %v1643, 0.050955694
      %v1649 = vadd.f32 %v1644, 0.050955694
      %v1650 = vmul.f32 %v1645, %v1625
      %v1651 = vmul.f32 %v1646, %v1626
      %v1652 = vmul.f32 %v1647, %v1627
      %v1653 = vmul.f32 %v1648, %v1628
      %v1654 = vmul.f32 %v1649, %v1629
      %v1655 = vadd.f32 %v1650, 0.18520832
      %v1656 = vadd.f32 %v1651, 0.18520832
      %v1657 = vadd.f32 %v1652, 0.18520832
      %v1658 = vadd.f32 %v1653, 0.18520832
      %v1659 = vadd.f32 %v1654, 0.18520832
      %v1660 = vmul.f32 %v1655, %v1625
      %v1661 = vmul.f32 %v1656, %v1626
      %v1662 = vmul.f32 %v1657, %v1627
      %v1663 = vmul.f32 %v1658, %v1628
      %v1664 = vmul.f32 %v1659, %v1629
      %v1665 = vadd.f32 %v1660, 1.1283791
      %v1666 = vadd.f32 %v1661, 1.1283791
      %v1667 = vadd.f32 %v1662, 1.1283791
      %v1668 = vadd.f32 %v1663, 1.1283791
      %v1669 = vadd.f32 %v1664, 1.1283791
      %v1670 = vmul.f32 %v1625, -1.1791603e-07
      %v1671 = vmul.f32 %v1626, -1.1791603e-07
      %v1672 = vmul.f32 %v1627, -1.1791603e-07
      %v1673 = vmul.f32 %v1628, -1.1791603e-07
      %v1674 = vmul.f32 %v1629, -1.1791603e-07
      %v1675 = vadd.f32 %v1670, 2.3547966e-05
      %v1676 = vadd.f32 %v1671, 2.3547966e-05
      %v1677 = vadd.f32 %v1672, 2.3547966e-05
      %v1678 = vadd.f32 %v1673, 2.3547966e-05
      %v1679 = vadd.f32 %v1674, 2.3547966e-05
      %v1680 = vmul.f32 %v1675, %v1625
      %v1681 = vmul.f32 %v1676, %v1626
      %v1682 = vmul.f32 %v1677, %v1627
      %v1683 = vmul.f32 %v1678, %v1628
      %v1684 = vmul.f32 %v1679, %v1629
      %v1685 = vadd.f32 %v1680, 0.0010179626
      %v1686 = vadd.f32 %v1681, 0.0010179626
      %v1687 = vadd.f32 %v1682, 0.0010179626
      %v1688 = vadd.f32 %v1683, 0.0010179626
      %v1689 = vadd.f32 %v1684, 0.0010179626
      %v1690 = vmul.f32 %v1685, %v1625
      %v1691 = vmul.f32 %v1686, %v1626
      %v1692 = vmul.f32 %v1687, %v1627
      %v1693 = vmul.f32 %v1688, %v1628
      %v1694 = vmul.f32 %v1689, %v1629
      %v1695 = vadd.f32 %v1690, 0.01407047
      %v1696 = vadd.f32 %v1691, 0.01407047
      %v1697 = vadd.f32 %v1692, 0.01407047
      %v1698 = vadd.f32 %v1693, 0.01407047
      %v1699 = vadd.f32 %v1694, 0.01407047
      %v1700 = vmul.f32 %v1695, %v1625
      %v1701 = vmul.f32 %v1696, %v1626
      %v1702 = vmul.f32 %v1697, %v1627
      %v1703 = vmul.f32 %v1698, %v1628
      %v1704 = vmul.f32 %v1699, %v1629
      %v1705 = vadd.f32 %v1700, 0.11098505
      %v1706 = vadd.f32 %v1701, 0.11098505
      %v1707 = vadd.f32 %v1702, 0.11098505
      %v1708 = vadd.f32 %v1703, 0.11098505
      %v1709 = vadd.f32 %v1704, 0.11098505
      %v1710 = vmul.f32 %v1705, %v1625
      %v1711 = vmul.f32 %v1706, %v1626
      %v1712 = vmul.f32 %v1707, %v1627
      %v1713 = vmul.f32 %v1708, %v1628
      %v1714 = vmul.f32 %v1709, %v1629
      %v1715 = vadd.f32 %v1710, 0.49746925
      %v1716 = vadd.f32 %v1711, 0.49746925
      %v1717 = vadd.f32 %v1712, 0.49746925
      %v1718 = vadd.f32 %v1713, 0.49746925
      %v1719 = vadd.f32 %v1714, 0.49746925
      %v1720 = vmul.f32 %v1715, %v1625
      %v1721 = vmul.f32 %v1716, %v1626
      %v1722 = vmul.f32 %v1717, %v1627
      %v1723 = vmul.f32 %v1718, %v1628
      %v1724 = vmul.f32 %v1719, %v1629
      %v1725 = vadd.f32 %v1720, 1.0
      %v1726 = vadd.f32 %v1721, 1.0
      %v1727 = vadd.f32 %v1722, 1.0
      %v1728 = vadd.f32 %v1723, 1.0
      %v1729 = vadd.f32 %v1724, 1.0
      %v1730 = vrcp.pop %v1725
      %v1731 = vrcp.pop %v1726
      %v1732 = vrcp.pop %v1727
      %v1733 = vrcp.pop %v1728
      %v1734 = vrcp.pop %v1729
      %v1735 = vmul.f32 %v1725, %v1730
      %v1736 = vmul.f32 %v1726, %v1731
      %v1737 = vmul.f32 %v1727, %v1732
      %v1738 = vmul.f32 %v1728, %v1733
      %v1739 = vmul.f32 %v1729, %v1734
      %v1740 = vsub.f32 2.0, %v1735
      %v1741 = vsub.f32 2.0, %v1736
      %v1742 = vsub.f32 2.0, %v1737
      %v1743 = vsub.f32 2.0, %v1738
      %v1744 = vsub.f32 2.0, %v1739
      %v1745 = vmul.f32 %v1730, %v1740
      %v1746 = vmul.f32 %v1731, %v1741
      %v1747 = vmul.f32 %v1732, %v1742
      %v1748 = vmul.f32 %v1733, %v1743
      %v1749 = vmul.f32 %v1734, %v1744
      %v1750 = vmul.f32 %v1620, %v1665
      %v1751 = vmul.f32 %v1621, %v1666
      %v1752 = vmul.f32 %v1622, %v1667
      %v1753 = vmul.f32 %v1623, %v1668
      %v1754 = vmul.f32 %v1624, %v1669
      %v1755 = vmul.f32 %v1750, %v1745
      %v1756 = vmul.f32 %v1751, %v1746
      %v1757 = vmul.f32 %v1752, %v1747
      %v1758 = vmul.f32 %v1753, %v1748
      %v1759 = vmul.f32 %v1754, %v1749
      %v1760 = vadd.f32 %v1755, 1.0
      %v1761 = vadd.f32 %v1756, 1.0
      %v1762 = vadd.f32 %v1757, 1.0
      %v1763 = vadd.f32 %v1758, 1.0
      %v1764 = vadd.f32 %v1759, 1.0
      %v1765 = vmul.f32 %v1605, %v1760
      %v1766 = vmul.f32 %v1606, %v1761
      %v1767 = vmul.f32 %v1607, %v1762
      %v1768 = vmul.f32 %v1608, %v1763
      %v1769 = vmul.f32 %v1609, %v1764
      %v1770 = vmul.f32 %v1765, 0.5
      %v1771 = vmul.f32 %v1766, 0.5
      %v1772 = vmul.f32 %v1767, 0.5
      %v1773 = vmul.f32 %v1768, 0.5
      %v1774 = vmul.f32 %v1769, 0.5
      %v1775 = vmul.f32 %v1765, 0.70710677
      %v1776 = vmul.f32 %v1766, 0.70710677
      %v1777 = vmul.f32 %v1767, 0.70710677
      %v1778 = vmul.f32 %v1768, 0.70710677
      %v1779 = vmul.f32 %v1769, 0.70710677
      %v1780 = vmax.f32 %v1775, -4.0
      %v1781 = vmax.f32 %v1776, -4.0
      %v1782 = vmax.f32 %v1777, -4.0
      %v1783 = vmax.f32 %v1778, -4.0
      %v1784 = vmax.f32 %v1779, -4.0
      %v1785 = vmin.f32 %v1780, 4.0
      %v1786 = vmin.f32 %v1781, 4.0
      %v1787 = vmin.f32 %v1782, 4.0
      %v1788 = vmin.f32 %v1783, 4.0
      %v1789 = vmin.f32 %v1784, 4.0
      %v1790 = vmul.f32 %v1785, %v1785
      %v1791 = vmul.f32 %v1786, %v1786
      %v1792 = vmul.f32 %v1787, %v1787
      %v1793 = vmul.f32 %v1788, %v1788
      %v1794 = vmul.f32 %v1789, %v1789
      %v1795 = vmul.f32 %v1790, 0.00022905065
      %v1796 = vmul.f32 %v1791, 0.00022905065
      %v1797 = vmul.f32 %v1792, 0.00022905065
      %v1798 = vmul.f32 %v1793, 0.00022905065
      %v1799 = vmul.f32 %v1794, 0.00022905065
      %v1800 = vadd.f32 %v1795, 0.003408291
      %v1801 = vadd.f32 %v1796, 0.003408291
      %v1802 = vadd.f32 %v1797, 0.003408291
      %v1803 = vadd.f32 %v1798, 0.003408291
      %v1804 = vadd.f32 %v1799, 0.003408291
      %v1805 = vmul.f32 %v1800, %v1790
      %v1806 = vmul.f32 %v1801, %v1791
      %v1807 = vmul.f32 %v1802, %v1792
      %v1808 = vmul.f32 %v1803, %v1793
      %v1809 = vmul.f32 %v1804, %v1794
      %v1810 = vadd.f32 %v1805, 0.050955694
      %v1811 = vadd.f32 %v1806, 0.050955694
      %v1812 = vadd.f32 %v1807, 0.050955694
      %v1813 = vadd.f32 %v1808, 0.050955694
      %v1814 = vadd.f32 %v1809, 0.050955694
      %v1815 = vmul.f32 %v1810, %v1790
      %v1816 = vmul.f32 %v1811, %v1791
      %v1817 = vmul.f32 %v1812, %v1792
      %v1818 = vmul.f32 %v1813, %v1793
      %v1819 = vmul.f32 %v1814, %v1794
      %v1820 = vadd.f32 %v1815, 0.18520832
      %v1821 = vadd.f32 %v1816, 0.18520832
      %v1822 = vadd.f32 %v1817, 0.18520832
      %v1823 = vadd.f32 %v1818, 0.18520832
      %v1824 = vadd.f32 %v1819, 0.18520832
      %v1825 = vmul.f32 %v1820, %v1790
      %v1826 = vmul.f32 %v1821, %v1791
      %v1827 = vmul.f32 %v1822, %v1792
      %v1828 = vmul.f32 %v1823, %v1793
      %v1829 = vmul.f32 %v1824, %v1794
      %v1830 = vadd.f32 %v1825, 1.1283791
      %v1831 = vadd.f32 %v1826, 1.1283791
      %v1832 = vadd.f32 %v1827, 1.1283791
      %v1833 = vadd.f32 %v1828, 1.1283791
      %v1834 = vadd.f32 %v1829, 1.1283791
      %v1835 = vmul.f32 %v1790, -1.1791603e-07
      %v1836 = vmul.f32 %v1791, -1.1791603e-07
      %v1837 = vmul.f32 %v1792, -1.1791603e-07
      %v1838 = vmul.f32 %v1793, -1.1791603e-07
      %v1839 = vmul.f32 %v1794, -1.1791603e-07
      %v1840 = vadd.f32 %v1835, 2.3547966e-05
      %v1841 = vadd.f32 %v1836, 2.3547966e-05
      %v1842 = vadd.f32 %v1837, 2.3547966e-05
      %v1843 = vadd.f32 %v1838, 2.3547966e-05
      %v1844 = vadd.f32 %v1839, 2.3547966e-05
      %v1845 = vmul.f32 %v1840, %v1790
      %v1846 = vmul.f32 %v1841, %v1791
      %v1847 = vmul.f32 %v1842, %v1792
      %v1848 = vmul.f32 %v1843, %v1793
      %v1849 = vmul.f32 %v1844, %v1794
      %v1850 = vadd.f32 %v1845, 0.0010179626
      %v1851 = vadd.f32 %v1846, 0.0010179626
      %v1852 = vadd.f32 %v1847, 0.0010179626
      %v1853 = vadd.f32 %v1848, 0.0010179626
      %v1854 = vadd.f32 %v1849, 0.0010179626
      %v1855 = vmul.f32 %v1850, %v1790
      %v1856 = vmul.f32 %v1851, %v1791
      %v1857 = vmul.f32 %v1852, %v1792
      %v1858 = vmul.f32 %v1853, %v1793
      %v1859 = vmul.f32 %v1854, %v1794
      %v1860 = vadd.f32 %v1855, 0.01407047
      %v1861 = vadd.f32 %v1856, 0.01407047
      %v1862 = vadd.f32 %v1857, 0.01407047
      %v1863 = vadd.f32 %v1858, 0.01407047
      %v1864 = vadd.f32 %v1859, 0.01407047
      %v1865 = vmul.f32 %v1860, %v1790
      %v1866 = vmul.f32 %v1861, %v1791
      %v1867 = vmul.f32 %v1862, %v1792
      %v1868 = vmul.f32 %v1863, %v1793
      %v1869 = vmul.f32 %v1864, %v1794
      %v1870 = vadd.f32 %v1865, 0.11098505
      %v1871 = vadd.f32 %v1866, 0.11098505
      %v1872 = vadd.f32 %v1867, 0.11098505
      %v1873 = vadd.f32 %v1868, 0.11098505
      %v1874 = vadd.f32 %v1869, 0.11098505
      %v1875 = vmul.f32 %v1870, %v1790
      %v1876 = vmul.f32 %v1871, %v1791
      %v1877 = vmul.f32 %v1872, %v1792
      %v1878 = vmul.f32 %v1873, %v1793
      %v1879 = vmul.f32 %v1874, %v1794
      %v1880 = vadd.f32 %v1875, 0.49746925
      %v1881 = vadd.f32 %v1876, 0.49746925
      %v1882 = vadd.f32 %v1877, 0.49746925
      %v1883 = vadd.f32 %v1878, 0.49746925
      %v1884 = vadd.f32 %v1879, 0.49746925
      %v1885 = vmul.f32 %v1880, %v1790
      %v1886 = vmul.f32 %v1881, %v1791
      %v1887 = vmul.f32 %v1882, %v1792
      %v1888 = vmul.f32 %v1883, %v1793
      %v1889 = vmul.f32 %v1884, %v1794
      %v1890 = vadd.f32 %v1885, 1.0
      %v1891 = vadd.f32 %v1886, 1.0
      %v1892 = vadd.f32 %v1887, 1.0
      %v1893 = vadd.f32 %v1888, 1.0
      %v1894 = vadd.f32 %v1889, 1.0
      %v1895 = vrcp.pop %v1890
      %v1896 = vrcp.pop %v1891
      %v1897 = vrcp.pop %v1892
      %v1898 = vrcp.pop %v1893
      %v1899 = vrcp.pop %v1894
      %v1900 = vmul.f32 %v1890, %v1895
      %v1901 = vmul.f32 %v1891, %v1896
      %v1902 = vmul.f32 %v1892, %v1897
      %v1903 = vmul.f32 %v1893, %v1898
      %v1904 = vmul.f32 %v1894, %v1899
      %v1905 = vsub.f32 2.0, %v1900
      %v1906 = vsub.f32 2.0, %v1901
      %v1907 = vsub.f32 2.0, %v1902
      %v1908 = vsub.f32 2.0, %v1903
      %v1909 = vsub.f32 2.0, %v1904
      %v1910 = vmul.f32 %v1895, %v1905
      %v1911 = vmul.f32 %v1896, %v1906
      %v1912 = vmul.f32 %v1897, %v1907
      %v1913 = vmul.f32 %v1898, %v1908
      %v1914 = vmul.f32 %v1899, %v1909
      %v1915 = vmul.f32 %v1785, %v1830
      %v1916 = vmul.f32 %v1786, %v1831
      %v1917 = vmul.f32 %v1787, %v1832
      %v1918 = vmul.f32 %v1788, %v1833
      %v1919 = vmul.f32 %v1789, %v1834
      %v1920 = vmul.f32 %v1915, %v1910
      %v1921 = vmul.f32 %v1916, %v1911
      %v1922 = vmul.f32 %v1917, %v1912
      %v1923 = vmul.f32 %v1918, %v1913
      %v1924 = vmul.f32 %v1919, %v1914
      %v1925 = vadd.f32 %v1920, 1.0
      %v1926 = vadd.f32 %v1921, 1.0
      %v1927 = vadd.f32 %v1922, 1.0
      %v1928 = vadd.f32 %v1923, 1.0
      %v1929 = vadd.f32 %v1924, 1.0
      %v1930 = vmul.f32 %v1770, %v1925
      %v1931 = vmul.f32 %v1771, %v1926
      %v1932 = vmul.f32 %v1772, %v1927
      %v1933 = vmul.f32 %v1773, %v1928
      %v1934 = vmul.f32 %v1774, %v1929
      %v1936 = vlaneseq
      %v1937 = vshrl.u32 %v1936, 7
      %v1938 = vsub.s32 0, %v1937
      %v1939 = vrot.slane %v254, %v1938
      %v1940 = vlaneseq
      %v1941 = vshrl.u32 %v1940, 7
      %v1942 = vsub.s32 1, %v1941
      %v1943 = vrot.slane %v254, %v1942
      %v1944 = vlaneseq
      %v1945 = vshrl.u32 %v1944, 7
      %v1946 = vsub.s32 2, %v1945
      %v1947 = vrot.slane %v254, %v1946
      %v1948 = vlaneseq
      %v1949 = vshrl.u32 %v1948, 7
      %v1950 = vsub.s32 3, %v1949
      %v1951 = vrot.slane %v254, %v1950
      %v1952 = vlaneseq
      %v1953 = vshrl.u32 %v1952, 7
      %v1954 = vsub.s32 4, %v1953
      %v1955 = vrot.slane %v254, %v1954
      %v1961 = vmul.f32 %v1930, %v1939
      %v1962 = vmul.f32 %v1931, %v1943
      %v1963 = vmul.f32 %v1932, %v1947
      %v1964 = vmul.f32 %v1933, %v1951
      %v1965 = vmul.f32 %v1934, %v1955
      %v1966 = vld [vmem:[%s3] sm:$0x1f]
      %1968 = vset.pattern.permute.xlu0 0
      %1969 = vperm.xlu0 %1968, %v1966
      %v1970 = vpop.permute.xlu0 %1969
      %v1972 = vlaneseq
      %v1973 = vshrl.u32 %v1972, 7
      %v1974 = vsub.s32 0, %v1973
      %v1975 = vrot.slane %v1961, %v1974
      %v1976 = vlaneseq
      %v1977 = vshrl.u32 %v1976, 7
      %v1978 = vsub.s32 0, %v1977
      %v1979 = vrot.slane %v1962, %v1978
      %v1980 = vlaneseq
      %v1981 = vshrl.u32 %v1980, 7
      %v1982 = vsub.s32 0, %v1981
      %v1983 = vrot.slane %v1963, %v1982
      %v1984 = vlaneseq
      %v1985 = vshrl.u32 %v1984, 7
      %v1986 = vsub.s32 0, %v1985
      %v1987 = vrot.slane %v1964, %v1986
      %v1988 = vmul.f32 %v1970, %v1975
      %v1989 = vmul.f32 %v1970, %v1979
      %v1990 = vmul.f32 %v1970, %v1983
      %v1991 = vmul.f32 %v1970, %v1987
      %1992 = vset.pattern.permute.xlu0 1
      %1993 = vperm.xlu0 %1992, %v1966
      %v1994 = vpop.permute.xlu0 %1993
      %v1996 = vlaneseq
      %v1997 = vshrl.u32 %v1996, 7
      %v1998 = vsub.s32 1, %v1997
      %v1999 = vrot.slane %v1961, %v1998
      %v2000 = vlaneseq
      %v2001 = vshrl.u32 %v2000, 7
      %v2002 = vsub.s32 1, %v2001
      %v2003 = vrot.slane %v1962, %v2002
      %v2004 = vlaneseq
      %v2005 = vshrl.u32 %v2004, 7
      %v2006 = vsub.s32 1, %v2005
      %v2007 = vrot.slane %v1963, %v2006
      %v2008 = vlaneseq
      %v2009 = vshrl.u32 %v2008, 7
      %v2010 = vsub.s32 1, %v2009
      %v2011 = vrot.slane %v1964, %v2010
      %v2012 = vmul.f32 %v1994, %v1999
      %v2013 = vmul.f32 %v1994, %v2003
      %v2014 = vmul.f32 %v1994, %v2007
      %v2015 = vmul.f32 %v1994, %v2011
      %2016 = vset.pattern.permute.xlu0 2
      %2017 = vperm.xlu0 %2016, %v1966
      %v2018 = vpop.permute.xlu0 %2017
      %v2020 = vlaneseq
      %v2021 = vshrl.u32 %v2020, 7
      %v2022 = vsub.s32 2, %v2021
      %v2023 = vrot.slane %v1961, %v2022
      %v2024 = vlaneseq
      %v2025 = vshrl.u32 %v2024, 7
      %v2026 = vsub.s32 2, %v2025
      %v2027 = vrot.slane %v1962, %v2026
      %v2028 = vlaneseq
      %v2029 = vshrl.u32 %v2028, 7
      %v2030 = vsub.s32 2, %v2029
      %v2031 = vrot.slane %v1963, %v2030
      %v2032 = vlaneseq
      %v2033 = vshrl.u32 %v2032, 7
      %v2034 = vsub.s32 2, %v2033
      %v2035 = vrot.slane %v1964, %v2034
      %v2036 = vmul.f32 %v2018, %v2023
      %v2037 = vmul.f32 %v2018, %v2027
      %v2038 = vmul.f32 %v2018, %v2031
      %v2039 = vmul.f32 %v2018, %v2035
      %2040 = vset.pattern.permute.xlu0 3
      %2041 = vperm.xlu0 %2040, %v1966
      %v2042 = vpop.permute.xlu0 %2041
      %v2044 = vlaneseq
      %v2045 = vshrl.u32 %v2044, 7
      %v2046 = vsub.s32 3, %v2045
      %v2047 = vrot.slane %v1961, %v2046
      %v2048 = vlaneseq
      %v2049 = vshrl.u32 %v2048, 7
      %v2050 = vsub.s32 3, %v2049
      %v2051 = vrot.slane %v1962, %v2050
      %v2052 = vlaneseq
      %v2053 = vshrl.u32 %v2052, 7
      %v2054 = vsub.s32 3, %v2053
      %v2055 = vrot.slane %v1963, %v2054
      %v2056 = vlaneseq
      %v2057 = vshrl.u32 %v2056, 7
      %v2058 = vsub.s32 3, %v2057
      %v2059 = vrot.slane %v1964, %v2058
      %v2060 = vmul.f32 %v2042, %v2047
      %v2061 = vmul.f32 %v2042, %v2051
      %v2062 = vmul.f32 %v2042, %v2055
      %v2063 = vmul.f32 %v2042, %v2059
      %v2064 = vld [vmem:[%s3 + $0x8] sm:$0x1f]
      %2066 = vset.pattern.permute.xlu0 0
      %2067 = vperm.xlu0 %2066, %v2064
      %v2068 = vpop.permute.xlu0 %2067
      %v2070 = vlaneseq
      %v2071 = vshrl.u32 %v2070, 7
      %v2072 = vsub.s32 0, %v2071
      %v2073 = vrot.slane %v1965, %v2072
      %v2074 = vmul.f32 %v2068, %v1975
      %v2075 = vmul.f32 %v2068, %v1979
      %v2076 = vmul.f32 %v2068, %v1983
      %v2077 = vmul.f32 %v2068, %v1987
      %v2078 = vmul.f32 %v2068, %v2073
      %2079 = vset.pattern.permute.xlu0 1
      %2080 = vperm.xlu0 %2079, %v2064
      %v2081 = vpop.permute.xlu0 %2080
      %v2083 = vlaneseq
      %v2084 = vshrl.u32 %v2083, 7
      %v2085 = vsub.s32 1, %v2084
      %v2086 = vrot.slane %v1965, %v2085
      %v2087 = vmul.f32 %v2081, %v1999
      %v2088 = vmul.f32 %v2081, %v2003
      %v2089 = vmul.f32 %v2081, %v2007
      %v2090 = vmul.f32 %v2081, %v2011
      %v2091 = vmul.f32 %v2081, %v2086
      %2092 = vset.pattern.permute.xlu0 2
      %2093 = vperm.xlu0 %2092, %v2064
      %v2094 = vpop.permute.xlu0 %2093
      %v2096 = vlaneseq
      %v2097 = vshrl.u32 %v2096, 7
      %v2098 = vsub.s32 2, %v2097
      %v2099 = vrot.slane %v1965, %v2098
      %v2100 = vmul.f32 %v2094, %v2023
      %v2101 = vmul.f32 %v2094, %v2027
      %v2102 = vmul.f32 %v2094, %v2031
      %v2103 = vmul.f32 %v2094, %v2035
      %v2104 = vmul.f32 %v2094, %v2099
      %2105 = vset.pattern.permute.xlu0 3
      %2106 = vperm.xlu0 %2105, %v2064
      %v2107 = vpop.permute.xlu0 %2106
      %v2109 = vlaneseq
      %v2110 = vshrl.u32 %v2109, 7
      %v2111 = vsub.s32 3, %v2110
      %v2112 = vrot.slane %v1965, %v2111
      %v2113 = vmul.f32 %v2107, %v2047
      %v2114 = vmul.f32 %v2107, %v2051
      %v2115 = vmul.f32 %v2107, %v2055
      %v2116 = vmul.f32 %v2107, %v2059
      %v2117 = vmul.f32 %v2107, %v2112
      %2123 = vrot.lane.b32.xlu0 %v2074, 127
      %v2124 = vpop.permute.xlu0 %2123
      %2125 = vrot.lane.b32.xlu0 %v2075, 127
      %v2126 = vpop.permute.xlu0 %2125
      %2127 = vrot.lane.b32.xlu0 %v2076, 127
      %v2128 = vpop.permute.xlu0 %2127
      %2129 = vrot.lane.b32.xlu0 %v2077, 127
      %v2130 = vpop.permute.xlu0 %2129
      %2131 = vrot.lane.b32.xlu0 %v2078, 127
      %v2132 = vpop.permute.xlu0 %2131
      %v2133 = vsel %vm574, %v2124, %v2126
      %v2134 = vsel %vm574, %v2126, %v2128
      %v2135 = vsel %vm574, %v2128, %v2130
      %v2136 = vsel %vm574, %v2130, %v2132
      %v2141 = vadd.f32 %v1988, %v2133
      %v2142 = vadd.f32 %v1989, %v2134
      %v2143 = vadd.f32 %v1990, %v2135
      %v2144 = vadd.f32 %v1991, %v2136
      %2150 = vrot.lane.b32.xlu0 %v2087, 127
      %v2151 = vpop.permute.xlu0 %2150
      %2152 = vrot.lane.b32.xlu0 %v2088, 127
      %v2153 = vpop.permute.xlu0 %2152
      %2154 = vrot.lane.b32.xlu0 %v2089, 127
      %v2155 = vpop.permute.xlu0 %2154
      %2156 = vrot.lane.b32.xlu0 %v2090, 127
      %v2157 = vpop.permute.xlu0 %2156
      %2158 = vrot.lane.b32.xlu0 %v2091, 127
      %v2159 = vpop.permute.xlu0 %2158
      %v2160 = vsel %vm574, %v2151, %v2153
      %v2161 = vsel %vm574, %v2153, %v2155
      %v2162 = vsel %vm574, %v2155, %v2157
      %v2163 = vsel %vm574, %v2157, %v2159
      %v2168 = vadd.f32 %v2012, %v2160
      %v2169 = vadd.f32 %v2013, %v2161
      %v2170 = vadd.f32 %v2014, %v2162
      %v2171 = vadd.f32 %v2015, %v2163
      %2177 = vrot.lane.b32.xlu0 %v2100, 127
      %v2178 = vpop.permute.xlu0 %2177
      %2179 = vrot.lane.b32.xlu0 %v2101, 127
      %v2180 = vpop.permute.xlu0 %2179
      %2181 = vrot.lane.b32.xlu0 %v2102, 127
      %v2182 = vpop.permute.xlu0 %2181
      %2183 = vrot.lane.b32.xlu0 %v2103, 127
      %v2184 = vpop.permute.xlu0 %2183
      %2185 = vrot.lane.b32.xlu0 %v2104, 127
      %v2186 = vpop.permute.xlu0 %2185
      %v2187 = vsel %vm574, %v2178, %v2180
      %v2188 = vsel %vm574, %v2180, %v2182
      %v2189 = vsel %vm574, %v2182, %v2184
      %v2190 = vsel %vm574, %v2184, %v2186
      %v2195 = vadd.f32 %v2036, %v2187
      %v2196 = vadd.f32 %v2037, %v2188
      %v2197 = vadd.f32 %v2038, %v2189
      %v2198 = vadd.f32 %v2039, %v2190
      %2204 = vrot.lane.b32.xlu0 %v2113, 127
      %v2205 = vpop.permute.xlu0 %2204
      %2206 = vrot.lane.b32.xlu0 %v2114, 127
      %v2207 = vpop.permute.xlu0 %2206
      %2208 = vrot.lane.b32.xlu0 %v2115, 127
      %v2209 = vpop.permute.xlu0 %2208
      %2210 = vrot.lane.b32.xlu0 %v2116, 127
      %v2211 = vpop.permute.xlu0 %2210
      %2212 = vrot.lane.b32.xlu0 %v2117, 127
      %v2213 = vpop.permute.xlu0 %2212
      %v2214 = vsel %vm574, %v2205, %v2207
      %v2215 = vsel %vm574, %v2207, %v2209
      %v2216 = vsel %vm574, %v2209, %v2211
      %v2217 = vsel %vm574, %v2211, %v2213
      %v2222 = vadd.f32 %v2060, %v2214
      %v2223 = vadd.f32 %v2061, %v2215
      %v2224 = vadd.f32 %v2062, %v2216
      %v2225 = vadd.f32 %v2063, %v2217
      %v2226 = vld [vmem:[%s3 + $0x10] sm:$0x1f]
      %2228 = vset.pattern.permute.xlu0 0
      %2229 = vperm.xlu0 %2228, %v2226
      %v2230 = vpop.permute.xlu0 %2229
      %v2232 = vmul.f32 %v2230, %v1975
      %v2233 = vmul.f32 %v2230, %v1979
      %v2234 = vmul.f32 %v2230, %v1983
      %v2235 = vmul.f32 %v2230, %v1987
      %v2236 = vmul.f32 %v2230, %v2073
      %2237 = vset.pattern.permute.xlu0 1
      %2238 = vperm.xlu0 %2237, %v2226
      %v2239 = vpop.permute.xlu0 %2238
      %v2241 = vmul.f32 %v2239, %v1999
      %v2242 = vmul.f32 %v2239, %v2003
      %v2243 = vmul.f32 %v2239, %v2007
      %v2244 = vmul.f32 %v2239, %v2011
      %v2245 = vmul.f32 %v2239, %v2086
      %2246 = vset.pattern.permute.xlu0 2
      %2247 = vperm.xlu0 %2246, %v2226
      %v2248 = vpop.permute.xlu0 %2247
      %v2250 = vmul.f32 %v2248, %v2023
      %v2251 = vmul.f32 %v2248, %v2027
      %v2252 = vmul.f32 %v2248, %v2031
      %v2253 = vmul.f32 %v2248, %v2035
      %v2254 = vmul.f32 %v2248, %v2099
      %2255 = vset.pattern.permute.xlu0 3
      %2256 = vperm.xlu0 %2255, %v2226
      %v2257 = vpop.permute.xlu0 %2256
      %v2259 = vmul.f32 %v2257, %v2047
      %v2260 = vmul.f32 %v2257, %v2051
      %v2261 = vmul.f32 %v2257, %v2055
      %v2262 = vmul.f32 %v2257, %v2059
      %v2263 = vmul.f32 %v2257, %v2112
      %2269 = vrot.lane.b32.xlu0 %v2232, 126
      %v2270 = vpop.permute.xlu0 %2269
      %2271 = vrot.lane.b32.xlu0 %v2233, 126
      %v2272 = vpop.permute.xlu0 %2271
      %2273 = vrot.lane.b32.xlu0 %v2234, 126
      %v2274 = vpop.permute.xlu0 %2273
      %2275 = vrot.lane.b32.xlu0 %v2235, 126
      %v2276 = vpop.permute.xlu0 %2275
      %2277 = vrot.lane.b32.xlu0 %v2236, 126
      %v2278 = vpop.permute.xlu0 %2277
      %vm2279 = vcmask 1031168
      %v2280 = vsel %vm2279, %v2270, %v2272
      %v2281 = vsel %vm2279, %v2272, %v2274
      %v2282 = vsel %vm2279, %v2274, %v2276
      %v2283 = vsel %vm2279, %v2276, %v2278
      %v2288 = vadd.f32 %v2141, %v2280
      %v2289 = vadd.f32 %v2142, %v2281
      %v2290 = vadd.f32 %v2143, %v2282
      %v2291 = vadd.f32 %v2144, %v2283
      %2297 = vrot.lane.b32.xlu0 %v2241, 126
      %v2298 = vpop.permute.xlu0 %2297
      %2299 = vrot.lane.b32.xlu0 %v2242, 126
      %v2300 = vpop.permute.xlu0 %2299
      %2301 = vrot.lane.b32.xlu0 %v2243, 126
      %v2302 = vpop.permute.xlu0 %2301
      %2303 = vrot.lane.b32.xlu0 %v2244, 126
      %v2304 = vpop.permute.xlu0 %2303
      %2305 = vrot.lane.b32.xlu0 %v2245, 126
      %v2306 = vpop.permute.xlu0 %2305
      %v2307 = vsel %vm2279, %v2298, %v2300
      %v2308 = vsel %vm2279, %v2300, %v2302
      %v2309 = vsel %vm2279, %v2302, %v2304
      %v2310 = vsel %vm2279, %v2304, %v2306
      %v2315 = vadd.f32 %v2168, %v2307
      %v2316 = vadd.f32 %v2169, %v2308
      %v2317 = vadd.f32 %v2170, %v2309
      %v2318 = vadd.f32 %v2171, %v2310
      %2324 = vrot.lane.b32.xlu0 %v2250, 126
      %v2325 = vpop.permute.xlu0 %2324
      %2326 = vrot.lane.b32.xlu0 %v2251, 126
      %v2327 = vpop.permute.xlu0 %2326
      %2328 = vrot.lane.b32.xlu0 %v2252, 126
      %v2329 = vpop.permute.xlu0 %2328
      %2330 = vrot.lane.b32.xlu0 %v2253, 126
      %v2331 = vpop.permute.xlu0 %2330
      %2332 = vrot.lane.b32.xlu0 %v2254, 126
      %v2333 = vpop.permute.xlu0 %2332
      %v2334 = vsel %vm2279, %v2325, %v2327
      %v2335 = vsel %vm2279, %v2327, %v2329
      %v2336 = vsel %vm2279, %v2329, %v2331
      %v2337 = vsel %vm2279, %v2331, %v2333
      %v2342 = vadd.f32 %v2195, %v2334
      %v2343 = vadd.f32 %v2196, %v2335
      %v2344 = vadd.f32 %v2197, %v2336
      %v2345 = vadd.f32 %v2198, %v2337
      %2351 = vrot.lane.b32.xlu0 %v2259, 126
      %v2352 = vpop.permute.xlu0 %2351
      %2353 = vrot.lane.b32.xlu0 %v2260, 126
      %v2354 = vpop.permute.xlu0 %2353
      %2355 = vrot.lane.b32.xlu0 %v2261, 126
      %v2356 = vpop.permute.xlu0 %2355
      %2357 = vrot.lane.b32.xlu0 %v2262, 126
      %v2358 = vpop.permute.xlu0 %2357
      %2359 = vrot.lane.b32.xlu0 %v2263, 126
      %v2360 = vpop.permute.xlu0 %2359
      %v2361 = vsel %vm2279, %v2352, %v2354
      %v2362 = vsel %vm2279, %v2354, %v2356
      %v2363 = vsel %vm2279, %v2356, %v2358
      %v2364 = vsel %vm2279, %v2358, %v2360
      %v2369 = vadd.f32 %v2222, %v2361
      %v2370 = vadd.f32 %v2223, %v2362
      %v2371 = vadd.f32 %v2224, %v2363
      %v2372 = vadd.f32 %v2225, %v2364
      %v2373 = vld [vmem:[%s3 + $0x18] sm:$0x1f]
      %2375 = vset.pattern.permute.xlu0 0
      %2376 = vperm.xlu0 %2375, %v2373
      %v2377 = vpop.permute.xlu0 %2376
      %v2379 = vmul.f32 %v2377, %v1975
      %v2380 = vmul.f32 %v2377, %v1979
      %v2381 = vmul.f32 %v2377, %v1983
      %v2382 = vmul.f32 %v2377, %v1987
      %v2383 = vmul.f32 %v2377, %v2073
      %2384 = vset.pattern.permute.xlu0 1
      %2385 = vperm.xlu0 %2384, %v2373
      %v2386 = vpop.permute.xlu0 %2385
      %v2388 = vmul.f32 %v2386, %v1999
      %v2389 = vmul.f32 %v2386, %v2003
      %v2390 = vmul.f32 %v2386, %v2007
      %v2391 = vmul.f32 %v2386, %v2011
      %v2392 = vmul.f32 %v2386, %v2086
      %2393 = vset.pattern.permute.xlu0 2
      %2394 = vperm.xlu0 %2393, %v2373
      %v2395 = vpop.permute.xlu0 %2394
      %v2397 = vmul.f32 %v2395, %v2023
      %v2398 = vmul.f32 %v2395, %v2027
      %v2399 = vmul.f32 %v2395, %v2031
      %v2400 = vmul.f32 %v2395, %v2035
      %v2401 = vmul.f32 %v2395, %v2099
      %2402 = vset.pattern.permute.xlu0 3
      %2403 = vperm.xlu0 %2402, %v2373
      %v2404 = vpop.permute.xlu0 %2403
      %v2406 = vmul.f32 %v2404, %v2047
      %v2407 = vmul.f32 %v2404, %v2051
      %v2408 = vmul.f32 %v2404, %v2055
      %v2409 = vmul.f32 %v2404, %v2059
      %v2410 = vmul.f32 %v2404, %v2112
      %2416 = vrot.lane.b32.xlu0 %v2379, 125
      %v2417 = vpop.permute.xlu0 %2416
      %2418 = vrot.lane.b32.xlu0 %v2380, 125
      %v2419 = vpop.permute.xlu0 %2418
      %2420 = vrot.lane.b32.xlu0 %v2381, 125
      %v2421 = vpop.permute.xlu0 %2420
      %2422 = vrot.lane.b32.xlu0 %v2382, 125
      %v2423 = vpop.permute.xlu0 %2422
      %2424 = vrot.lane.b32.xlu0 %v2383, 125
      %v2425 = vpop.permute.xlu0 %2424
      %vm2426 = vcmask 1022976
      %v2427 = vsel %vm2426, %v2417, %v2419
      %v2428 = vsel %vm2426, %v2419, %v2421
      %v2429 = vsel %vm2426, %v2421, %v2423
      %v2430 = vsel %vm2426, %v2423, %v2425
      %v2435 = vadd.f32 %v2288, %v2427
      %v2436 = vadd.f32 %v2289, %v2428
      %v2437 = vadd.f32 %v2290, %v2429
      %v2438 = vadd.f32 %v2291, %v2430
      %2444 = vrot.lane.b32.xlu0 %v2388, 125
      %v2445 = vpop.permute.xlu0 %2444
      %2446 = vrot.lane.b32.xlu0 %v2389, 125
      %v2447 = vpop.permute.xlu0 %2446
      %2448 = vrot.lane.b32.xlu0 %v2390, 125
      %v2449 = vpop.permute.xlu0 %2448
      %2450 = vrot.lane.b32.xlu0 %v2391, 125
      %v2451 = vpop.permute.xlu0 %2450
      %2452 = vrot.lane.b32.xlu0 %v2392, 125
      %v2453 = vpop.permute.xlu0 %2452
      %v2454 = vsel %vm2426, %v2445, %v2447
      %v2455 = vsel %vm2426, %v2447, %v2449
      %v2456 = vsel %vm2426, %v2449, %v2451
      %v2457 = vsel %vm2426, %v2451, %v2453
      %v2462 = vadd.f32 %v2315, %v2454
      %v2463 = vadd.f32 %v2316, %v2455
      %v2464 = vadd.f32 %v2317, %v2456
      %v2465 = vadd.f32 %v2318, %v2457
      %2471 = vrot.lane.b32.xlu0 %v2397, 125
      %v2472 = vpop.permute.xlu0 %2471
      %2473 = vrot.lane.b32.xlu0 %v2398, 125
      %v2474 = vpop.permute.xlu0 %2473
      %2475 = vrot.lane.b32.xlu0 %v2399, 125
      %v2476 = vpop.permute.xlu0 %2475
      %2477 = vrot.lane.b32.xlu0 %v2400, 125
      %v2478 = vpop.permute.xlu0 %2477
      %2479 = vrot.lane.b32.xlu0 %v2401, 125
      %v2480 = vpop.permute.xlu0 %2479
      %v2481 = vsel %vm2426, %v2472, %v2474
      %v2482 = vsel %vm2426, %v2474, %v2476
      %v2483 = vsel %vm2426, %v2476, %v2478
      %v2484 = vsel %vm2426, %v2478, %v2480
      %v2489 = vadd.f32 %v2342, %v2481
      %v2490 = vadd.f32 %v2343, %v2482
      %v2491 = vadd.f32 %v2344, %v2483
      %v2492 = vadd.f32 %v2345, %v2484
      %2498 = vrot.lane.b32.xlu0 %v2406, 125
      %v2499 = vpop.permute.xlu0 %2498
      %2500 = vrot.lane.b32.xlu0 %v2407, 125
      %v2501 = vpop.permute.xlu0 %2500
      %2502 = vrot.lane.b32.xlu0 %v2408, 125
      %v2503 = vpop.permute.xlu0 %2502
      %2504 = vrot.lane.b32.xlu0 %v2409, 125
      %v2505 = vpop.permute.xlu0 %2504
      %2506 = vrot.lane.b32.xlu0 %v2410, 125
      %v2507 = vpop.permute.xlu0 %2506
      %v2508 = vsel %vm2426, %v2499, %v2501
      %v2509 = vsel %vm2426, %v2501, %v2503
      %v2510 = vsel %vm2426, %v2503, %v2505
      %v2511 = vsel %vm2426, %v2505, %v2507
      %v2516 = vadd.f32 %v2369, %v2508
      %v2517 = vadd.f32 %v2370, %v2509
      %v2518 = vadd.f32 %v2371, %v2510
      %v2519 = vadd.f32 %v2372, %v2511
      %v2520 = vld [vmem:[%s3 + $0x20] sm:$0x1f]
      %2522 = vset.pattern.permute.xlu0 0
      %2523 = vperm.xlu0 %2522, %v2520
      %v2524 = vpop.permute.xlu0 %2523
      %v2526 = vmul.f32 %v2524, %v1975
      %v2527 = vmul.f32 %v2524, %v1979
      %v2528 = vmul.f32 %v2524, %v1983
      %v2529 = vmul.f32 %v2524, %v1987
      %v2530 = vmul.f32 %v2524, %v2073
      %2531 = vset.pattern.permute.xlu0 1
      %2532 = vperm.xlu0 %2531, %v2520
      %v2533 = vpop.permute.xlu0 %2532
      %v2535 = vmul.f32 %v2533, %v1999
      %v2536 = vmul.f32 %v2533, %v2003
      %v2537 = vmul.f32 %v2533, %v2007
      %v2538 = vmul.f32 %v2533, %v2011
      %v2539 = vmul.f32 %v2533, %v2086
      %2540 = vset.pattern.permute.xlu0 2
      %2541 = vperm.xlu0 %2540, %v2520
      %v2542 = vpop.permute.xlu0 %2541
      %v2544 = vmul.f32 %v2542, %v2023
      %v2545 = vmul.f32 %v2542, %v2027
      %v2546 = vmul.f32 %v2542, %v2031
      %v2547 = vmul.f32 %v2542, %v2035
      %v2548 = vmul.f32 %v2542, %v2099
      %2549 = vset.pattern.permute.xlu0 3
      %2550 = vperm.xlu0 %2549, %v2520
      %v2551 = vpop.permute.xlu0 %2550
      %v2553 = vmul.f32 %v2551, %v2047
      %v2554 = vmul.f32 %v2551, %v2051
      %v2555 = vmul.f32 %v2551, %v2055
      %v2556 = vmul.f32 %v2551, %v2059
      %v2557 = vmul.f32 %v2551, %v2112
      %2563 = vrot.lane.b32.xlu0 %v2526, 124
      %v2564 = vpop.permute.xlu0 %2563
      %2565 = vrot.lane.b32.xlu0 %v2527, 124
      %v2566 = vpop.permute.xlu0 %2565
      %2567 = vrot.lane.b32.xlu0 %v2528, 124
      %v2568 = vpop.permute.xlu0 %2567
      %2569 = vrot.lane.b32.xlu0 %v2529, 124
      %v2570 = vpop.permute.xlu0 %2569
      %2571 = vrot.lane.b32.xlu0 %v2530, 124
      %v2572 = vpop.permute.xlu0 %2571
      %vm2573 = vcmask 1014784
      %v2574 = vsel %vm2573, %v2564, %v2566
      %v2575 = vsel %vm2573, %v2566, %v2568
      %v2576 = vsel %vm2573, %v2568, %v2570
      %v2577 = vsel %vm2573, %v2570, %v2572
      %v2582 = vadd.f32 %v2435, %v2574
      %v2583 = vadd.f32 %v2436, %v2575
      %v2584 = vadd.f32 %v2437, %v2576
      %v2585 = vadd.f32 %v2438, %v2577
      %2591 = vrot.lane.b32.xlu0 %v2535, 124
      %v2592 = vpop.permute.xlu0 %2591
      %2593 = vrot.lane.b32.xlu0 %v2536, 124
      %v2594 = vpop.permute.xlu0 %2593
      %2595 = vrot.lane.b32.xlu0 %v2537, 124
      %v2596 = vpop.permute.xlu0 %2595
      %2597 = vrot.lane.b32.xlu0 %v2538, 124
      %v2598 = vpop.permute.xlu0 %2597
      %2599 = vrot.lane.b32.xlu0 %v2539, 124
      %v2600 = vpop.permute.xlu0 %2599
      %v2601 = vsel %vm2573, %v2592, %v2594
      %v2602 = vsel %vm2573, %v2594, %v2596
      %v2603 = vsel %vm2573, %v2596, %v2598
      %v2604 = vsel %vm2573, %v2598, %v2600
      %v2609 = vadd.f32 %v2462, %v2601
      %v2610 = vadd.f32 %v2463, %v2602
      %v2611 = vadd.f32 %v2464, %v2603
      %v2612 = vadd.f32 %v2465, %v2604
      %2618 = vrot.lane.b32.xlu0 %v2544, 124
      %v2619 = vpop.permute.xlu0 %2618
      %2620 = vrot.lane.b32.xlu0 %v2545, 124
      %v2621 = vpop.permute.xlu0 %2620
      %2622 = vrot.lane.b32.xlu0 %v2546, 124
      %v2623 = vpop.permute.xlu0 %2622
      %2624 = vrot.lane.b32.xlu0 %v2547, 124
      %v2625 = vpop.permute.xlu0 %2624
      %2626 = vrot.lane.b32.xlu0 %v2548, 124
      %v2627 = vpop.permute.xlu0 %2626
      %v2628 = vsel %vm2573, %v2619, %v2621
      %v2629 = vsel %vm2573, %v2621, %v2623
      %v2630 = vsel %vm2573, %v2623, %v2625
      %v2631 = vsel %vm2573, %v2625, %v2627
      %v2636 = vadd.f32 %v2489, %v2628
      %v2637 = vadd.f32 %v2490, %v2629
      %v2638 = vadd.f32 %v2491, %v2630
      %v2639 = vadd.f32 %v2492, %v2631
      %2645 = vrot.lane.b32.xlu0 %v2553, 124
      %v2646 = vpop.permute.xlu0 %2645
      %2647 = vrot.lane.b32.xlu0 %v2554, 124
      %v2648 = vpop.permute.xlu0 %2647
      %2649 = vrot.lane.b32.xlu0 %v2555, 124
      %v2650 = vpop.permute.xlu0 %2649
      %2651 = vrot.lane.b32.xlu0 %v2556, 124
      %v2652 = vpop.permute.xlu0 %2651
      %2653 = vrot.lane.b32.xlu0 %v2557, 124
      %v2654 = vpop.permute.xlu0 %2653
      %v2655 = vsel %vm2573, %v2646, %v2648
      %v2656 = vsel %vm2573, %v2648, %v2650
      %v2657 = vsel %vm2573, %v2650, %v2652
      %v2658 = vsel %vm2573, %v2652, %v2654
      %v2663 = vadd.f32 %v2516, %v2655
      %v2664 = vadd.f32 %v2517, %v2656
      %v2665 = vadd.f32 %v2518, %v2657
      %v2666 = vadd.f32 %v2519, %v2658
      %v2667 = vld [vmem:[%s3 + $0x28] sm:$0x1f]
      %2669 = vset.pattern.permute.xlu0 0
      %2670 = vperm.xlu0 %2669, %v2667
      %v2671 = vpop.permute.xlu0 %2670
      %v2673 = vmul.f32 %v2671, %v1975
      %v2674 = vmul.f32 %v2671, %v1979
      %v2675 = vmul.f32 %v2671, %v1983
      %v2676 = vmul.f32 %v2671, %v1987
      %v2677 = vmul.f32 %v2671, %v2073
      %2678 = vset.pattern.permute.xlu0 1
      %2679 = vperm.xlu0 %2678, %v2667
      %v2680 = vpop.permute.xlu0 %2679
      %v2682 = vmul.f32 %v2680, %v1999
      %v2683 = vmul.f32 %v2680, %v2003
      %v2684 = vmul.f32 %v2680, %v2007
      %v2685 = vmul.f32 %v2680, %v2011
      %v2686 = vmul.f32 %v2680, %v2086
      %2687 = vset.pattern.permute.xlu0 2
      %2688 = vperm.xlu0 %2687, %v2667
      %v2689 = vpop.permute.xlu0 %2688
      %v2691 = vmul.f32 %v2689, %v2023
      %v2692 = vmul.f32 %v2689, %v2027
      %v2693 = vmul.f32 %v2689, %v2031
      %v2694 = vmul.f32 %v2689, %v2035
      %v2695 = vmul.f32 %v2689, %v2099
      %2696 = vset.pattern.permute.xlu0 3
      %2697 = vperm.xlu0 %2696, %v2667
      %v2698 = vpop.permute.xlu0 %2697
      %v2700 = vmul.f32 %v2698, %v2047
      %v2701 = vmul.f32 %v2698, %v2051
      %v2702 = vmul.f32 %v2698, %v2055
      %v2703 = vmul.f32 %v2698, %v2059
      %v2704 = vmul.f32 %v2698, %v2112
      %2710 = vrot.lane.b32.xlu0 %v2673, 114
      %v2711 = vpop.permute.xlu0 %2710
      %2712 = vrot.lane.b32.xlu0 %v2674, 114
      %v2713 = vpop.permute.xlu0 %2712
      %2714 = vrot.lane.b32.xlu0 %v2675, 114
      %v2715 = vpop.permute.xlu0 %2714
      %2716 = vrot.lane.b32.xlu0 %v2676, 114
      %v2717 = vpop.permute.xlu0 %2716
      %2718 = vrot.lane.b32.xlu0 %v2677, 114
      %v2719 = vpop.permute.xlu0 %2718
      %v2720 = vsel %vm1169, %v2711, %v2713
      %v2721 = vsel %vm1169, %v2713, %v2715
      %v2722 = vsel %vm1169, %v2715, %v2717
      %v2723 = vsel %vm1169, %v2717, %v2719
      %v2728 = vadd.f32 %v2582, %v2720
      %v2729 = vadd.f32 %v2583, %v2721
      %v2730 = vadd.f32 %v2584, %v2722
      %v2731 = vadd.f32 %v2585, %v2723
      %2737 = vrot.lane.b32.xlu0 %v2682, 114
      %v2738 = vpop.permute.xlu0 %2737
      %2739 = vrot.lane.b32.xlu0 %v2683, 114
      %v2740 = vpop.permute.xlu0 %2739
      %2741 = vrot.lane.b32.xlu0 %v2684, 114
      %v2742 = vpop.permute.xlu0 %2741
      %2743 = vrot.lane.b32.xlu0 %v2685, 114
      %v2744 = vpop.permute.xlu0 %2743
      %2745 = vrot.lane.b32.xlu0 %v2686, 114
      %v2746 = vpop.permute.xlu0 %2745
      %v2747 = vsel %vm1169, %v2738, %v2740
      %v2748 = vsel %vm1169, %v2740, %v2742
      %v2749 = vsel %vm1169, %v2742, %v2744
      %v2750 = vsel %vm1169, %v2744, %v2746
      %v2755 = vadd.f32 %v2609, %v2747
      %v2756 = vadd.f32 %v2610, %v2748
      %v2757 = vadd.f32 %v2611, %v2749
      %v2758 = vadd.f32 %v2612, %v2750
      %2764 = vrot.lane.b32.xlu0 %v2691, 114
      %v2765 = vpop.permute.xlu0 %2764
      %2766 = vrot.lane.b32.xlu0 %v2692, 114
      %v2767 = vpop.permute.xlu0 %2766
      %2768 = vrot.lane.b32.xlu0 %v2693, 114
      %v2769 = vpop.permute.xlu0 %2768
      %2770 = vrot.lane.b32.xlu0 %v2694, 114
      %v2771 = vpop.permute.xlu0 %2770
      %2772 = vrot.lane.b32.xlu0 %v2695, 114
      %v2773 = vpop.permute.xlu0 %2772
      %v2774 = vsel %vm1169, %v2765, %v2767
      %v2775 = vsel %vm1169, %v2767, %v2769
      %v2776 = vsel %vm1169, %v2769, %v2771
      %v2777 = vsel %vm1169, %v2771, %v2773
      %v2782 = vadd.f32 %v2636, %v2774
      %v2783 = vadd.f32 %v2637, %v2775
      %v2784 = vadd.f32 %v2638, %v2776
      %v2785 = vadd.f32 %v2639, %v2777
      %2791 = vrot.lane.b32.xlu0 %v2700, 114
      %v2792 = vpop.permute.xlu0 %2791
      %2793 = vrot.lane.b32.xlu0 %v2701, 114
      %v2794 = vpop.permute.xlu0 %2793
      %2795 = vrot.lane.b32.xlu0 %v2702, 114
      %v2796 = vpop.permute.xlu0 %2795
      %2797 = vrot.lane.b32.xlu0 %v2703, 114
      %v2798 = vpop.permute.xlu0 %2797
      %2799 = vrot.lane.b32.xlu0 %v2704, 114
      %v2800 = vpop.permute.xlu0 %2799
      %v2801 = vsel %vm1169, %v2792, %v2794
      %v2802 = vsel %vm1169, %v2794, %v2796
      %v2803 = vsel %vm1169, %v2796, %v2798
      %v2804 = vsel %vm1169, %v2798, %v2800
      %v2809 = vadd.f32 %v2663, %v2801
      %v2810 = vadd.f32 %v2664, %v2802
      %v2811 = vadd.f32 %v2665, %v2803
      %v2812 = vadd.f32 %v2666, %v2804
      %v2813 = vld [vmem:[%s3 + $0x30] sm:$0x1f]
      %2815 = vset.pattern.permute.xlu0 0
      %2816 = vperm.xlu0 %2815, %v2813
      %v2817 = vpop.permute.xlu0 %2816
      %v2819 = vmul.f32 %v2817, %v1975
      %v2820 = vmul.f32 %v2817, %v1979
      %v2821 = vmul.f32 %v2817, %v1983
      %v2822 = vmul.f32 %v2817, %v1987
      %v2823 = vmul.f32 %v2817, %v2073
      %2824 = vset.pattern.permute.xlu0 1
      %2825 = vperm.xlu0 %2824, %v2813
      %v2826 = vpop.permute.xlu0 %2825
      %v2828 = vmul.f32 %v2826, %v1999
      %v2829 = vmul.f32 %v2826, %v2003
      %v2830 = vmul.f32 %v2826, %v2007
      %v2831 = vmul.f32 %v2826, %v2011
      %v2832 = vmul.f32 %v2826, %v2086
      %2833 = vset.pattern.permute.xlu0 2
      %2834 = vperm.xlu0 %2833, %v2813
      %v2835 = vpop.permute.xlu0 %2834
      %v2837 = vmul.f32 %v2835, %v2023
      %v2838 = vmul.f32 %v2835, %v2027
      %v2839 = vmul.f32 %v2835, %v2031
      %v2840 = vmul.f32 %v2835, %v2035
      %v2841 = vmul.f32 %v2835, %v2099
      %2842 = vset.pattern.permute.xlu0 3
      %2843 = vperm.xlu0 %2842, %v2813
      %v2844 = vpop.permute.xlu0 %2843
      %v2846 = vmul.f32 %v2844, %v2047
      %v2847 = vmul.f32 %v2844, %v2051
      %v2848 = vmul.f32 %v2844, %v2055
      %v2849 = vmul.f32 %v2844, %v2059
      %v2850 = vmul.f32 %v2844, %v2112
      %2856 = vrot.lane.b32.xlu0 %v2819, 113
      %v2857 = vpop.permute.xlu0 %2856
      %2858 = vrot.lane.b32.xlu0 %v2820, 113
      %v2859 = vpop.permute.xlu0 %2858
      %2860 = vrot.lane.b32.xlu0 %v2821, 113
      %v2861 = vpop.permute.xlu0 %2860
      %2862 = vrot.lane.b32.xlu0 %v2822, 113
      %v2863 = vpop.permute.xlu0 %2862
      %2864 = vrot.lane.b32.xlu0 %v2823, 113
      %v2865 = vpop.permute.xlu0 %2864
      %v2866 = vsel %vm1478, %v2857, %v2859
      %v2867 = vsel %vm1478, %v2859, %v2861
      %v2868 = vsel %vm1478, %v2861, %v2863
      %v2869 = vsel %vm1478, %v2863, %v2865
      %v2874 = vadd.f32 %v2728, %v2866
      %v2875 = vadd.f32 %v2729, %v2867
      %v2876 = vadd.f32 %v2730, %v2868
      %v2877 = vadd.f32 %v2731, %v2869
      %2883 = vrot.lane.b32.xlu0 %v2828, 113
      %v2884 = vpop.permute.xlu0 %2883
      %2885 = vrot.lane.b32.xlu0 %v2829, 113
      %v2886 = vpop.permute.xlu0 %2885
      %2887 = vrot.lane.b32.xlu0 %v2830, 113
      %v2888 = vpop.permute.xlu0 %2887
      %2889 = vrot.lane.b32.xlu0 %v2831, 113
      %v2890 = vpop.permute.xlu0 %2889
      %2891 = vrot.lane.b32.xlu0 %v2832, 113
      %v2892 = vpop.permute.xlu0 %2891
      %v2893 = vsel %vm1478, %v2884, %v2886
      %v2894 = vsel %vm1478, %v2886, %v2888
      %v2895 = vsel %vm1478, %v2888, %v2890
      %v2896 = vsel %vm1478, %v2890, %v2892
      %v2901 = vadd.f32 %v2755, %v2893
      %v2902 = vadd.f32 %v2756, %v2894
      %v2903 = vadd.f32 %v2757, %v2895
      %v2904 = vadd.f32 %v2758, %v2896
      %2910 = vrot.lane.b32.xlu0 %v2837, 113
      %v2911 = vpop.permute.xlu0 %2910
      %2912 = vrot.lane.b32.xlu0 %v2838, 113
      %v2913 = vpop.permute.xlu0 %2912
      %2914 = vrot.lane.b32.xlu0 %v2839, 113
      %v2915 = vpop.permute.xlu0 %2914
      %2916 = vrot.lane.b32.xlu0 %v2840, 113
      %v2917 = vpop.permute.xlu0 %2916
      %2918 = vrot.lane.b32.xlu0 %v2841, 113
      %v2919 = vpop.permute.xlu0 %2918
      %v2920 = vsel %vm1478, %v2911, %v2913
      %v2921 = vsel %vm1478, %v2913, %v2915
      %v2922 = vsel %vm1478, %v2915, %v2917
      %v2923 = vsel %vm1478, %v2917, %v2919
      %v2928 = vadd.f32 %v2782, %v2920
      %v2929 = vadd.f32 %v2783, %v2921
      %v2930 = vadd.f32 %v2784, %v2922
      %v2931 = vadd.f32 %v2785, %v2923
      %2937 = vrot.lane.b32.xlu0 %v2846, 113
      %v2938 = vpop.permute.xlu0 %2937
      %2939 = vrot.lane.b32.xlu0 %v2847, 113
      %v2940 = vpop.permute.xlu0 %2939
      %2941 = vrot.lane.b32.xlu0 %v2848, 113
      %v2942 = vpop.permute.xlu0 %2941
      %2943 = vrot.lane.b32.xlu0 %v2849, 113
      %v2944 = vpop.permute.xlu0 %2943
      %2945 = vrot.lane.b32.xlu0 %v2850, 113
      %v2946 = vpop.permute.xlu0 %2945
      %v2947 = vsel %vm1478, %v2938, %v2940
      %v2948 = vsel %vm1478, %v2940, %v2942
      %v2949 = vsel %vm1478, %v2942, %v2944
      %v2950 = vsel %vm1478, %v2944, %v2946
      %v2955 = vadd.f32 %v2809, %v2947
      %v2956 = vadd.f32 %v2810, %v2948
      %v2957 = vadd.f32 %v2811, %v2949
      %v2958 = vadd.f32 %v2812, %v2950
      %v2959 = vld [vmem:[%s3 + $0x38] sm:$0x1f]
      %2961 = vset.pattern.permute.xlu0 0
      %2962 = vperm.xlu0 %2961, %v2959
      %v2963 = vpop.permute.xlu0 %2962
      %v2965 = vmul.f32 %v2963, %v1975
      %v2966 = vmul.f32 %v2963, %v1979
      %v2967 = vmul.f32 %v2963, %v1983
      %v2968 = vmul.f32 %v2963, %v1987
      %v2969 = vmul.f32 %v2963, %v2073
      %2970 = vset.pattern.permute.xlu0 1
      %2971 = vperm.xlu0 %2970, %v2959
      %v2972 = vpop.permute.xlu0 %2971
      %v2974 = vmul.f32 %v2972, %v1999
      %v2975 = vmul.f32 %v2972, %v2003
      %v2976 = vmul.f32 %v2972, %v2007
      %v2977 = vmul.f32 %v2972, %v2011
      %v2978 = vmul.f32 %v2972, %v2086
      %2979 = vset.pattern.permute.xlu0 2
      %2980 = vperm.xlu0 %2979, %v2959
      %v2981 = vpop.permute.xlu0 %2980
      %v2983 = vmul.f32 %v2981, %v2023
      %v2984 = vmul.f32 %v2981, %v2027
      %v2985 = vmul.f32 %v2981, %v2031
      %v2986 = vmul.f32 %v2981, %v2035
      %v2987 = vmul.f32 %v2981, %v2099
      %2988 = vset.pattern.permute.xlu0 3
      %2989 = vperm.xlu0 %2988, %v2959
      %v2990 = vpop.permute.xlu0 %2989
      %v2992 = vmul.f32 %v2990, %v2047
      %v2993 = vmul.f32 %v2990, %v2051
      %v2994 = vmul.f32 %v2990, %v2055
      %v2995 = vmul.f32 %v2990, %v2059
      %v2996 = vmul.f32 %v2990, %v2112
      %3002 = vrot.lane.b32.xlu0 %v2965, 112
      %v3003 = vpop.permute.xlu0 %3002
      %3004 = vrot.lane.b32.xlu0 %v2966, 112
      %v3005 = vpop.permute.xlu0 %3004
      %3006 = vrot.lane.b32.xlu0 %v2967, 112
      %v3007 = vpop.permute.xlu0 %3006
      %3008 = vrot.lane.b32.xlu0 %v2968, 112
      %v3009 = vpop.permute.xlu0 %3008
      %3010 = vrot.lane.b32.xlu0 %v2969, 112
      %v3011 = vpop.permute.xlu0 %3010
      %vm3012 = vcmask 916480
      %v3013 = vsel %vm3012, %v3003, %v3005
      %v3014 = vsel %vm3012, %v3005, %v3007
      %v3015 = vsel %vm3012, %v3007, %v3009
      %v3016 = vsel %vm3012, %v3009, %v3011
      %v3021 = vadd.f32 %v2874, %v3013
      %v3022 = vadd.f32 %v2875, %v3014
      %v3023 = vadd.f32 %v2876, %v3015
      %v3024 = vadd.f32 %v2877, %v3016
      %3030 = vrot.lane.b32.xlu0 %v2974, 112
      %v3031 = vpop.permute.xlu0 %3030
      %3032 = vrot.lane.b32.xlu0 %v2975, 112
      %v3033 = vpop.permute.xlu0 %3032
      %3034 = vrot.lane.b32.xlu0 %v2976, 112
      %v3035 = vpop.permute.xlu0 %3034
      %3036 = vrot.lane.b32.xlu0 %v2977, 112
      %v3037 = vpop.permute.xlu0 %3036
      %3038 = vrot.lane.b32.xlu0 %v2978, 112
      %v3039 = vpop.permute.xlu0 %3038
      %v3040 = vsel %vm3012, %v3031, %v3033
      %v3041 = vsel %vm3012, %v3033, %v3035
      %v3042 = vsel %vm3012, %v3035, %v3037
      %v3043 = vsel %vm3012, %v3037, %v3039
      %v3048 = vadd.f32 %v2901, %v3040
      %v3049 = vadd.f32 %v2902, %v3041
      %v3050 = vadd.f32 %v2903, %v3042
      %v3051 = vadd.f32 %v2904, %v3043
      %3057 = vrot.lane.b32.xlu0 %v2983, 112
      %v3058 = vpop.permute.xlu0 %3057
      %3059 = vrot.lane.b32.xlu0 %v2984, 112
      %v3060 = vpop.permute.xlu0 %3059
      %3061 = vrot.lane.b32.xlu0 %v2985, 112
      %v3062 = vpop.permute.xlu0 %3061
      %3063 = vrot.lane.b32.xlu0 %v2986, 112
      %v3064 = vpop.permute.xlu0 %3063
      %3065 = vrot.lane.b32.xlu0 %v2987, 112
      %v3066 = vpop.permute.xlu0 %3065
      %v3067 = vsel %vm3012, %v3058, %v3060
      %v3068 = vsel %vm3012, %v3060, %v3062
      %v3069 = vsel %vm3012, %v3062, %v3064
      %v3070 = vsel %vm3012, %v3064, %v3066
      %v3075 = vadd.f32 %v2928, %v3067
      %v3076 = vadd.f32 %v2929, %v3068
      %v3077 = vadd.f32 %v2930, %v3069
      %v3078 = vadd.f32 %v2931, %v3070
      %3084 = vrot.lane.b32.xlu0 %v2992, 112
      %v3085 = vpop.permute.xlu0 %3084
      %3086 = vrot.lane.b32.xlu0 %v2993, 112
      %v3087 = vpop.permute.xlu0 %3086
      %3088 = vrot.lane.b32.xlu0 %v2994, 112
      %v3089 = vpop.permute.xlu0 %3088
      %3090 = vrot.lane.b32.xlu0 %v2995, 112
      %v3091 = vpop.permute.xlu0 %3090
      %3092 = vrot.lane.b32.xlu0 %v2996, 112
      %v3093 = vpop.permute.xlu0 %3092
      %v3094 = vsel %vm3012, %v3085, %v3087
      %v3095 = vsel %vm3012, %v3087, %v3089
      %v3096 = vsel %vm3012, %v3089, %v3091
      %v3097 = vsel %vm3012, %v3091, %v3093
      %v3102 = vadd.f32 %v2955, %v3094
      %v3103 = vadd.f32 %v2956, %v3095
      %v3104 = vadd.f32 %v2957, %v3096
      %v3105 = vadd.f32 %v2958, %v3097
      %v3106 = vld [vmem:[%s3 + $0x40] sm:$0x1f]
      %3108 = vset.pattern.permute.xlu0 0
      %3109 = vperm.xlu0 %3108, %v3106
      %v3110 = vpop.permute.xlu0 %3109
      %v3112 = vmul.f32 %v3110, %v1975
      %v3113 = vmul.f32 %v3110, %v1979
      %v3114 = vmul.f32 %v3110, %v1983
      %v3115 = vmul.f32 %v3110, %v1987
      %v3116 = vmul.f32 %v3110, %v2073
      %3117 = vset.pattern.permute.xlu0 1
      %3118 = vperm.xlu0 %3117, %v3106
      %v3119 = vpop.permute.xlu0 %3118
      %v3121 = vmul.f32 %v3119, %v1999
      %v3122 = vmul.f32 %v3119, %v2003
      %v3123 = vmul.f32 %v3119, %v2007
      %v3124 = vmul.f32 %v3119, %v2011
      %v3125 = vmul.f32 %v3119, %v2086
      %3126 = vset.pattern.permute.xlu0 2
      %3127 = vperm.xlu0 %3126, %v3106
      %v3128 = vpop.permute.xlu0 %3127
      %v3130 = vmul.f32 %v3128, %v2023
      %v3131 = vmul.f32 %v3128, %v2027
      %v3132 = vmul.f32 %v3128, %v2031
      %v3133 = vmul.f32 %v3128, %v2035
      %v3134 = vmul.f32 %v3128, %v2099
      %3135 = vset.pattern.permute.xlu0 3
      %3136 = vperm.xlu0 %3135, %v3106
      %v3137 = vpop.permute.xlu0 %3136
      %v3139 = vmul.f32 %v3137, %v2047
      %v3140 = vmul.f32 %v3137, %v2051
      %v3141 = vmul.f32 %v3137, %v2055
      %v3142 = vmul.f32 %v3137, %v2059
      %v3143 = vmul.f32 %v3137, %v2112
      %3149 = vrot.lane.b32.xlu0 %v3112, 111
      %v3150 = vpop.permute.xlu0 %3149
      %3151 = vrot.lane.b32.xlu0 %v3113, 111
      %v3152 = vpop.permute.xlu0 %3151
      %3153 = vrot.lane.b32.xlu0 %v3114, 111
      %v3154 = vpop.permute.xlu0 %3153
      %3155 = vrot.lane.b32.xlu0 %v3115, 111
      %v3156 = vpop.permute.xlu0 %3155
      %3157 = vrot.lane.b32.xlu0 %v3116, 111
      %v3158 = vpop.permute.xlu0 %3157
      %vm3159 = vcmask 908288
      %v3160 = vsel %vm3159, %v3150, %v3152
      %v3161 = vsel %vm3159, %v3152, %v3154
      %v3162 = vsel %vm3159, %v3154, %v3156
      %v3163 = vsel %vm3159, %v3156, %v3158
      %v3168 = vadd.f32 %v3021, %v3160
      %v3169 = vadd.f32 %v3022, %v3161
      %v3170 = vadd.f32 %v3023, %v3162
      %v3171 = vadd.f32 %v3024, %v3163
      %3177 = vrot.lane.b32.xlu0 %v3121, 111
      %v3178 = vpop.permute.xlu0 %3177
      %3179 = vrot.lane.b32.xlu0 %v3122, 111
      %v3180 = vpop.permute.xlu0 %3179
      %3181 = vrot.lane.b32.xlu0 %v3123, 111
      %v3182 = vpop.permute.xlu0 %3181
      %3183 = vrot.lane.b32.xlu0 %v3124, 111
      %v3184 = vpop.permute.xlu0 %3183
      %3185 = vrot.lane.b32.xlu0 %v3125, 111
      %v3186 = vpop.permute.xlu0 %3185
      %v3187 = vsel %vm3159, %v3178, %v3180
      %v3188 = vsel %vm3159, %v3180, %v3182
      %v3189 = vsel %vm3159, %v3182, %v3184
      %v3190 = vsel %vm3159, %v3184, %v3186
      %v3195 = vadd.f32 %v3048, %v3187
      %v3196 = vadd.f32 %v3049, %v3188
      %v3197 = vadd.f32 %v3050, %v3189
      %v3198 = vadd.f32 %v3051, %v3190
      %3204 = vrot.lane.b32.xlu0 %v3130, 111
      %v3205 = vpop.permute.xlu0 %3204
      %3206 = vrot.lane.b32.xlu0 %v3131, 111
      %v3207 = vpop.permute.xlu0 %3206
      %3208 = vrot.lane.b32.xlu0 %v3132, 111
      %v3209 = vpop.permute.xlu0 %3208
      %3210 = vrot.lane.b32.xlu0 %v3133, 111
      %v3211 = vpop.permute.xlu0 %3210
      %3212 = vrot.lane.b32.xlu0 %v3134, 111
      %v3213 = vpop.permute.xlu0 %3212
      %v3214 = vsel %vm3159, %v3205, %v3207
      %v3215 = vsel %vm3159, %v3207, %v3209
      %v3216 = vsel %vm3159, %v3209, %v3211
      %v3217 = vsel %vm3159, %v3211, %v3213
      %v3222 = vadd.f32 %v3075, %v3214
      %v3223 = vadd.f32 %v3076, %v3215
      %v3224 = vadd.f32 %v3077, %v3216
      %v3225 = vadd.f32 %v3078, %v3217
      %3231 = vrot.lane.b32.xlu0 %v3139, 111
      %v3232 = vpop.permute.xlu0 %3231
      %3233 = vrot.lane.b32.xlu0 %v3140, 111
      %v3234 = vpop.permute.xlu0 %3233
      %3235 = vrot.lane.b32.xlu0 %v3141, 111
      %v3236 = vpop.permute.xlu0 %3235
      %3237 = vrot.lane.b32.xlu0 %v3142, 111
      %v3238 = vpop.permute.xlu0 %3237
      %3239 = vrot.lane.b32.xlu0 %v3143, 111
      %v3240 = vpop.permute.xlu0 %3239
      %v3241 = vsel %vm3159, %v3232, %v3234
      %v3242 = vsel %vm3159, %v3234, %v3236
      %v3243 = vsel %vm3159, %v3236, %v3238
      %v3244 = vsel %vm3159, %v3238, %v3240
      %v3249 = vadd.f32 %v3102, %v3241
      %v3250 = vadd.f32 %v3103, %v3242
      %v3251 = vadd.f32 %v3104, %v3243
      %v3252 = vadd.f32 %v3105, %v3244
      %v3253 = vld [vmem:[%s3 + $0x48] sm:$0x1f]
      %3255 = vset.pattern.permute.xlu0 0
      %3256 = vperm.xlu0 %3255, %v3253
      %v3257 = vpop.permute.xlu0 %3256
      %v3259 = vmul.f32 %v3257, %v1975
      %v3260 = vmul.f32 %v3257, %v1979
      %v3261 = vmul.f32 %v3257, %v1983
      %v3262 = vmul.f32 %v3257, %v1987
      %v3263 = vmul.f32 %v3257, %v2073
      %3264 = vset.pattern.permute.xlu0 1
      %3265 = vperm.xlu0 %3264, %v3253
      %v3266 = vpop.permute.xlu0 %3265
      %v3268 = vmul.f32 %v3266, %v1999
      %v3269 = vmul.f32 %v3266, %v2003
      %v3270 = vmul.f32 %v3266, %v2007
      %v3271 = vmul.f32 %v3266, %v2011
      %v3272 = vmul.f32 %v3266, %v2086
      %3273 = vset.pattern.permute.xlu0 2
      %3274 = vperm.xlu0 %3273, %v3253
      %v3275 = vpop.permute.xlu0 %3274
      %v3277 = vmul.f32 %v3275, %v2023
      %v3278 = vmul.f32 %v3275, %v2027
      %v3279 = vmul.f32 %v3275, %v2031
      %v3280 = vmul.f32 %v3275, %v2035
      %v3281 = vmul.f32 %v3275, %v2099
      %3282 = vset.pattern.permute.xlu0 3
      %3283 = vperm.xlu0 %3282, %v3253
      %v3284 = vpop.permute.xlu0 %3283
      %v3286 = vmul.f32 %v3284, %v2047
      %v3287 = vmul.f32 %v3284, %v2051
      %v3288 = vmul.f32 %v3284, %v2055
      %v3289 = vmul.f32 %v3284, %v2059
      %v3290 = vmul.f32 %v3284, %v2112
      %3296 = vrot.lane.b32.xlu0 %v3259, 110
      %v3297 = vpop.permute.xlu0 %3296
      %3298 = vrot.lane.b32.xlu0 %v3260, 110
      %v3299 = vpop.permute.xlu0 %3298
      %3300 = vrot.lane.b32.xlu0 %v3261, 110
      %v3301 = vpop.permute.xlu0 %3300
      %3302 = vrot.lane.b32.xlu0 %v3262, 110
      %v3303 = vpop.permute.xlu0 %3302
      %3304 = vrot.lane.b32.xlu0 %v3263, 110
      %v3305 = vpop.permute.xlu0 %3304
      %vm3306 = vcmask 900096
      %v3307 = vsel %vm3306, %v3297, %v3299
      %v3308 = vsel %vm3306, %v3299, %v3301
      %v3309 = vsel %vm3306, %v3301, %v3303
      %v3310 = vsel %vm3306, %v3303, %v3305
      %v3315 = vadd.f32 %v3168, %v3307
      %v3316 = vadd.f32 %v3169, %v3308
      %v3317 = vadd.f32 %v3170, %v3309
      %v3318 = vadd.f32 %v3171, %v3310
      %3324 = vrot.lane.b32.xlu0 %v3268, 110
      %v3325 = vpop.permute.xlu0 %3324
      %3326 = vrot.lane.b32.xlu0 %v3269, 110
      %v3327 = vpop.permute.xlu0 %3326
      %3328 = vrot.lane.b32.xlu0 %v3270, 110
      %v3329 = vpop.permute.xlu0 %3328
      %3330 = vrot.lane.b32.xlu0 %v3271, 110
      %v3331 = vpop.permute.xlu0 %3330
      %3332 = vrot.lane.b32.xlu0 %v3272, 110
      %v3333 = vpop.permute.xlu0 %3332
      %v3334 = vsel %vm3306, %v3325, %v3327
      %v3335 = vsel %vm3306, %v3327, %v3329
      %v3336 = vsel %vm3306, %v3329, %v3331
      %v3337 = vsel %vm3306, %v3331, %v3333
      %v3342 = vadd.f32 %v3195, %v3334
      %v3343 = vadd.f32 %v3196, %v3335
      %v3344 = vadd.f32 %v3197, %v3336
      %v3345 = vadd.f32 %v3198, %v3337
      %3351 = vrot.lane.b32.xlu0 %v3277, 110
      %v3352 = vpop.permute.xlu0 %3351
      %3353 = vrot.lane.b32.xlu0 %v3278, 110
      %v3354 = vpop.permute.xlu0 %3353
      %3355 = vrot.lane.b32.xlu0 %v3279, 110
      %v3356 = vpop.permute.xlu0 %3355
      %3357 = vrot.lane.b32.xlu0 %v3280, 110
      %v3358 = vpop.permute.xlu0 %3357
      %3359 = vrot.lane.b32.xlu0 %v3281, 110
      %v3360 = vpop.permute.xlu0 %3359
      %v3361 = vsel %vm3306, %v3352, %v3354
      %v3362 = vsel %vm3306, %v3354, %v3356
      %v3363 = vsel %vm3306, %v3356, %v3358
      %v3364 = vsel %vm3306, %v3358, %v3360
      %v3369 = vadd.f32 %v3222, %v3361
      %v3370 = vadd.f32 %v3223, %v3362
      %v3371 = vadd.f32 %v3224, %v3363
      %v3372 = vadd.f32 %v3225, %v3364
      %3378 = vrot.lane.b32.xlu0 %v3286, 110
      %v3379 = vpop.permute.xlu0 %3378
      %3380 = vrot.lane.b32.xlu0 %v3287, 110
      %v3381 = vpop.permute.xlu0 %3380
      %3382 = vrot.lane.b32.xlu0 %v3288, 110
      %v3383 = vpop.permute.xlu0 %3382
      %3384 = vrot.lane.b32.xlu0 %v3289, 110
      %v3385 = vpop.permute.xlu0 %3384
      %3386 = vrot.lane.b32.xlu0 %v3290, 110
      %v3387 = vpop.permute.xlu0 %3386
      %v3388 = vsel %vm3306, %v3379, %v3381
      %v3389 = vsel %vm3306, %v3381, %v3383
      %v3390 = vsel %vm3306, %v3383, %v3385
      %v3391 = vsel %vm3306, %v3385, %v3387
      %v3396 = vadd.f32 %v3249, %v3388
      %v3397 = vadd.f32 %v3250, %v3389
      %v3398 = vadd.f32 %v3251, %v3390
      %v3399 = vadd.f32 %v3252, %v3391
      %v3400 = vld [vmem:[%s3 + $0x50] sm:$0x1f]
      %3402 = vset.pattern.permute.xlu0 0
      %3403 = vperm.xlu0 %3402, %v3400
      %v3404 = vpop.permute.xlu0 %3403
      %v3406 = vmul.f32 %v3404, %v1975
      %v3407 = vmul.f32 %v3404, %v1979
      %v3408 = vmul.f32 %v3404, %v1983
      %v3409 = vmul.f32 %v3404, %v1987
      %v3410 = vmul.f32 %v3404, %v2073
      %3411 = vset.pattern.permute.xlu0 1
      %3412 = vperm.xlu0 %3411, %v3400
      %v3413 = vpop.permute.xlu0 %3412
      %v3415 = vmul.f32 %v3413, %v1999
      %v3416 = vmul.f32 %v3413, %v2003
      %v3417 = vmul.f32 %v3413, %v2007
      %v3418 = vmul.f32 %v3413, %v2011
      %v3419 = vmul.f32 %v3413, %v2086
      %3420 = vset.pattern.permute.xlu0 2
      %3421 = vperm.xlu0 %3420, %v3400
      %v3422 = vpop.permute.xlu0 %3421
      %v3424 = vmul.f32 %v3422, %v2023
      %v3425 = vmul.f32 %v3422, %v2027
      %v3426 = vmul.f32 %v3422, %v2031
      %v3427 = vmul.f32 %v3422, %v2035
      %v3428 = vmul.f32 %v3422, %v2099
      %3429 = vset.pattern.permute.xlu0 3
      %3430 = vperm.xlu0 %3429, %v3400
      %v3431 = vpop.permute.xlu0 %3430
      %v3433 = vmul.f32 %v3431, %v2047
      %v3434 = vmul.f32 %v3431, %v2051
      %v3435 = vmul.f32 %v3431, %v2055
      %v3436 = vmul.f32 %v3431, %v2059
      %v3437 = vmul.f32 %v3431, %v2112
      %3443 = vrot.lane.b32.xlu0 %v3406, 100
      %v3444 = vpop.permute.xlu0 %3443
      %3445 = vrot.lane.b32.xlu0 %v3407, 100
      %v3446 = vpop.permute.xlu0 %3445
      %3447 = vrot.lane.b32.xlu0 %v3408, 100
      %v3448 = vpop.permute.xlu0 %3447
      %3449 = vrot.lane.b32.xlu0 %v3409, 100
      %v3450 = vpop.permute.xlu0 %3449
      %3451 = vrot.lane.b32.xlu0 %v3410, 100
      %v3452 = vpop.permute.xlu0 %3451
      %vm3453 = vcmask 818176
      %v3454 = vsel %vm3453, %v3444, %v3446
      %v3455 = vsel %vm3453, %v3446, %v3448
      %v3456 = vsel %vm3453, %v3448, %v3450
      %v3457 = vsel %vm3453, %v3450, %v3452
      %v3462 = vadd.f32 %v3315, %v3454
      %v3463 = vadd.f32 %v3316, %v3455
      %v3464 = vadd.f32 %v3317, %v3456
      %v3465 = vadd.f32 %v3318, %v3457
      %3471 = vrot.lane.b32.xlu0 %v3415, 100
      %v3472 = vpop.permute.xlu0 %3471
      %3473 = vrot.lane.b32.xlu0 %v3416, 100
      %v3474 = vpop.permute.xlu0 %3473
      %3475 = vrot.lane.b32.xlu0 %v3417, 100
      %v3476 = vpop.permute.xlu0 %3475
      %3477 = vrot.lane.b32.xlu0 %v3418, 100
      %v3478 = vpop.permute.xlu0 %3477
      %3479 = vrot.lane.b32.xlu0 %v3419, 100
      %v3480 = vpop.permute.xlu0 %3479
      %v3481 = vsel %vm3453, %v3472, %v3474
      %v3482 = vsel %vm3453, %v3474, %v3476
      %v3483 = vsel %vm3453, %v3476, %v3478
      %v3484 = vsel %vm3453, %v3478, %v3480
      %v3489 = vadd.f32 %v3342, %v3481
      %v3490 = vadd.f32 %v3343, %v3482
      %v3491 = vadd.f32 %v3344, %v3483
      %v3492 = vadd.f32 %v3345, %v3484
      %3498 = vrot.lane.b32.xlu0 %v3424, 100
      %v3499 = vpop.permute.xlu0 %3498
      %3500 = vrot.lane.b32.xlu0 %v3425, 100
      %v3501 = vpop.permute.xlu0 %3500
      %3502 = vrot.lane.b32.xlu0 %v3426, 100
      %v3503 = vpop.permute.xlu0 %3502
      %3504 = vrot.lane.b32.xlu0 %v3427, 100
      %v3505 = vpop.permute.xlu0 %3504
      %3506 = vrot.lane.b32.xlu0 %v3428, 100
      %v3507 = vpop.permute.xlu0 %3506
      %v3508 = vsel %vm3453, %v3499, %v3501
      %v3509 = vsel %vm3453, %v3501, %v3503
      %v3510 = vsel %vm3453, %v3503, %v3505
      %v3511 = vsel %vm3453, %v3505, %v3507
      %v3516 = vadd.f32 %v3369, %v3508
      %v3517 = vadd.f32 %v3370, %v3509
      %v3518 = vadd.f32 %v3371, %v3510
      %v3519 = vadd.f32 %v3372, %v3511
      %3525 = vrot.lane.b32.xlu0 %v3433, 100
      %v3526 = vpop.permute.xlu0 %3525
      %3527 = vrot.lane.b32.xlu0 %v3434, 100
      %v3528 = vpop.permute.xlu0 %3527
      %3529 = vrot.lane.b32.xlu0 %v3435, 100
      %v3530 = vpop.permute.xlu0 %3529
      %3531 = vrot.lane.b32.xlu0 %v3436, 100
      %v3532 = vpop.permute.xlu0 %3531
      %3533 = vrot.lane.b32.xlu0 %v3437, 100
      %v3534 = vpop.permute.xlu0 %3533
      %v3535 = vsel %vm3453, %v3526, %v3528
      %v3536 = vsel %vm3453, %v3528, %v3530
      %v3537 = vsel %vm3453, %v3530, %v3532
      %v3538 = vsel %vm3453, %v3532, %v3534
      %v3543 = vadd.f32 %v3396, %v3535
      %v3544 = vadd.f32 %v3397, %v3536
      %v3545 = vadd.f32 %v3398, %v3537
      %v3546 = vadd.f32 %v3399, %v3538
      %v3547 = vld [vmem:[%s3 + $0x58] sm:$0x1f]
      %3549 = vset.pattern.permute.xlu0 0
      %3550 = vperm.xlu0 %3549, %v3547
      %v3551 = vpop.permute.xlu0 %3550
      %v3553 = vmul.f32 %v3551, %v1975
      %v3554 = vmul.f32 %v3551, %v1979
      %v3555 = vmul.f32 %v3551, %v1983
      %v3556 = vmul.f32 %v3551, %v1987
      %v3557 = vmul.f32 %v3551, %v2073
      %3558 = vset.pattern.permute.xlu0 1
      %3559 = vperm.xlu0 %3558, %v3547
      %v3560 = vpop.permute.xlu0 %3559
      %v3562 = vmul.f32 %v3560, %v1999
      %v3563 = vmul.f32 %v3560, %v2003
      %v3564 = vmul.f32 %v3560, %v2007
      %v3565 = vmul.f32 %v3560, %v2011
      %v3566 = vmul.f32 %v3560, %v2086
      %3567 = vset.pattern.permute.xlu0 2
      %3568 = vperm.xlu0 %3567, %v3547
      %v3569 = vpop.permute.xlu0 %3568
      %v3571 = vmul.f32 %v3569, %v2023
      %v3572 = vmul.f32 %v3569, %v2027
      %v3573 = vmul.f32 %v3569, %v2031
      %v3574 = vmul.f32 %v3569, %v2035
      %v3575 = vmul.f32 %v3569, %v2099
      %3576 = vset.pattern.permute.xlu0 3
      %3577 = vperm.xlu0 %3576, %v3547
      %v3578 = vpop.permute.xlu0 %3577
      %v3580 = vmul.f32 %v3578, %v2047
      %v3581 = vmul.f32 %v3578, %v2051
      %v3582 = vmul.f32 %v3578, %v2055
      %v3583 = vmul.f32 %v3578, %v2059
      %v3584 = vmul.f32 %v3578, %v2112
      %3590 = vrot.lane.b32.xlu0 %v3553, 99
      %v3591 = vpop.permute.xlu0 %3590
      %3592 = vrot.lane.b32.xlu0 %v3554, 99
      %v3593 = vpop.permute.xlu0 %3592
      %3594 = vrot.lane.b32.xlu0 %v3555, 99
      %v3595 = vpop.permute.xlu0 %3594
      %3596 = vrot.lane.b32.xlu0 %v3556, 99
      %v3597 = vpop.permute.xlu0 %3596
      %3598 = vrot.lane.b32.xlu0 %v3557, 99
      %v3599 = vpop.permute.xlu0 %3598
      %vm3600 = vcmask 809984
      %v3601 = vsel %vm3600, %v3591, %v3593
      %v3602 = vsel %vm3600, %v3593, %v3595
      %v3603 = vsel %vm3600, %v3595, %v3597
      %v3604 = vsel %vm3600, %v3597, %v3599
      %v3609 = vadd.f32 %v3462, %v3601
      %v3610 = vadd.f32 %v3463, %v3602
      %v3611 = vadd.f32 %v3464, %v3603
      %v3612 = vadd.f32 %v3465, %v3604
      %3618 = vrot.lane.b32.xlu0 %v3562, 99
      %v3619 = vpop.permute.xlu0 %3618
      %3620 = vrot.lane.b32.xlu0 %v3563, 99
      %v3621 = vpop.permute.xlu0 %3620
      %3622 = vrot.lane.b32.xlu0 %v3564, 99
      %v3623 = vpop.permute.xlu0 %3622
      %3624 = vrot.lane.b32.xlu0 %v3565, 99
      %v3625 = vpop.permute.xlu0 %3624
      %3626 = vrot.lane.b32.xlu0 %v3566, 99
      %v3627 = vpop.permute.xlu0 %3626
      %v3628 = vsel %vm3600, %v3619, %v3621
      %v3629 = vsel %vm3600, %v3621, %v3623
      %v3630 = vsel %vm3600, %v3623, %v3625
      %v3631 = vsel %vm3600, %v3625, %v3627
      %v3636 = vadd.f32 %v3489, %v3628
      %v3637 = vadd.f32 %v3490, %v3629
      %v3638 = vadd.f32 %v3491, %v3630
      %v3639 = vadd.f32 %v3492, %v3631
      %3645 = vrot.lane.b32.xlu0 %v3571, 99
      %v3646 = vpop.permute.xlu0 %3645
      %3647 = vrot.lane.b32.xlu0 %v3572, 99
      %v3648 = vpop.permute.xlu0 %3647
      %3649 = vrot.lane.b32.xlu0 %v3573, 99
      %v3650 = vpop.permute.xlu0 %3649
      %3651 = vrot.lane.b32.xlu0 %v3574, 99
      %v3652 = vpop.permute.xlu0 %3651
      %3653 = vrot.lane.b32.xlu0 %v3575, 99
      %v3654 = vpop.permute.xlu0 %3653
      %v3655 = vsel %vm3600, %v3646, %v3648
      %v3656 = vsel %vm3600, %v3648, %v3650
      %v3657 = vsel %vm3600, %v3650, %v3652
      %v3658 = vsel %vm3600, %v3652, %v3654
      %v3663 = vadd.f32 %v3516, %v3655
      %v3664 = vadd.f32 %v3517, %v3656
      %v3665 = vadd.f32 %v3518, %v3657
      %v3666 = vadd.f32 %v3519, %v3658
      %3672 = vrot.lane.b32.xlu0 %v3580, 99
      %v3673 = vpop.permute.xlu0 %3672
      %3674 = vrot.lane.b32.xlu0 %v3581, 99
      %v3675 = vpop.permute.xlu0 %3674
      %3676 = vrot.lane.b32.xlu0 %v3582, 99
      %v3677 = vpop.permute.xlu0 %3676
      %3678 = vrot.lane.b32.xlu0 %v3583, 99
      %v3679 = vpop.permute.xlu0 %3678
      %3680 = vrot.lane.b32.xlu0 %v3584, 99
      %v3681 = vpop.permute.xlu0 %3680
      %v3682 = vsel %vm3600, %v3673, %v3675
      %v3683 = vsel %vm3600, %v3675, %v3677
      %v3684 = vsel %vm3600, %v3677, %v3679
      %v3685 = vsel %vm3600, %v3679, %v3681
      %v3690 = vadd.f32 %v3543, %v3682
      %v3691 = vadd.f32 %v3544, %v3683
      %v3692 = vadd.f32 %v3545, %v3684
      %v3693 = vadd.f32 %v3546, %v3685
      %v3694 = vld [vmem:[%s3 + $0x60] sm:$0x1f]
      %3696 = vset.pattern.permute.xlu0 0
      %3697 = vperm.xlu0 %3696, %v3694
      %v3698 = vpop.permute.xlu0 %3697
      %v3700 = vmul.f32 %v3698, %v1975
      %v3701 = vmul.f32 %v3698, %v1979
      %v3702 = vmul.f32 %v3698, %v1983
      %v3703 = vmul.f32 %v3698, %v1987
      %v3704 = vmul.f32 %v3698, %v2073
      %3705 = vset.pattern.permute.xlu0 1
      %3706 = vperm.xlu0 %3705, %v3694
      %v3707 = vpop.permute.xlu0 %3706
      %v3709 = vmul.f32 %v3707, %v1999
      %v3710 = vmul.f32 %v3707, %v2003
      %v3711 = vmul.f32 %v3707, %v2007
      %v3712 = vmul.f32 %v3707, %v2011
      %v3713 = vmul.f32 %v3707, %v2086
      %3714 = vset.pattern.permute.xlu0 2
      %3715 = vperm.xlu0 %3714, %v3694
      %v3716 = vpop.permute.xlu0 %3715
      %v3718 = vmul.f32 %v3716, %v2023
      %v3719 = vmul.f32 %v3716, %v2027
      %v3720 = vmul.f32 %v3716, %v2031
      %v3721 = vmul.f32 %v3716, %v2035
      %v3722 = vmul.f32 %v3716, %v2099
      %3723 = vset.pattern.permute.xlu0 3
      %3724 = vperm.xlu0 %3723, %v3694
      %v3725 = vpop.permute.xlu0 %3724
      %v3727 = vmul.f32 %v3725, %v2047
      %v3728 = vmul.f32 %v3725, %v2051
      %v3729 = vmul.f32 %v3725, %v2055
      %v3730 = vmul.f32 %v3725, %v2059
      %v3731 = vmul.f32 %v3725, %v2112
      %3737 = vrot.lane.b32.xlu0 %v3700, 98
      %v3738 = vpop.permute.xlu0 %3737
      %3739 = vrot.lane.b32.xlu0 %v3701, 98
      %v3740 = vpop.permute.xlu0 %3739
      %3741 = vrot.lane.b32.xlu0 %v3702, 98
      %v3742 = vpop.permute.xlu0 %3741
      %3743 = vrot.lane.b32.xlu0 %v3703, 98
      %v3744 = vpop.permute.xlu0 %3743
      %3745 = vrot.lane.b32.xlu0 %v3704, 98
      %v3746 = vpop.permute.xlu0 %3745
      %vm3747 = vcmask 801792
      %v3748 = vsel %vm3747, %v3738, %v3740
      %v3749 = vsel %vm3747, %v3740, %v3742
      %v3750 = vsel %vm3747, %v3742, %v3744
      %v3751 = vsel %vm3747, %v3744, %v3746
      %v3756 = vadd.f32 %v3609, %v3748
      %v3757 = vadd.f32 %v3610, %v3749
      %v3758 = vadd.f32 %v3611, %v3750
      %v3759 = vadd.f32 %v3612, %v3751
      %3765 = vrot.lane.b32.xlu0 %v3709, 98
      %v3766 = vpop.permute.xlu0 %3765
      %3767 = vrot.lane.b32.xlu0 %v3710, 98
      %v3768 = vpop.permute.xlu0 %3767
      %3769 = vrot.lane.b32.xlu0 %v3711, 98
      %v3770 = vpop.permute.xlu0 %3769
      %3771 = vrot.lane.b32.xlu0 %v3712, 98
      %v3772 = vpop.permute.xlu0 %3771
      %3773 = vrot.lane.b32.xlu0 %v3713, 98
      %v3774 = vpop.permute.xlu0 %3773
      %v3775 = vsel %vm3747, %v3766, %v3768
      %v3776 = vsel %vm3747, %v3768, %v3770
      %v3777 = vsel %vm3747, %v3770, %v3772
      %v3778 = vsel %vm3747, %v3772, %v3774
      %v3783 = vadd.f32 %v3636, %v3775
      %v3784 = vadd.f32 %v3637, %v3776
      %v3785 = vadd.f32 %v3638, %v3777
      %v3786 = vadd.f32 %v3639, %v3778
      %3792 = vrot.lane.b32.xlu0 %v3718, 98
      %v3793 = vpop.permute.xlu0 %3792
      %3794 = vrot.lane.b32.xlu0 %v3719, 98
      %v3795 = vpop.permute.xlu0 %3794
      %3796 = vrot.lane.b32.xlu0 %v3720, 98
      %v3797 = vpop.permute.xlu0 %3796
      %3798 = vrot.lane.b32.xlu0 %v3721, 98
      %v3799 = vpop.permute.xlu0 %3798
      %3800 = vrot.lane.b32.xlu0 %v3722, 98
      %v3801 = vpop.permute.xlu0 %3800
      %v3802 = vsel %vm3747, %v3793, %v3795
      %v3803 = vsel %vm3747, %v3795, %v3797
      %v3804 = vsel %vm3747, %v3797, %v3799
      %v3805 = vsel %vm3747, %v3799, %v3801
      %v3810 = vadd.f32 %v3663, %v3802
      %v3811 = vadd.f32 %v3664, %v3803
      %v3812 = vadd.f32 %v3665, %v3804
      %v3813 = vadd.f32 %v3666, %v3805
      %3819 = vrot.lane.b32.xlu0 %v3727, 98
      %v3820 = vpop.permute.xlu0 %3819
      %3821 = vrot.lane.b32.xlu0 %v3728, 98
      %v3822 = vpop.permute.xlu0 %3821
      %3823 = vrot.lane.b32.xlu0 %v3729, 98
      %v3824 = vpop.permute.xlu0 %3823
      %3825 = vrot.lane.b32.xlu0 %v3730, 98
      %v3826 = vpop.permute.xlu0 %3825
      %3827 = vrot.lane.b32.xlu0 %v3731, 98
      %v3828 = vpop.permute.xlu0 %3827
      %v3829 = vsel %vm3747, %v3820, %v3822
      %v3830 = vsel %vm3747, %v3822, %v3824
      %v3831 = vsel %vm3747, %v3824, %v3826
      %v3832 = vsel %vm3747, %v3826, %v3828
      %v3837 = vadd.f32 %v3690, %v3829
      %v3838 = vadd.f32 %v3691, %v3830
      %v3839 = vadd.f32 %v3692, %v3831
      %v3840 = vadd.f32 %v3693, %v3832
      %v3841 = vld [vmem:[%s3 + $0x68] sm:$0x1f]
      %3843 = vset.pattern.permute.xlu0 0
      %3844 = vperm.xlu0 %3843, %v3841
      %v3845 = vpop.permute.xlu0 %3844
      %v3847 = vmul.f32 %v3845, %v1975
      %v3848 = vmul.f32 %v3845, %v1979
      %v3849 = vmul.f32 %v3845, %v1983
      %v3850 = vmul.f32 %v3845, %v1987
      %v3851 = vmul.f32 %v3845, %v2073
      %3852 = vset.pattern.permute.xlu0 1
      %3853 = vperm.xlu0 %3852, %v3841
      %v3854 = vpop.permute.xlu0 %3853
      %v3856 = vmul.f32 %v3854, %v1999
      %v3857 = vmul.f32 %v3854, %v2003
      %v3858 = vmul.f32 %v3854, %v2007
      %v3859 = vmul.f32 %v3854, %v2011
      %v3860 = vmul.f32 %v3854, %v2086
      %3861 = vset.pattern.permute.xlu0 2
      %3862 = vperm.xlu0 %3861, %v3841
      %v3863 = vpop.permute.xlu0 %3862
      %v3865 = vmul.f32 %v3863, %v2023
      %v3866 = vmul.f32 %v3863, %v2027
      %v3867 = vmul.f32 %v3863, %v2031
      %v3868 = vmul.f32 %v3863, %v2035
      %v3869 = vmul.f32 %v3863, %v2099
      %3870 = vset.pattern.permute.xlu0 3
      %3871 = vperm.xlu0 %3870, %v3841
      %v3872 = vpop.permute.xlu0 %3871
      %v3874 = vmul.f32 %v3872, %v2047
      %v3875 = vmul.f32 %v3872, %v2051
      %v3876 = vmul.f32 %v3872, %v2055
      %v3877 = vmul.f32 %v3872, %v2059
      %v3878 = vmul.f32 %v3872, %v2112
      %3884 = vrot.lane.b32.xlu0 %v3847, 97
      %v3885 = vpop.permute.xlu0 %3884
      %3886 = vrot.lane.b32.xlu0 %v3848, 97
      %v3887 = vpop.permute.xlu0 %3886
      %3888 = vrot.lane.b32.xlu0 %v3849, 97
      %v3889 = vpop.permute.xlu0 %3888
      %3890 = vrot.lane.b32.xlu0 %v3850, 97
      %v3891 = vpop.permute.xlu0 %3890
      %3892 = vrot.lane.b32.xlu0 %v3851, 97
      %v3893 = vpop.permute.xlu0 %3892
      %vm3894 = vcmask 793600
      %v3895 = vsel %vm3894, %v3885, %v3887
      %v3896 = vsel %vm3894, %v3887, %v3889
      %v3897 = vsel %vm3894, %v3889, %v3891
      %v3898 = vsel %vm3894, %v3891, %v3893
      %v3903 = vadd.f32 %v3756, %v3895
      %v3904 = vadd.f32 %v3757, %v3896
      %v3905 = vadd.f32 %v3758, %v3897
      %v3906 = vadd.f32 %v3759, %v3898
      %3912 = vrot.lane.b32.xlu0 %v3856, 97
      %v3913 = vpop.permute.xlu0 %3912
      %3914 = vrot.lane.b32.xlu0 %v3857, 97
      %v3915 = vpop.permute.xlu0 %3914
      %3916 = vrot.lane.b32.xlu0 %v3858, 97
      %v3917 = vpop.permute.xlu0 %3916
      %3918 = vrot.lane.b32.xlu0 %v3859, 97
      %v3919 = vpop.permute.xlu0 %3918
      %3920 = vrot.lane.b32.xlu0 %v3860, 97
      %v3921 = vpop.permute.xlu0 %3920
      %v3922 = vsel %vm3894, %v3913, %v3915
      %v3923 = vsel %vm3894, %v3915, %v3917
      %v3924 = vsel %vm3894, %v3917, %v3919
      %v3925 = vsel %vm3894, %v3919, %v3921
      %v3930 = vadd.f32 %v3783, %v3922
      %v3931 = vadd.f32 %v3784, %v3923
      %v3932 = vadd.f32 %v3785, %v3924
      %v3933 = vadd.f32 %v3786, %v3925
      %3939 = vrot.lane.b32.xlu0 %v3865, 97
      %v3940 = vpop.permute.xlu0 %3939
      %3941 = vrot.lane.b32.xlu0 %v3866, 97
      %v3942 = vpop.permute.xlu0 %3941
      %3943 = vrot.lane.b32.xlu0 %v3867, 97
      %v3944 = vpop.permute.xlu0 %3943
      %3945 = vrot.lane.b32.xlu0 %v3868, 97
      %v3946 = vpop.permute.xlu0 %3945
      %3947 = vrot.lane.b32.xlu0 %v3869, 97
      %v3948 = vpop.permute.xlu0 %3947
      %v3949 = vsel %vm3894, %v3940, %v3942
      %v3950 = vsel %vm3894, %v3942, %v3944
      %v3951 = vsel %vm3894, %v3944, %v3946
      %v3952 = vsel %vm3894, %v3946, %v3948
      %v3957 = vadd.f32 %v3810, %v3949
      %v3958 = vadd.f32 %v3811, %v3950
      %v3959 = vadd.f32 %v3812, %v3951
      %v3960 = vadd.f32 %v3813, %v3952
      %3966 = vrot.lane.b32.xlu0 %v3874, 97
      %v3967 = vpop.permute.xlu0 %3966
      %3968 = vrot.lane.b32.xlu0 %v3875, 97
      %v3969 = vpop.permute.xlu0 %3968
      %3970 = vrot.lane.b32.xlu0 %v3876, 97
      %v3971 = vpop.permute.xlu0 %3970
      %3972 = vrot.lane.b32.xlu0 %v3877, 97
      %v3973 = vpop.permute.xlu0 %3972
      %3974 = vrot.lane.b32.xlu0 %v3878, 97
      %v3975 = vpop.permute.xlu0 %3974
      %v3976 = vsel %vm3894, %v3967, %v3969
      %v3977 = vsel %vm3894, %v3969, %v3971
      %v3978 = vsel %vm3894, %v3971, %v3973
      %v3979 = vsel %vm3894, %v3973, %v3975
      %v3984 = vadd.f32 %v3837, %v3976
      %v3985 = vadd.f32 %v3838, %v3977
      %v3986 = vadd.f32 %v3839, %v3978
      %v3987 = vadd.f32 %v3840, %v3979
      %v3988 = vld [vmem:[%s3 + $0x70] sm:$0x1f]
      %3990 = vset.pattern.permute.xlu0 0
      %3991 = vperm.xlu0 %3990, %v3988
      %v3992 = vpop.permute.xlu0 %3991
      %v3994 = vmul.f32 %v3992, %v1975
      %v3995 = vmul.f32 %v3992, %v1979
      %v3996 = vmul.f32 %v3992, %v1983
      %v3997 = vmul.f32 %v3992, %v1987
      %v3998 = vmul.f32 %v3992, %v2073
      %3999 = vset.pattern.permute.xlu0 1
      %4000 = vperm.xlu0 %3999, %v3988
      %v4001 = vpop.permute.xlu0 %4000
      %v4003 = vmul.f32 %v4001, %v1999
      %v4004 = vmul.f32 %v4001, %v2003
      %v4005 = vmul.f32 %v4001, %v2007
      %v4006 = vmul.f32 %v4001, %v2011
      %v4007 = vmul.f32 %v4001, %v2086
      %4008 = vset.pattern.permute.xlu0 2
      %4009 = vperm.xlu0 %4008, %v3988
      %v4010 = vpop.permute.xlu0 %4009
      %v4012 = vmul.f32 %v4010, %v2023
      %v4013 = vmul.f32 %v4010, %v2027
      %v4014 = vmul.f32 %v4010, %v2031
      %v4015 = vmul.f32 %v4010, %v2035
      %v4016 = vmul.f32 %v4010, %v2099
      %4017 = vset.pattern.permute.xlu0 3
      %4018 = vperm.xlu0 %4017, %v3988
      %v4019 = vpop.permute.xlu0 %4018
      %v4021 = vmul.f32 %v4019, %v2047
      %v4022 = vmul.f32 %v4019, %v2051
      %v4023 = vmul.f32 %v4019, %v2055
      %v4024 = vmul.f32 %v4019, %v2059
      %v4025 = vmul.f32 %v4019, %v2112
      %4031 = vrot.lane.b32.xlu0 %v3994, 96
      %v4032 = vpop.permute.xlu0 %4031
      %4033 = vrot.lane.b32.xlu0 %v3995, 96
      %v4034 = vpop.permute.xlu0 %4033
      %4035 = vrot.lane.b32.xlu0 %v3996, 96
      %v4036 = vpop.permute.xlu0 %4035
      %4037 = vrot.lane.b32.xlu0 %v3997, 96
      %v4038 = vpop.permute.xlu0 %4037
      %4039 = vrot.lane.b32.xlu0 %v3998, 96
      %v4040 = vpop.permute.xlu0 %4039
      %vm4041 = vcmask 785408
      %v4042 = vsel %vm4041, %v4032, %v4034
      %v4043 = vsel %vm4041, %v4034, %v4036
      %v4044 = vsel %vm4041, %v4036, %v4038
      %v4045 = vsel %vm4041, %v4038, %v4040
      %v4050 = vadd.f32 %v3903, %v4042
      %v4051 = vadd.f32 %v3904, %v4043
      %v4052 = vadd.f32 %v3905, %v4044
      %v4053 = vadd.f32 %v3906, %v4045
      %4059 = vrot.lane.b32.xlu0 %v4003, 96
      %v4060 = vpop.permute.xlu0 %4059
      %4061 = vrot.lane.b32.xlu0 %v4004, 96
      %v4062 = vpop.permute.xlu0 %4061
      %4063 = vrot.lane.b32.xlu0 %v4005, 96
      %v4064 = vpop.permute.xlu0 %4063
      %4065 = vrot.lane.b32.xlu0 %v4006, 96
      %v4066 = vpop.permute.xlu0 %4065
      %4067 = vrot.lane.b32.xlu0 %v4007, 96
      %v4068 = vpop.permute.xlu0 %4067
      %v4069 = vsel %vm4041, %v4060, %v4062
      %v4070 = vsel %vm4041, %v4062, %v4064
      %v4071 = vsel %vm4041, %v4064, %v4066
      %v4072 = vsel %vm4041, %v4066, %v4068
      %v4077 = vadd.f32 %v3930, %v4069
      %v4078 = vadd.f32 %v3931, %v4070
      %v4079 = vadd.f32 %v3932, %v4071
      %v4080 = vadd.f32 %v3933, %v4072
      %4086 = vrot.lane.b32.xlu0 %v4012, 96
      %v4087 = vpop.permute.xlu0 %4086
      %4088 = vrot.lane.b32.xlu0 %v4013, 96
      %v4089 = vpop.permute.xlu0 %4088
      %4090 = vrot.lane.b32.xlu0 %v4014, 96
      %v4091 = vpop.permute.xlu0 %4090
      %4092 = vrot.lane.b32.xlu0 %v4015, 96
      %v4093 = vpop.permute.xlu0 %4092
      %4094 = vrot.lane.b32.xlu0 %v4016, 96
      %v4095 = vpop.permute.xlu0 %4094
      %v4096 = vsel %vm4041, %v4087, %v4089
      %v4097 = vsel %vm4041, %v4089, %v4091
      %v4098 = vsel %vm4041, %v4091, %v4093
      %v4099 = vsel %vm4041, %v4093, %v4095
      %v4104 = vadd.f32 %v3957, %v4096
      %v4105 = vadd.f32 %v3958, %v4097
      %v4106 = vadd.f32 %v3959, %v4098
      %v4107 = vadd.f32 %v3960, %v4099
      %4113 = vrot.lane.b32.xlu0 %v4021, 96
      %v4114 = vpop.permute.xlu0 %4113
      %4115 = vrot.lane.b32.xlu0 %v4022, 96
      %v4116 = vpop.permute.xlu0 %4115
      %4117 = vrot.lane.b32.xlu0 %v4023, 96
      %v4118 = vpop.permute.xlu0 %4117
      %4119 = vrot.lane.b32.xlu0 %v4024, 96
      %v4120 = vpop.permute.xlu0 %4119
      %4121 = vrot.lane.b32.xlu0 %v4025, 96
      %v4122 = vpop.permute.xlu0 %4121
      %v4123 = vsel %vm4041, %v4114, %v4116
      %v4124 = vsel %vm4041, %v4116, %v4118
      %v4125 = vsel %vm4041, %v4118, %v4120
      %v4126 = vsel %vm4041, %v4120, %v4122
      %v4131 = vadd.f32 %v3984, %v4123
      %v4132 = vadd.f32 %v3985, %v4124
      %v4133 = vadd.f32 %v3986, %v4125
      %v4134 = vadd.f32 %v3987, %v4126
      %v4135 = vld [vmem:[%s3 + $0x78] sm:$0x1f]
      %4137 = vset.pattern.permute.xlu0 0
      %4138 = vperm.xlu0 %4137, %v4135
      %v4139 = vpop.permute.xlu0 %4138
      %v4141 = vmul.f32 %v4139, %v1975
      %v4142 = vmul.f32 %v4139, %v1979
      %v4143 = vmul.f32 %v4139, %v1983
      %v4144 = vmul.f32 %v4139, %v1987
      %v4145 = vmul.f32 %v4139, %v2073
      %4146 = vset.pattern.permute.xlu0 1
      %4147 = vperm.xlu0 %4146, %v4135
      %v4148 = vpop.permute.xlu0 %4147
      %v4150 = vmul.f32 %v4148, %v1999
      %v4151 = vmul.f32 %v4148, %v2003
      %v4152 = vmul.f32 %v4148, %v2007
      %v4153 = vmul.f32 %v4148, %v2011
      %v4154 = vmul.f32 %v4148, %v2086
      %4155 = vset.pattern.permute.xlu0 2
      %4156 = vperm.xlu0 %4155, %v4135
      %v4157 = vpop.permute.xlu0 %4156
      %v4159 = vmul.f32 %v4157, %v2023
      %v4160 = vmul.f32 %v4157, %v2027
      %v4161 = vmul.f32 %v4157, %v2031
      %v4162 = vmul.f32 %v4157, %v2035
      %v4163 = vmul.f32 %v4157, %v2099
      %4164 = vset.pattern.permute.xlu0 3
      %4165 = vperm.xlu0 %4164, %v4135
      %v4166 = vpop.permute.xlu0 %4165
      %v4168 = vmul.f32 %v4166, %v2047
      %v4169 = vmul.f32 %v4166, %v2051
      %v4170 = vmul.f32 %v4166, %v2055
      %v4171 = vmul.f32 %v4166, %v2059
      %v4172 = vmul.f32 %v4166, %v2112
      %4178 = vrot.lane.b32.xlu0 %v4141, 86
      %v4179 = vpop.permute.xlu0 %4178
      %4180 = vrot.lane.b32.xlu0 %v4142, 86
      %v4181 = vpop.permute.xlu0 %4180
      %4182 = vrot.lane.b32.xlu0 %v4143, 86
      %v4183 = vpop.permute.xlu0 %4182
      %4184 = vrot.lane.b32.xlu0 %v4144, 86
      %v4185 = vpop.permute.xlu0 %4184
      %4186 = vrot.lane.b32.xlu0 %v4145, 86
      %v4187 = vpop.permute.xlu0 %4186
      %vm4188 = vcmask 703488
      %v4189 = vsel %vm4188, %v4179, %v4181
      %v4190 = vsel %vm4188, %v4181, %v4183
      %v4191 = vsel %vm4188, %v4183, %v4185
      %v4192 = vsel %vm4188, %v4185, %v4187
      %v4197 = vadd.f32 %v4050, %v4189
      %v4198 = vadd.f32 %v4051, %v4190
      %v4199 = vadd.f32 %v4052, %v4191
      %v4200 = vadd.f32 %v4053, %v4192
      %4206 = vrot.lane.b32.xlu0 %v4150, 86
      %v4207 = vpop.permute.xlu0 %4206
      %4208 = vrot.lane.b32.xlu0 %v4151, 86
      %v4209 = vpop.permute.xlu0 %4208
      %4210 = vrot.lane.b32.xlu0 %v4152, 86
      %v4211 = vpop.permute.xlu0 %4210
      %4212 = vrot.lane.b32.xlu0 %v4153, 86
      %v4213 = vpop.permute.xlu0 %4212
      %4214 = vrot.lane.b32.xlu0 %v4154, 86
      %v4215 = vpop.permute.xlu0 %4214
      %v4216 = vsel %vm4188, %v4207, %v4209
      %v4217 = vsel %vm4188, %v4209, %v4211
      %v4218 = vsel %vm4188, %v4211, %v4213
      %v4219 = vsel %vm4188, %v4213, %v4215
      %v4224 = vadd.f32 %v4077, %v4216
      %v4225 = vadd.f32 %v4078, %v4217
      %v4226 = vadd.f32 %v4079, %v4218
      %v4227 = vadd.f32 %v4080, %v4219
      %4233 = vrot.lane.b32.xlu0 %v4159, 86
      %v4234 = vpop.permute.xlu0 %4233
      %4235 = vrot.lane.b32.xlu0 %v4160, 86
      %v4236 = vpop.permute.xlu0 %4235
      %4237 = vrot.lane.b32.xlu0 %v4161, 86
      %v4238 = vpop.permute.xlu0 %4237
      %4239 = vrot.lane.b32.xlu0 %v4162, 86
      %v4240 = vpop.permute.xlu0 %4239
      %4241 = vrot.lane.b32.xlu0 %v4163, 86
      %v4242 = vpop.permute.xlu0 %4241
      %v4243 = vsel %vm4188, %v4234, %v4236
      %v4244 = vsel %vm4188, %v4236, %v4238
      %v4245 = vsel %vm4188, %v4238, %v4240
      %v4246 = vsel %vm4188, %v4240, %v4242
      %v4251 = vadd.f32 %v4104, %v4243
      %v4252 = vadd.f32 %v4105, %v4244
      %v4253 = vadd.f32 %v4106, %v4245
      %v4254 = vadd.f32 %v4107, %v4246
      %4260 = vrot.lane.b32.xlu0 %v4168, 86
      %v4261 = vpop.permute.xlu0 %4260
      %4262 = vrot.lane.b32.xlu0 %v4169, 86
      %v4263 = vpop.permute.xlu0 %4262
      %4264 = vrot.lane.b32.xlu0 %v4170, 86
      %v4265 = vpop.permute.xlu0 %4264
      %4266 = vrot.lane.b32.xlu0 %v4171, 86
      %v4267 = vpop.permute.xlu0 %4266
      %4268 = vrot.lane.b32.xlu0 %v4172, 86
      %v4269 = vpop.permute.xlu0 %4268
      %v4270 = vsel %vm4188, %v4261, %v4263
      %v4271 = vsel %vm4188, %v4263, %v4265
      %v4272 = vsel %vm4188, %v4265, %v4267
      %v4273 = vsel %vm4188, %v4267, %v4269
      %v4278 = vadd.f32 %v4131, %v4270
      %v4279 = vadd.f32 %v4132, %v4271
      %v4280 = vadd.f32 %v4133, %v4272
      %v4281 = vadd.f32 %v4134, %v4273
      %v4282 = vld [vmem:[%s3 + $0x80] sm:$0x1f]
      %4284 = vset.pattern.permute.xlu0 0
      %4285 = vperm.xlu0 %4284, %v4282
      %v4286 = vpop.permute.xlu0 %4285
      %v4288 = vmul.f32 %v4286, %v1975
      %v4289 = vmul.f32 %v4286, %v1979
      %v4290 = vmul.f32 %v4286, %v1983
      %v4291 = vmul.f32 %v4286, %v1987
      %v4292 = vmul.f32 %v4286, %v2073
      %4293 = vset.pattern.permute.xlu0 1
      %4294 = vperm.xlu0 %4293, %v4282
      %v4295 = vpop.permute.xlu0 %4294
      %v4297 = vmul.f32 %v4295, %v1999
      %v4298 = vmul.f32 %v4295, %v2003
      %v4299 = vmul.f32 %v4295, %v2007
      %v4300 = vmul.f32 %v4295, %v2011
      %v4301 = vmul.f32 %v4295, %v2086
      %4302 = vset.pattern.permute.xlu0 2
      %4303 = vperm.xlu0 %4302, %v4282
      %v4304 = vpop.permute.xlu0 %4303
      %v4306 = vmul.f32 %v4304, %v2023
      %v4307 = vmul.f32 %v4304, %v2027
      %v4308 = vmul.f32 %v4304, %v2031
      %v4309 = vmul.f32 %v4304, %v2035
      %v4310 = vmul.f32 %v4304, %v2099
      %4311 = vset.pattern.permute.xlu0 3
      %4312 = vperm.xlu0 %4311, %v4282
      %v4313 = vpop.permute.xlu0 %4312
      %v4315 = vmul.f32 %v4313, %v2047
      %v4316 = vmul.f32 %v4313, %v2051
      %v4317 = vmul.f32 %v4313, %v2055
      %v4318 = vmul.f32 %v4313, %v2059
      %v4319 = vmul.f32 %v4313, %v2112
      %4325 = vrot.lane.b32.xlu0 %v4288, 85
      %v4326 = vpop.permute.xlu0 %4325
      %4327 = vrot.lane.b32.xlu0 %v4289, 85
      %v4328 = vpop.permute.xlu0 %4327
      %4329 = vrot.lane.b32.xlu0 %v4290, 85
      %v4330 = vpop.permute.xlu0 %4329
      %4331 = vrot.lane.b32.xlu0 %v4291, 85
      %v4332 = vpop.permute.xlu0 %4331
      %4333 = vrot.lane.b32.xlu0 %v4292, 85
      %v4334 = vpop.permute.xlu0 %4333
      %vm4335 = vcmask 695296
      %v4336 = vsel %vm4335, %v4326, %v4328
      %v4337 = vsel %vm4335, %v4328, %v4330
      %v4338 = vsel %vm4335, %v4330, %v4332
      %v4339 = vsel %vm4335, %v4332, %v4334
      %v4344 = vadd.f32 %v4197, %v4336
      %v4345 = vadd.f32 %v4198, %v4337
      %v4346 = vadd.f32 %v4199, %v4338
      %v4347 = vadd.f32 %v4200, %v4339
      %4353 = vrot.lane.b32.xlu0 %v4297, 85
      %v4354 = vpop.permute.xlu0 %4353
      %4355 = vrot.lane.b32.xlu0 %v4298, 85
      %v4356 = vpop.permute.xlu0 %4355
      %4357 = vrot.lane.b32.xlu0 %v4299, 85
      %v4358 = vpop.permute.xlu0 %4357
      %4359 = vrot.lane.b32.xlu0 %v4300, 85
      %v4360 = vpop.permute.xlu0 %4359
      %4361 = vrot.lane.b32.xlu0 %v4301, 85
      %v4362 = vpop.permute.xlu0 %4361
      %v4363 = vsel %vm4335, %v4354, %v4356
      %v4364 = vsel %vm4335, %v4356, %v4358
      %v4365 = vsel %vm4335, %v4358, %v4360
      %v4366 = vsel %vm4335, %v4360, %v4362
      %v4371 = vadd.f32 %v4224, %v4363
      %v4372 = vadd.f32 %v4225, %v4364
      %v4373 = vadd.f32 %v4226, %v4365
      %v4374 = vadd.f32 %v4227, %v4366
      %4380 = vrot.lane.b32.xlu0 %v4306, 85
      %v4381 = vpop.permute.xlu0 %4380
      %4382 = vrot.lane.b32.xlu0 %v4307, 85
      %v4383 = vpop.permute.xlu0 %4382
      %4384 = vrot.lane.b32.xlu0 %v4308, 85
      %v4385 = vpop.permute.xlu0 %4384
      %4386 = vrot.lane.b32.xlu0 %v4309, 85
      %v4387 = vpop.permute.xlu0 %4386
      %4388 = vrot.lane.b32.xlu0 %v4310, 85
      %v4389 = vpop.permute.xlu0 %4388
      %v4390 = vsel %vm4335, %v4381, %v4383
      %v4391 = vsel %vm4335, %v4383, %v4385
      %v4392 = vsel %vm4335, %v4385, %v4387
      %v4393 = vsel %vm4335, %v4387, %v4389
      %v4398 = vadd.f32 %v4251, %v4390
      %v4399 = vadd.f32 %v4252, %v4391
      %v4400 = vadd.f32 %v4253, %v4392
      %v4401 = vadd.f32 %v4254, %v4393
      %4407 = vrot.lane.b32.xlu0 %v4315, 85
      %v4408 = vpop.permute.xlu0 %4407
      %4409 = vrot.lane.b32.xlu0 %v4316, 85
      %v4410 = vpop.permute.xlu0 %4409
      %4411 = vrot.lane.b32.xlu0 %v4317, 85
      %v4412 = vpop.permute.xlu0 %4411
      %4413 = vrot.lane.b32.xlu0 %v4318, 85
      %v4414 = vpop.permute.xlu0 %4413
      %4415 = vrot.lane.b32.xlu0 %v4319, 85
      %v4416 = vpop.permute.xlu0 %4415
      %v4417 = vsel %vm4335, %v4408, %v4410
      %v4418 = vsel %vm4335, %v4410, %v4412
      %v4419 = vsel %vm4335, %v4412, %v4414
      %v4420 = vsel %vm4335, %v4414, %v4416
      %v4425 = vadd.f32 %v4278, %v4417
      %v4426 = vadd.f32 %v4279, %v4418
      %v4427 = vadd.f32 %v4280, %v4419
      %v4428 = vadd.f32 %v4281, %v4420
      %v4429 = vld [vmem:[%s3 + $0x88] sm:$0x1f]
      %4431 = vset.pattern.permute.xlu0 0
      %4432 = vperm.xlu0 %4431, %v4429
      %v4433 = vpop.permute.xlu0 %4432
      %v4435 = vmul.f32 %v4433, %v1975
      %v4436 = vmul.f32 %v4433, %v1979
      %v4437 = vmul.f32 %v4433, %v1983
      %v4438 = vmul.f32 %v4433, %v1987
      %v4439 = vmul.f32 %v4433, %v2073
      %4440 = vset.pattern.permute.xlu0 1
      %4441 = vperm.xlu0 %4440, %v4429
      %v4442 = vpop.permute.xlu0 %4441
      %v4444 = vmul.f32 %v4442, %v1999
      %v4445 = vmul.f32 %v4442, %v2003
      %v4446 = vmul.f32 %v4442, %v2007
      %v4447 = vmul.f32 %v4442, %v2011
      %v4448 = vmul.f32 %v4442, %v2086
      %4449 = vset.pattern.permute.xlu0 2
      %4450 = vperm.xlu0 %4449, %v4429
      %v4451 = vpop.permute.xlu0 %4450
      %v4453 = vmul.f32 %v4451, %v2023
      %v4454 = vmul.f32 %v4451, %v2027
      %v4455 = vmul.f32 %v4451, %v2031
      %v4456 = vmul.f32 %v4451, %v2035
      %v4457 = vmul.f32 %v4451, %v2099
      %4458 = vset.pattern.permute.xlu0 3
      %4459 = vperm.xlu0 %4458, %v4429
      %v4460 = vpop.permute.xlu0 %4459
      %v4462 = vmul.f32 %v4460, %v2047
      %v4463 = vmul.f32 %v4460, %v2051
      %v4464 = vmul.f32 %v4460, %v2055
      %v4465 = vmul.f32 %v4460, %v2059
      %v4466 = vmul.f32 %v4460, %v2112
      %4472 = vrot.lane.b32.xlu0 %v4435, 84
      %v4473 = vpop.permute.xlu0 %4472
      %4474 = vrot.lane.b32.xlu0 %v4436, 84
      %v4475 = vpop.permute.xlu0 %4474
      %4476 = vrot.lane.b32.xlu0 %v4437, 84
      %v4477 = vpop.permute.xlu0 %4476
      %4478 = vrot.lane.b32.xlu0 %v4438, 84
      %v4479 = vpop.permute.xlu0 %4478
      %4480 = vrot.lane.b32.xlu0 %v4439, 84
      %v4481 = vpop.permute.xlu0 %4480
      %vm4482 = vcmask 687104
      %v4483 = vsel %vm4482, %v4473, %v4475
      %v4484 = vsel %vm4482, %v4475, %v4477
      %v4485 = vsel %vm4482, %v4477, %v4479
      %v4486 = vsel %vm4482, %v4479, %v4481
      %v4491 = vadd.f32 %v4344, %v4483
      %v4492 = vadd.f32 %v4345, %v4484
      %v4493 = vadd.f32 %v4346, %v4485
      %v4494 = vadd.f32 %v4347, %v4486
      %4500 = vrot.lane.b32.xlu0 %v4444, 84
      %v4501 = vpop.permute.xlu0 %4500
      %4502 = vrot.lane.b32.xlu0 %v4445, 84
      %v4503 = vpop.permute.xlu0 %4502
      %4504 = vrot.lane.b32.xlu0 %v4446, 84
      %v4505 = vpop.permute.xlu0 %4504
      %4506 = vrot.lane.b32.xlu0 %v4447, 84
      %v4507 = vpop.permute.xlu0 %4506
      %4508 = vrot.lane.b32.xlu0 %v4448, 84
      %v4509 = vpop.permute.xlu0 %4508
      %v4510 = vsel %vm4482, %v4501, %v4503
      %v4511 = vsel %vm4482, %v4503, %v4505
      %v4512 = vsel %vm4482, %v4505, %v4507
      %v4513 = vsel %vm4482, %v4507, %v4509
      %v4518 = vadd.f32 %v4371, %v4510
      %v4519 = vadd.f32 %v4372, %v4511
      %v4520 = vadd.f32 %v4373, %v4512
      %v4521 = vadd.f32 %v4374, %v4513
      %4527 = vrot.lane.b32.xlu0 %v4453, 84
      %v4528 = vpop.permute.xlu0 %4527
      %4529 = vrot.lane.b32.xlu0 %v4454, 84
      %v4530 = vpop.permute.xlu0 %4529
      %4531 = vrot.lane.b32.xlu0 %v4455, 84
      %v4532 = vpop.permute.xlu0 %4531
      %4533 = vrot.lane.b32.xlu0 %v4456, 84
      %v4534 = vpop.permute.xlu0 %4533
      %4535 = vrot.lane.b32.xlu0 %v4457, 84
      %v4536 = vpop.permute.xlu0 %4535
      %v4537 = vsel %vm4482, %v4528, %v4530
      %v4538 = vsel %vm4482, %v4530, %v4532
      %v4539 = vsel %vm4482, %v4532, %v4534
      %v4540 = vsel %vm4482, %v4534, %v4536
      %v4545 = vadd.f32 %v4398, %v4537
      %v4546 = vadd.f32 %v4399, %v4538
      %v4547 = vadd.f32 %v4400, %v4539
      %v4548 = vadd.f32 %v4401, %v4540
      %4554 = vrot.lane.b32.xlu0 %v4462, 84
      %v4555 = vpop.permute.xlu0 %4554
      %4556 = vrot.lane.b32.xlu0 %v4463, 84
      %v4557 = vpop.permute.xlu0 %4556
      %4558 = vrot.lane.b32.xlu0 %v4464, 84
      %v4559 = vpop.permute.xlu0 %4558
      %4560 = vrot.lane.b32.xlu0 %v4465, 84
      %v4561 = vpop.permute.xlu0 %4560
      %4562 = vrot.lane.b32.xlu0 %v4466, 84
      %v4563 = vpop.permute.xlu0 %4562
      %v4564 = vsel %vm4482, %v4555, %v4557
      %v4565 = vsel %vm4482, %v4557, %v4559
      %v4566 = vsel %vm4482, %v4559, %v4561
      %v4567 = vsel %vm4482, %v4561, %v4563
      %v4572 = vadd.f32 %v4425, %v4564
      %v4573 = vadd.f32 %v4426, %v4565
      %v4574 = vadd.f32 %v4427, %v4566
      %v4575 = vadd.f32 %v4428, %v4567
      %v4576 = vld [vmem:[%s3 + $0x90] sm:$0x1f]
      %4578 = vset.pattern.permute.xlu0 0
      %4579 = vperm.xlu0 %4578, %v4576
      %v4580 = vpop.permute.xlu0 %4579
      %v4582 = vmul.f32 %v4580, %v1975
      %v4583 = vmul.f32 %v4580, %v1979
      %v4584 = vmul.f32 %v4580, %v1983
      %v4585 = vmul.f32 %v4580, %v1987
      %v4586 = vmul.f32 %v4580, %v2073
      %4587 = vset.pattern.permute.xlu0 1
      %4588 = vperm.xlu0 %4587, %v4576
      %v4589 = vpop.permute.xlu0 %4588
      %v4591 = vmul.f32 %v4589, %v1999
      %v4592 = vmul.f32 %v4589, %v2003
      %v4593 = vmul.f32 %v4589, %v2007
      %v4594 = vmul.f32 %v4589, %v2011
      %v4595 = vmul.f32 %v4589, %v2086
      %4596 = vset.pattern.permute.xlu0 2
      %4597 = vperm.xlu0 %4596, %v4576
      %v4598 = vpop.permute.xlu0 %4597
      %v4600 = vmul.f32 %v4598, %v2023
      %v4601 = vmul.f32 %v4598, %v2027
      %v4602 = vmul.f32 %v4598, %v2031
      %v4603 = vmul.f32 %v4598, %v2035
      %v4604 = vmul.f32 %v4598, %v2099
      %4605 = vset.pattern.permute.xlu0 3
      %4606 = vperm.xlu0 %4605, %v4576
      %v4607 = vpop.permute.xlu0 %4606
      %v4609 = vmul.f32 %v4607, %v2047
      %v4610 = vmul.f32 %v4607, %v2051
      %v4611 = vmul.f32 %v4607, %v2055
      %v4612 = vmul.f32 %v4607, %v2059
      %v4613 = vmul.f32 %v4607, %v2112
      %4619 = vrot.lane.b32.xlu0 %v4582, 83
      %v4620 = vpop.permute.xlu0 %4619
      %4621 = vrot.lane.b32.xlu0 %v4583, 83
      %v4622 = vpop.permute.xlu0 %4621
      %4623 = vrot.lane.b32.xlu0 %v4584, 83
      %v4624 = vpop.permute.xlu0 %4623
      %4625 = vrot.lane.b32.xlu0 %v4585, 83
      %v4626 = vpop.permute.xlu0 %4625
      %4627 = vrot.lane.b32.xlu0 %v4586, 83
      %v4628 = vpop.permute.xlu0 %4627
      %vm4629 = vcmask 678912
      %v4630 = vsel %vm4629, %v4620, %v4622
      %v4631 = vsel %vm4629, %v4622, %v4624
      %v4632 = vsel %vm4629, %v4624, %v4626
      %v4633 = vsel %vm4629, %v4626, %v4628
      %v4638 = vadd.f32 %v4491, %v4630
      %v4639 = vadd.f32 %v4492, %v4631
      %v4640 = vadd.f32 %v4493, %v4632
      %v4641 = vadd.f32 %v4494, %v4633
      %4647 = vrot.lane.b32.xlu0 %v4591, 83
      %v4648 = vpop.permute.xlu0 %4647
      %4649 = vrot.lane.b32.xlu0 %v4592, 83
      %v4650 = vpop.permute.xlu0 %4649
      %4651 = vrot.lane.b32.xlu0 %v4593, 83
      %v4652 = vpop.permute.xlu0 %4651
      %4653 = vrot.lane.b32.xlu0 %v4594, 83
      %v4654 = vpop.permute.xlu0 %4653
      %4655 = vrot.lane.b32.xlu0 %v4595, 83
      %v4656 = vpop.permute.xlu0 %4655
      %v4657 = vsel %vm4629, %v4648, %v4650
      %v4658 = vsel %vm4629, %v4650, %v4652
      %v4659 = vsel %vm4629, %v4652, %v4654
      %v4660 = vsel %vm4629, %v4654, %v4656
      %v4665 = vadd.f32 %v4518, %v4657
      %v4666 = vadd.f32 %v4519, %v4658
      %v4667 = vadd.f32 %v4520, %v4659
      %v4668 = vadd.f32 %v4521, %v4660
      %4674 = vrot.lane.b32.xlu0 %v4600, 83
      %v4675 = vpop.permute.xlu0 %4674
      %4676 = vrot.lane.b32.xlu0 %v4601, 83
      %v4677 = vpop.permute.xlu0 %4676
      %4678 = vrot.lane.b32.xlu0 %v4602, 83
      %v4679 = vpop.permute.xlu0 %4678
      %4680 = vrot.lane.b32.xlu0 %v4603, 83
      %v4681 = vpop.permute.xlu0 %4680
      %4682 = vrot.lane.b32.xlu0 %v4604, 83
      %v4683 = vpop.permute.xlu0 %4682
      %v4684 = vsel %vm4629, %v4675, %v4677
      %v4685 = vsel %vm4629, %v4677, %v4679
      %v4686 = vsel %vm4629, %v4679, %v4681
      %v4687 = vsel %vm4629, %v4681, %v4683
      %v4692 = vadd.f32 %v4545, %v4684
      %v4693 = vadd.f32 %v4546, %v4685
      %v4694 = vadd.f32 %v4547, %v4686
      %v4695 = vadd.f32 %v4548, %v4687
      %4701 = vrot.lane.b32.xlu0 %v4609, 83
      %v4702 = vpop.permute.xlu0 %4701
      %4703 = vrot.lane.b32.xlu0 %v4610, 83
      %v4704 = vpop.permute.xlu0 %4703
      %4705 = vrot.lane.b32.xlu0 %v4611, 83
      %v4706 = vpop.permute.xlu0 %4705
      %4707 = vrot.lane.b32.xlu0 %v4612, 83
      %v4708 = vpop.permute.xlu0 %4707
      %4709 = vrot.lane.b32.xlu0 %v4613, 83
      %v4710 = vpop.permute.xlu0 %4709
      %v4711 = vsel %vm4629, %v4702, %v4704
      %v4712 = vsel %vm4629, %v4704, %v4706
      %v4713 = vsel %vm4629, %v4706, %v4708
      %v4714 = vsel %vm4629, %v4708, %v4710
      %v4719 = vadd.f32 %v4572, %v4711
      %v4720 = vadd.f32 %v4573, %v4712
      %v4721 = vadd.f32 %v4574, %v4713
      %v4722 = vadd.f32 %v4575, %v4714
      %v4723 = vld [vmem:[%s3 + $0x98] sm:$0x1f]
      %4725 = vset.pattern.permute.xlu0 0
      %4726 = vperm.xlu0 %4725, %v4723
      %v4727 = vpop.permute.xlu0 %4726
      %v4729 = vmul.f32 %v4727, %v1975
      %v4730 = vmul.f32 %v4727, %v1979
      %v4731 = vmul.f32 %v4727, %v1983
      %v4732 = vmul.f32 %v4727, %v1987
      %v4733 = vmul.f32 %v4727, %v2073
      %4734 = vset.pattern.permute.xlu0 1
      %4735 = vperm.xlu0 %4734, %v4723
      %v4736 = vpop.permute.xlu0 %4735
      %v4738 = vmul.f32 %v4736, %v1999
      %v4739 = vmul.f32 %v4736, %v2003
      %v4740 = vmul.f32 %v4736, %v2007
      %v4741 = vmul.f32 %v4736, %v2011
      %v4742 = vmul.f32 %v4736, %v2086
      %4743 = vset.pattern.permute.xlu0 2
      %4744 = vperm.xlu0 %4743, %v4723
      %v4745 = vpop.permute.xlu0 %4744
      %v4747 = vmul.f32 %v4745, %v2023
      %v4748 = vmul.f32 %v4745, %v2027
      %v4749 = vmul.f32 %v4745, %v2031
      %v4750 = vmul.f32 %v4745, %v2035
      %v4751 = vmul.f32 %v4745, %v2099
      %4752 = vset.pattern.permute.xlu0 3
      %4753 = vperm.xlu0 %4752, %v4723
      %v4754 = vpop.permute.xlu0 %4753
      %v4756 = vmul.f32 %v4754, %v2047
      %v4757 = vmul.f32 %v4754, %v2051
      %v4758 = vmul.f32 %v4754, %v2055
      %v4759 = vmul.f32 %v4754, %v2059
      %v4760 = vmul.f32 %v4754, %v2112
      %4766 = vrot.lane.b32.xlu0 %v4729, 82
      %v4767 = vpop.permute.xlu0 %4766
      %4768 = vrot.lane.b32.xlu0 %v4730, 82
      %v4769 = vpop.permute.xlu0 %4768
      %4770 = vrot.lane.b32.xlu0 %v4731, 82
      %v4771 = vpop.permute.xlu0 %4770
      %4772 = vrot.lane.b32.xlu0 %v4732, 82
      %v4773 = vpop.permute.xlu0 %4772
      %4774 = vrot.lane.b32.xlu0 %v4733, 82
      %v4775 = vpop.permute.xlu0 %4774
      %vm4776 = vcmask 670720
      %v4777 = vsel %vm4776, %v4767, %v4769
      %v4778 = vsel %vm4776, %v4769, %v4771
      %v4779 = vsel %vm4776, %v4771, %v4773
      %v4780 = vsel %vm4776, %v4773, %v4775
      %v4785 = vadd.f32 %v4638, %v4777
      %v4786 = vadd.f32 %v4639, %v4778
      %v4787 = vadd.f32 %v4640, %v4779
      %v4788 = vadd.f32 %v4641, %v4780
      %4794 = vrot.lane.b32.xlu0 %v4738, 82
      %v4795 = vpop.permute.xlu0 %4794
      %4796 = vrot.lane.b32.xlu0 %v4739, 82
      %v4797 = vpop.permute.xlu0 %4796
      %4798 = vrot.lane.b32.xlu0 %v4740, 82
      %v4799 = vpop.permute.xlu0 %4798
      %4800 = vrot.lane.b32.xlu0 %v4741, 82
      %v4801 = vpop.permute.xlu0 %4800
      %4802 = vrot.lane.b32.xlu0 %v4742, 82
      %v4803 = vpop.permute.xlu0 %4802
      %v4804 = vsel %vm4776, %v4795, %v4797
      %v4805 = vsel %vm4776, %v4797, %v4799
      %v4806 = vsel %vm4776, %v4799, %v4801
      %v4807 = vsel %vm4776, %v4801, %v4803
      %v4812 = vadd.f32 %v4665, %v4804
      %v4813 = vadd.f32 %v4666, %v4805
      %v4814 = vadd.f32 %v4667, %v4806
      %v4815 = vadd.f32 %v4668, %v4807
      %4821 = vrot.lane.b32.xlu0 %v4747, 82
      %v4822 = vpop.permute.xlu0 %4821
      %4823 = vrot.lane.b32.xlu0 %v4748, 82
      %v4824 = vpop.permute.xlu0 %4823
      %4825 = vrot.lane.b32.xlu0 %v4749, 82
      %v4826 = vpop.permute.xlu0 %4825
      %4827 = vrot.lane.b32.xlu0 %v4750, 82
      %v4828 = vpop.permute.xlu0 %4827
      %4829 = vrot.lane.b32.xlu0 %v4751, 82
      %v4830 = vpop.permute.xlu0 %4829
      %v4831 = vsel %vm4776, %v4822, %v4824
      %v4832 = vsel %vm4776, %v4824, %v4826
      %v4833 = vsel %vm4776, %v4826, %v4828
      %v4834 = vsel %vm4776, %v4828, %v4830
      %v4839 = vadd.f32 %v4692, %v4831
      %v4840 = vadd.f32 %v4693, %v4832
      %v4841 = vadd.f32 %v4694, %v4833
      %v4842 = vadd.f32 %v4695, %v4834
      %4848 = vrot.lane.b32.xlu0 %v4756, 82
      %v4849 = vpop.permute.xlu0 %4848
      %4850 = vrot.lane.b32.xlu0 %v4757, 82
      %v4851 = vpop.permute.xlu0 %4850
      %4852 = vrot.lane.b32.xlu0 %v4758, 82
      %v4853 = vpop.permute.xlu0 %4852
      %4854 = vrot.lane.b32.xlu0 %v4759, 82
      %v4855 = vpop.permute.xlu0 %4854
      %4856 = vrot.lane.b32.xlu0 %v4760, 82
      %v4857 = vpop.permute.xlu0 %4856
      %v4858 = vsel %vm4776, %v4849, %v4851
      %v4859 = vsel %vm4776, %v4851, %v4853
      %v4860 = vsel %vm4776, %v4853, %v4855
      %v4861 = vsel %vm4776, %v4855, %v4857
      %v4866 = vadd.f32 %v4719, %v4858
      %v4867 = vadd.f32 %v4720, %v4859
      %v4868 = vadd.f32 %v4721, %v4860
      %v4869 = vadd.f32 %v4722, %v4861
      %v4870 = vld [vmem:[%s3 + $0xa0] sm:$0x1f]
      %4872 = vset.pattern.permute.xlu0 0
      %4873 = vperm.xlu0 %4872, %v4870
      %v4874 = vpop.permute.xlu0 %4873
      %v4876 = vmul.f32 %v4874, %v1975
      %v4877 = vmul.f32 %v4874, %v1979
      %v4878 = vmul.f32 %v4874, %v1983
      %v4879 = vmul.f32 %v4874, %v1987
      %v4880 = vmul.f32 %v4874, %v2073
      %4881 = vset.pattern.permute.xlu0 1
      %4882 = vperm.xlu0 %4881, %v4870
      %v4883 = vpop.permute.xlu0 %4882
      %v4885 = vmul.f32 %v4883, %v1999
      %v4886 = vmul.f32 %v4883, %v2003
      %v4887 = vmul.f32 %v4883, %v2007
      %v4888 = vmul.f32 %v4883, %v2011
      %v4889 = vmul.f32 %v4883, %v2086
      %4890 = vset.pattern.permute.xlu0 2
      %4891 = vperm.xlu0 %4890, %v4870
      %v4892 = vpop.permute.xlu0 %4891
      %v4894 = vmul.f32 %v4892, %v2023
      %v4895 = vmul.f32 %v4892, %v2027
      %v4896 = vmul.f32 %v4892, %v2031
      %v4897 = vmul.f32 %v4892, %v2035
      %v4898 = vmul.f32 %v4892, %v2099
      %4899 = vset.pattern.permute.xlu0 3
      %4900 = vperm.xlu0 %4899, %v4870
      %v4901 = vpop.permute.xlu0 %4900
      %v4903 = vmul.f32 %v4901, %v2047
      %v4904 = vmul.f32 %v4901, %v2051
      %v4905 = vmul.f32 %v4901, %v2055
      %v4906 = vmul.f32 %v4901, %v2059
      %v4907 = vmul.f32 %v4901, %v2112
      %4913 = vrot.lane.b32.xlu0 %v4876, 72
      %v4914 = vpop.permute.xlu0 %4913
      %4915 = vrot.lane.b32.xlu0 %v4877, 72
      %v4916 = vpop.permute.xlu0 %4915
      %4917 = vrot.lane.b32.xlu0 %v4878, 72
      %v4918 = vpop.permute.xlu0 %4917
      %4919 = vrot.lane.b32.xlu0 %v4879, 72
      %v4920 = vpop.permute.xlu0 %4919
      %4921 = vrot.lane.b32.xlu0 %v4880, 72
      %v4922 = vpop.permute.xlu0 %4921
      %vm4923 = vcmask 588800
      %v4924 = vsel %vm4923, %v4914, %v4916
      %v4925 = vsel %vm4923, %v4916, %v4918
      %v4926 = vsel %vm4923, %v4918, %v4920
      %v4927 = vsel %vm4923, %v4920, %v4922
      %v4932 = vadd.f32 %v4785, %v4924
      %v4933 = vadd.f32 %v4786, %v4925
      %v4934 = vadd.f32 %v4787, %v4926
      %v4935 = vadd.f32 %v4788, %v4927
      %4941 = vrot.lane.b32.xlu0 %v4885, 72
      %v4942 = vpop.permute.xlu0 %4941
      %4943 = vrot.lane.b32.xlu0 %v4886, 72
      %v4944 = vpop.permute.xlu0 %4943
      %4945 = vrot.lane.b32.xlu0 %v4887, 72
      %v4946 = vpop.permute.xlu0 %4945
      %4947 = vrot.lane.b32.xlu0 %v4888, 72
      %v4948 = vpop.permute.xlu0 %4947
      %4949 = vrot.lane.b32.xlu0 %v4889, 72
      %v4950 = vpop.permute.xlu0 %4949
      %v4951 = vsel %vm4923, %v4942, %v4944
      %v4952 = vsel %vm4923, %v4944, %v4946
      %v4953 = vsel %vm4923, %v4946, %v4948
      %v4954 = vsel %vm4923, %v4948, %v4950
      %v4959 = vadd.f32 %v4812, %v4951
      %v4960 = vadd.f32 %v4813, %v4952
      %v4961 = vadd.f32 %v4814, %v4953
      %v4962 = vadd.f32 %v4815, %v4954
      %4968 = vrot.lane.b32.xlu0 %v4894, 72
      %v4969 = vpop.permute.xlu0 %4968
      %4970 = vrot.lane.b32.xlu0 %v4895, 72
      %v4971 = vpop.permute.xlu0 %4970
      %4972 = vrot.lane.b32.xlu0 %v4896, 72
      %v4973 = vpop.permute.xlu0 %4972
      %4974 = vrot.lane.b32.xlu0 %v4897, 72
      %v4975 = vpop.permute.xlu0 %4974
      %4976 = vrot.lane.b32.xlu0 %v4898, 72
      %v4977 = vpop.permute.xlu0 %4976
      %v4978 = vsel %vm4923, %v4969, %v4971
      %v4979 = vsel %vm4923, %v4971, %v4973
      %v4980 = vsel %vm4923, %v4973, %v4975
      %v4981 = vsel %vm4923, %v4975, %v4977
      %v4986 = vadd.f32 %v4839, %v4978
      %v4987 = vadd.f32 %v4840, %v4979
      %v4988 = vadd.f32 %v4841, %v4980
      %v4989 = vadd.f32 %v4842, %v4981
      %4995 = vrot.lane.b32.xlu0 %v4903, 72
      %v4996 = vpop.permute.xlu0 %4995
      %4997 = vrot.lane.b32.xlu0 %v4904, 72
      %v4998 = vpop.permute.xlu0 %4997
      %4999 = vrot.lane.b32.xlu0 %v4905, 72
      %v5000 = vpop.permute.xlu0 %4999
      %5001 = vrot.lane.b32.xlu0 %v4906, 72
      %v5002 = vpop.permute.xlu0 %5001
      %5003 = vrot.lane.b32.xlu0 %v4907, 72
      %v5004 = vpop.permute.xlu0 %5003
      %v5005 = vsel %vm4923, %v4996, %v4998
      %v5006 = vsel %vm4923, %v4998, %v5000
      %v5007 = vsel %vm4923, %v5000, %v5002
      %v5008 = vsel %vm4923, %v5002, %v5004
      %v5013 = vadd.f32 %v4866, %v5005
      %v5014 = vadd.f32 %v4867, %v5006
      %v5015 = vadd.f32 %v4868, %v5007
      %v5016 = vadd.f32 %v4869, %v5008
      %v5017 = vld [vmem:[%s3 + $0xa8] sm:$0x1f]
      %5019 = vset.pattern.permute.xlu0 0
      %5020 = vperm.xlu0 %5019, %v5017
      %v5021 = vpop.permute.xlu0 %5020
      %v5023 = vmul.f32 %v5021, %v1975
      %v5024 = vmul.f32 %v5021, %v1979
      %v5025 = vmul.f32 %v5021, %v1983
      %v5026 = vmul.f32 %v5021, %v1987
      %v5027 = vmul.f32 %v5021, %v2073
      %5028 = vset.pattern.permute.xlu0 1
      %5029 = vperm.xlu0 %5028, %v5017
      %v5030 = vpop.permute.xlu0 %5029
      %v5032 = vmul.f32 %v5030, %v1999
      %v5033 = vmul.f32 %v5030, %v2003
      %v5034 = vmul.f32 %v5030, %v2007
      %v5035 = vmul.f32 %v5030, %v2011
      %v5036 = vmul.f32 %v5030, %v2086
      %5037 = vset.pattern.permute.xlu0 2
      %5038 = vperm.xlu0 %5037, %v5017
      %v5039 = vpop.permute.xlu0 %5038
      %v5041 = vmul.f32 %v5039, %v2023
      %v5042 = vmul.f32 %v5039, %v2027
      %v5043 = vmul.f32 %v5039, %v2031
      %v5044 = vmul.f32 %v5039, %v2035
      %v5045 = vmul.f32 %v5039, %v2099
      %5046 = vset.pattern.permute.xlu0 3
      %5047 = vperm.xlu0 %5046, %v5017
      %v5048 = vpop.permute.xlu0 %5047
      %v5050 = vmul.f32 %v5048, %v2047
      %v5051 = vmul.f32 %v5048, %v2051
      %v5052 = vmul.f32 %v5048, %v2055
      %v5053 = vmul.f32 %v5048, %v2059
      %v5054 = vmul.f32 %v5048, %v2112
      %5060 = vrot.lane.b32.xlu0 %v5023, 71
      %v5061 = vpop.permute.xlu0 %5060
      %5062 = vrot.lane.b32.xlu0 %v5024, 71
      %v5063 = vpop.permute.xlu0 %5062
      %5064 = vrot.lane.b32.xlu0 %v5025, 71
      %v5065 = vpop.permute.xlu0 %5064
      %5066 = vrot.lane.b32.xlu0 %v5026, 71
      %v5067 = vpop.permute.xlu0 %5066
      %5068 = vrot.lane.b32.xlu0 %v5027, 71
      %v5069 = vpop.permute.xlu0 %5068
      %vm5070 = vcmask 580608
      %v5071 = vsel %vm5070, %v5061, %v5063
      %v5072 = vsel %vm5070, %v5063, %v5065
      %v5073 = vsel %vm5070, %v5065, %v5067
      %v5074 = vsel %vm5070, %v5067, %v5069
      %v5079 = vadd.f32 %v4932, %v5071
      %v5080 = vadd.f32 %v4933, %v5072
      %v5081 = vadd.f32 %v4934, %v5073
      %v5082 = vadd.f32 %v4935, %v5074
      %5088 = vrot.lane.b32.xlu0 %v5032, 71
      %v5089 = vpop.permute.xlu0 %5088
      %5090 = vrot.lane.b32.xlu0 %v5033, 71
      %v5091 = vpop.permute.xlu0 %5090
      %5092 = vrot.lane.b32.xlu0 %v5034, 71
      %v5093 = vpop.permute.xlu0 %5092
      %5094 = vrot.lane.b32.xlu0 %v5035, 71
      %v5095 = vpop.permute.xlu0 %5094
      %5096 = vrot.lane.b32.xlu0 %v5036, 71
      %v5097 = vpop.permute.xlu0 %5096
      %v5098 = vsel %vm5070, %v5089, %v5091
      %v5099 = vsel %vm5070, %v5091, %v5093
      %v5100 = vsel %vm5070, %v5093, %v5095
      %v5101 = vsel %vm5070, %v5095, %v5097
      %v5106 = vadd.f32 %v4959, %v5098
      %v5107 = vadd.f32 %v4960, %v5099
      %v5108 = vadd.f32 %v4961, %v5100
      %v5109 = vadd.f32 %v4962, %v5101
      %5115 = vrot.lane.b32.xlu0 %v5041, 71
      %v5116 = vpop.permute.xlu0 %5115
      %5117 = vrot.lane.b32.xlu0 %v5042, 71
      %v5118 = vpop.permute.xlu0 %5117
      %5119 = vrot.lane.b32.xlu0 %v5043, 71
      %v5120 = vpop.permute.xlu0 %5119
      %5121 = vrot.lane.b32.xlu0 %v5044, 71
      %v5122 = vpop.permute.xlu0 %5121
      %5123 = vrot.lane.b32.xlu0 %v5045, 71
      %v5124 = vpop.permute.xlu0 %5123
      %v5125 = vsel %vm5070, %v5116, %v5118
      %v5126 = vsel %vm5070, %v5118, %v5120
      %v5127 = vsel %vm5070, %v5120, %v5122
      %v5128 = vsel %vm5070, %v5122, %v5124
      %v5133 = vadd.f32 %v4986, %v5125
      %v5134 = vadd.f32 %v4987, %v5126
      %v5135 = vadd.f32 %v4988, %v5127
      %v5136 = vadd.f32 %v4989, %v5128
      %5142 = vrot.lane.b32.xlu0 %v5050, 71
      %v5143 = vpop.permute.xlu0 %5142
      %5144 = vrot.lane.b32.xlu0 %v5051, 71
      %v5145 = vpop.permute.xlu0 %5144
      %5146 = vrot.lane.b32.xlu0 %v5052, 71
      %v5147 = vpop.permute.xlu0 %5146
      %5148 = vrot.lane.b32.xlu0 %v5053, 71
      %v5149 = vpop.permute.xlu0 %5148
      %5150 = vrot.lane.b32.xlu0 %v5054, 71
      %v5151 = vpop.permute.xlu0 %5150
      %v5152 = vsel %vm5070, %v5143, %v5145
      %v5153 = vsel %vm5070, %v5145, %v5147
      %v5154 = vsel %vm5070, %v5147, %v5149
      %v5155 = vsel %vm5070, %v5149, %v5151
      %v5160 = vadd.f32 %v5013, %v5152
      %v5161 = vadd.f32 %v5014, %v5153
      %v5162 = vadd.f32 %v5015, %v5154
      %v5163 = vadd.f32 %v5016, %v5155
      %v5164 = vld [vmem:[%s3 + $0xb0] sm:$0x1f]
      %5166 = vset.pattern.permute.xlu0 0
      %5167 = vperm.xlu0 %5166, %v5164
      %v5168 = vpop.permute.xlu0 %5167
      %v5170 = vmul.f32 %v5168, %v1975
      %v5171 = vmul.f32 %v5168, %v1979
      %v5172 = vmul.f32 %v5168, %v1983
      %v5173 = vmul.f32 %v5168, %v1987
      %v5174 = vmul.f32 %v5168, %v2073
      %5175 = vset.pattern.permute.xlu0 1
      %5176 = vperm.xlu0 %5175, %v5164
      %v5177 = vpop.permute.xlu0 %5176
      %v5179 = vmul.f32 %v5177, %v1999
      %v5180 = vmul.f32 %v5177, %v2003
      %v5181 = vmul.f32 %v5177, %v2007
      %v5182 = vmul.f32 %v5177, %v2011
      %v5183 = vmul.f32 %v5177, %v2086
      %5184 = vset.pattern.permute.xlu0 2
      %5185 = vperm.xlu0 %5184, %v5164
      %v5186 = vpop.permute.xlu0 %5185
      %v5188 = vmul.f32 %v5186, %v2023
      %v5189 = vmul.f32 %v5186, %v2027
      %v5190 = vmul.f32 %v5186, %v2031
      %v5191 = vmul.f32 %v5186, %v2035
      %v5192 = vmul.f32 %v5186, %v2099
      %5193 = vset.pattern.permute.xlu0 3
      %5194 = vperm.xlu0 %5193, %v5164
      %v5195 = vpop.permute.xlu0 %5194
      %v5197 = vmul.f32 %v5195, %v2047
      %v5198 = vmul.f32 %v5195, %v2051
      %v5199 = vmul.f32 %v5195, %v2055
      %v5200 = vmul.f32 %v5195, %v2059
      %v5201 = vmul.f32 %v5195, %v2112
      %5207 = vrot.lane.b32.xlu0 %v5170, 70
      %v5208 = vpop.permute.xlu0 %5207
      %5209 = vrot.lane.b32.xlu0 %v5171, 70
      %v5210 = vpop.permute.xlu0 %5209
      %5211 = vrot.lane.b32.xlu0 %v5172, 70
      %v5212 = vpop.permute.xlu0 %5211
      %5213 = vrot.lane.b32.xlu0 %v5173, 70
      %v5214 = vpop.permute.xlu0 %5213
      %5215 = vrot.lane.b32.xlu0 %v5174, 70
      %v5216 = vpop.permute.xlu0 %5215
      %vm5217 = vcmask 572416
      %v5218 = vsel %vm5217, %v5208, %v5210
      %v5219 = vsel %vm5217, %v5210, %v5212
      %v5220 = vsel %vm5217, %v5212, %v5214
      %v5221 = vsel %vm5217, %v5214, %v5216
      %v5226 = vadd.f32 %v5079, %v5218
      %v5227 = vadd.f32 %v5080, %v5219
      %v5228 = vadd.f32 %v5081, %v5220
      %v5229 = vadd.f32 %v5082, %v5221
      %5235 = vrot.lane.b32.xlu0 %v5179, 70
      %v5236 = vpop.permute.xlu0 %5235
      %5237 = vrot.lane.b32.xlu0 %v5180, 70
      %v5238 = vpop.permute.xlu0 %5237
      %5239 = vrot.lane.b32.xlu0 %v5181, 70
      %v5240 = vpop.permute.xlu0 %5239
      %5241 = vrot.lane.b32.xlu0 %v5182, 70
      %v5242 = vpop.permute.xlu0 %5241
      %5243 = vrot.lane.b32.xlu0 %v5183, 70
      %v5244 = vpop.permute.xlu0 %5243
      %v5245 = vsel %vm5217, %v5236, %v5238
      %v5246 = vsel %vm5217, %v5238, %v5240
      %v5247 = vsel %vm5217, %v5240, %v5242
      %v5248 = vsel %vm5217, %v5242, %v5244
      %v5253 = vadd.f32 %v5106, %v5245
      %v5254 = vadd.f32 %v5107, %v5246
      %v5255 = vadd.f32 %v5108, %v5247
      %v5256 = vadd.f32 %v5109, %v5248
      %5262 = vrot.lane.b32.xlu0 %v5188, 70
      %v5263 = vpop.permute.xlu0 %5262
      %5264 = vrot.lane.b32.xlu0 %v5189, 70
      %v5265 = vpop.permute.xlu0 %5264
      %5266 = vrot.lane.b32.xlu0 %v5190, 70
      %v5267 = vpop.permute.xlu0 %5266
      %5268 = vrot.lane.b32.xlu0 %v5191, 70
      %v5269 = vpop.permute.xlu0 %5268
      %5270 = vrot.lane.b32.xlu0 %v5192, 70
      %v5271 = vpop.permute.xlu0 %5270
      %v5272 = vsel %vm5217, %v5263, %v5265
      %v5273 = vsel %vm5217, %v5265, %v5267
      %v5274 = vsel %vm5217, %v5267, %v5269
      %v5275 = vsel %vm5217, %v5269, %v5271
      %v5280 = vadd.f32 %v5133, %v5272
      %v5281 = vadd.f32 %v5134, %v5273
      %v5282 = vadd.f32 %v5135, %v5274
      %v5283 = vadd.f32 %v5136, %v5275
      %5289 = vrot.lane.b32.xlu0 %v5197, 70
      %v5290 = vpop.permute.xlu0 %5289
      %5291 = vrot.lane.b32.xlu0 %v5198, 70
      %v5292 = vpop.permute.xlu0 %5291
      %5293 = vrot.lane.b32.xlu0 %v5199, 70
      %v5294 = vpop.permute.xlu0 %5293
      %5295 = vrot.lane.b32.xlu0 %v5200, 70
      %v5296 = vpop.permute.xlu0 %5295
      %5297 = vrot.lane.b32.xlu0 %v5201, 70
      %v5298 = vpop.permute.xlu0 %5297
      %v5299 = vsel %vm5217, %v5290, %v5292
      %v5300 = vsel %vm5217, %v5292, %v5294
      %v5301 = vsel %vm5217, %v5294, %v5296
      %v5302 = vsel %vm5217, %v5296, %v5298
      %v5307 = vadd.f32 %v5160, %v5299
      %v5308 = vadd.f32 %v5161, %v5300
      %v5309 = vadd.f32 %v5162, %v5301
      %v5310 = vadd.f32 %v5163, %v5302
      %v5311 = vld [vmem:[%s3 + $0xb8] sm:$0x1f]
      %5313 = vset.pattern.permute.xlu0 0
      %5314 = vperm.xlu0 %5313, %v5311
      %v5315 = vpop.permute.xlu0 %5314
      %v5317 = vmul.f32 %v5315, %v1975
      %v5318 = vmul.f32 %v5315, %v1979
      %v5319 = vmul.f32 %v5315, %v1983
      %v5320 = vmul.f32 %v5315, %v1987
      %v5321 = vmul.f32 %v5315, %v2073
      %5322 = vset.pattern.permute.xlu0 1
      %5323 = vperm.xlu0 %5322, %v5311
      %v5324 = vpop.permute.xlu0 %5323
      %v5326 = vmul.f32 %v5324, %v1999
      %v5327 = vmul.f32 %v5324, %v2003
      %v5328 = vmul.f32 %v5324, %v2007
      %v5329 = vmul.f32 %v5324, %v2011
      %v5330 = vmul.f32 %v5324, %v2086
      %5331 = vset.pattern.permute.xlu0 2
      %5332 = vperm.xlu0 %5331, %v5311
      %v5333 = vpop.permute.xlu0 %5332
      %v5335 = vmul.f32 %v5333, %v2023
      %v5336 = vmul.f32 %v5333, %v2027
      %v5337 = vmul.f32 %v5333, %v2031
      %v5338 = vmul.f32 %v5333, %v2035
      %v5339 = vmul.f32 %v5333, %v2099
      %5340 = vset.pattern.permute.xlu0 3
      %5341 = vperm.xlu0 %5340, %v5311
      %v5342 = vpop.permute.xlu0 %5341
      %v5344 = vmul.f32 %v5342, %v2047
      %v5345 = vmul.f32 %v5342, %v2051
      %v5346 = vmul.f32 %v5342, %v2055
      %v5347 = vmul.f32 %v5342, %v2059
      %v5348 = vmul.f32 %v5342, %v2112
      %5354 = vrot.lane.b32.xlu0 %v5317, 69
      %v5355 = vpop.permute.xlu0 %5354
      %5356 = vrot.lane.b32.xlu0 %v5318, 69
      %v5357 = vpop.permute.xlu0 %5356
      %5358 = vrot.lane.b32.xlu0 %v5319, 69
      %v5359 = vpop.permute.xlu0 %5358
      %5360 = vrot.lane.b32.xlu0 %v5320, 69
      %v5361 = vpop.permute.xlu0 %5360
      %5362 = vrot.lane.b32.xlu0 %v5321, 69
      %v5363 = vpop.permute.xlu0 %5362
      %vm5364 = vcmask 564224
      %v5365 = vsel %vm5364, %v5355, %v5357
      %v5366 = vsel %vm5364, %v5357, %v5359
      %v5367 = vsel %vm5364, %v5359, %v5361
      %v5368 = vsel %vm5364, %v5361, %v5363
      %v5373 = vadd.f32 %v5226, %v5365
      %v5374 = vadd.f32 %v5227, %v5366
      %v5375 = vadd.f32 %v5228, %v5367
      %v5376 = vadd.f32 %v5229, %v5368
      %5382 = vrot.lane.b32.xlu0 %v5326, 69
      %v5383 = vpop.permute.xlu0 %5382
      %5384 = vrot.lane.b32.xlu0 %v5327, 69
      %v5385 = vpop.permute.xlu0 %5384
      %5386 = vrot.lane.b32.xlu0 %v5328, 69
      %v5387 = vpop.permute.xlu0 %5386
      %5388 = vrot.lane.b32.xlu0 %v5329, 69
      %v5389 = vpop.permute.xlu0 %5388
      %5390 = vrot.lane.b32.xlu0 %v5330, 69
      %v5391 = vpop.permute.xlu0 %5390
      %v5392 = vsel %vm5364, %v5383, %v5385
      %v5393 = vsel %vm5364, %v5385, %v5387
      %v5394 = vsel %vm5364, %v5387, %v5389
      %v5395 = vsel %vm5364, %v5389, %v5391
      %v5400 = vadd.f32 %v5253, %v5392
      %v5401 = vadd.f32 %v5254, %v5393
      %v5402 = vadd.f32 %v5255, %v5394
      %v5403 = vadd.f32 %v5256, %v5395
      %5409 = vrot.lane.b32.xlu0 %v5335, 69
      %v5410 = vpop.permute.xlu0 %5409
      %5411 = vrot.lane.b32.xlu0 %v5336, 69
      %v5412 = vpop.permute.xlu0 %5411
      %5413 = vrot.lane.b32.xlu0 %v5337, 69
      %v5414 = vpop.permute.xlu0 %5413
      %5415 = vrot.lane.b32.xlu0 %v5338, 69
      %v5416 = vpop.permute.xlu0 %5415
      %5417 = vrot.lane.b32.xlu0 %v5339, 69
      %v5418 = vpop.permute.xlu0 %5417
      %v5419 = vsel %vm5364, %v5410, %v5412
      %v5420 = vsel %vm5364, %v5412, %v5414
      %v5421 = vsel %vm5364, %v5414, %v5416
      %v5422 = vsel %vm5364, %v5416, %v5418
      %v5427 = vadd.f32 %v5280, %v5419
      %v5428 = vadd.f32 %v5281, %v5420
      %v5429 = vadd.f32 %v5282, %v5421
      %v5430 = vadd.f32 %v5283, %v5422
      %5436 = vrot.lane.b32.xlu0 %v5344, 69
      %v5437 = vpop.permute.xlu0 %5436
      %5438 = vrot.lane.b32.xlu0 %v5345, 69
      %v5439 = vpop.permute.xlu0 %5438
      %5440 = vrot.lane.b32.xlu0 %v5346, 69
      %v5441 = vpop.permute.xlu0 %5440
      %5442 = vrot.lane.b32.xlu0 %v5347, 69
      %v5443 = vpop.permute.xlu0 %5442
      %5444 = vrot.lane.b32.xlu0 %v5348, 69
      %v5445 = vpop.permute.xlu0 %5444
      %v5446 = vsel %vm5364, %v5437, %v5439
      %v5447 = vsel %vm5364, %v5439, %v5441
      %v5448 = vsel %vm5364, %v5441, %v5443
      %v5449 = vsel %vm5364, %v5443, %v5445
      %v5454 = vadd.f32 %v5307, %v5446
      %v5455 = vadd.f32 %v5308, %v5447
      %v5456 = vadd.f32 %v5309, %v5448
      %v5457 = vadd.f32 %v5310, %v5449
      %v5458 = vld [vmem:[%s3 + $0xc0] sm:$0x1f]
      %5460 = vset.pattern.permute.xlu0 0
      %5461 = vperm.xlu0 %5460, %v5458
      %v5462 = vpop.permute.xlu0 %5461
      %v5464 = vmul.f32 %v5462, %v1975
      %v5465 = vmul.f32 %v5462, %v1979
      %v5466 = vmul.f32 %v5462, %v1983
      %v5467 = vmul.f32 %v5462, %v1987
      %v5468 = vmul.f32 %v5462, %v2073
      %5469 = vset.pattern.permute.xlu0 1
      %5470 = vperm.xlu0 %5469, %v5458
      %v5471 = vpop.permute.xlu0 %5470
      %v5473 = vmul.f32 %v5471, %v1999
      %v5474 = vmul.f32 %v5471, %v2003
      %v5475 = vmul.f32 %v5471, %v2007
      %v5476 = vmul.f32 %v5471, %v2011
      %v5477 = vmul.f32 %v5471, %v2086
      %5478 = vset.pattern.permute.xlu0 2
      %5479 = vperm.xlu0 %5478, %v5458
      %v5480 = vpop.permute.xlu0 %5479
      %v5482 = vmul.f32 %v5480, %v2023
      %v5483 = vmul.f32 %v5480, %v2027
      %v5484 = vmul.f32 %v5480, %v2031
      %v5485 = vmul.f32 %v5480, %v2035
      %v5486 = vmul.f32 %v5480, %v2099
      %5487 = vset.pattern.permute.xlu0 3
      %5488 = vperm.xlu0 %5487, %v5458
      %v5489 = vpop.permute.xlu0 %5488
      %v5491 = vmul.f32 %v5489, %v2047
      %v5492 = vmul.f32 %v5489, %v2051
      %v5493 = vmul.f32 %v5489, %v2055
      %v5494 = vmul.f32 %v5489, %v2059
      %v5495 = vmul.f32 %v5489, %v2112
      %5501 = vrot.lane.b32.xlu0 %v5464, 68
      %v5502 = vpop.permute.xlu0 %5501
      %5503 = vrot.lane.b32.xlu0 %v5465, 68
      %v5504 = vpop.permute.xlu0 %5503
      %5505 = vrot.lane.b32.xlu0 %v5466, 68
      %v5506 = vpop.permute.xlu0 %5505
      %5507 = vrot.lane.b32.xlu0 %v5467, 68
      %v5508 = vpop.permute.xlu0 %5507
      %5509 = vrot.lane.b32.xlu0 %v5468, 68
      %v5510 = vpop.permute.xlu0 %5509
      %vm5511 = vcmask 556032
      %v5512 = vsel %vm5511, %v5502, %v5504
      %v5513 = vsel %vm5511, %v5504, %v5506
      %v5514 = vsel %vm5511, %v5506, %v5508
      %v5515 = vsel %vm5511, %v5508, %v5510
      %v5520 = vadd.f32 %v5373, %v5512
      %v5521 = vadd.f32 %v5374, %v5513
      %v5522 = vadd.f32 %v5375, %v5514
      %v5523 = vadd.f32 %v5376, %v5515
      %5529 = vrot.lane.b32.xlu0 %v5473, 68
      %v5530 = vpop.permute.xlu0 %5529
      %5531 = vrot.lane.b32.xlu0 %v5474, 68
      %v5532 = vpop.permute.xlu0 %5531
      %5533 = vrot.lane.b32.xlu0 %v5475, 68
      %v5534 = vpop.permute.xlu0 %5533
      %5535 = vrot.lane.b32.xlu0 %v5476, 68
      %v5536 = vpop.permute.xlu0 %5535
      %5537 = vrot.lane.b32.xlu0 %v5477, 68
      %v5538 = vpop.permute.xlu0 %5537
      %v5539 = vsel %vm5511, %v5530, %v5532
      %v5540 = vsel %vm5511, %v5532, %v5534
      %v5541 = vsel %vm5511, %v5534, %v5536
      %v5542 = vsel %vm5511, %v5536, %v5538
      %v5547 = vadd.f32 %v5400, %v5539
      %v5548 = vadd.f32 %v5401, %v5540
      %v5549 = vadd.f32 %v5402, %v5541
      %v5550 = vadd.f32 %v5403, %v5542
      %5556 = vrot.lane.b32.xlu0 %v5482, 68
      %v5557 = vpop.permute.xlu0 %5556
      %5558 = vrot.lane.b32.xlu0 %v5483, 68
      %v5559 = vpop.permute.xlu0 %5558
      %5560 = vrot.lane.b32.xlu0 %v5484, 68
      %v5561 = vpop.permute.xlu0 %5560
      %5562 = vrot.lane.b32.xlu0 %v5485, 68
      %v5563 = vpop.permute.xlu0 %5562
      %5564 = vrot.lane.b32.xlu0 %v5486, 68
      %v5565 = vpop.permute.xlu0 %5564
      %v5566 = vsel %vm5511, %v5557, %v5559
      %v5567 = vsel %vm5511, %v5559, %v5561
      %v5568 = vsel %vm5511, %v5561, %v5563
      %v5569 = vsel %vm5511, %v5563, %v5565
      %v5574 = vadd.f32 %v5427, %v5566
      %v5575 = vadd.f32 %v5428, %v5567
      %v5576 = vadd.f32 %v5429, %v5568
      %v5577 = vadd.f32 %v5430, %v5569
      %5583 = vrot.lane.b32.xlu0 %v5491, 68
      %v5584 = vpop.permute.xlu0 %5583
      %5585 = vrot.lane.b32.xlu0 %v5492, 68
      %v5586 = vpop.permute.xlu0 %5585
      %5587 = vrot.lane.b32.xlu0 %v5493, 68
      %v5588 = vpop.permute.xlu0 %5587
      %5589 = vrot.lane.b32.xlu0 %v5494, 68
      %v5590 = vpop.permute.xlu0 %5589
      %5591 = vrot.lane.b32.xlu0 %v5495, 68
      %v5592 = vpop.permute.xlu0 %5591
      %v5593 = vsel %vm5511, %v5584, %v5586
      %v5594 = vsel %vm5511, %v5586, %v5588
      %v5595 = vsel %vm5511, %v5588, %v5590
      %v5596 = vsel %vm5511, %v5590, %v5592
      %v5601 = vadd.f32 %v5454, %v5593
      %v5602 = vadd.f32 %v5455, %v5594
      %v5603 = vadd.f32 %v5456, %v5595
      %v5604 = vadd.f32 %v5457, %v5596
      %v5605 = vadd.f32 %v5520, %v5547
      %v5606 = vadd.f32 %v5521, %v5548
      %v5607 = vadd.f32 %v5522, %v5549
      %v5608 = vadd.f32 %v5523, %v5550
      %v5609 = vadd.f32 %v5574, %v5601
      %v5610 = vadd.f32 %v5575, %v5602
      %v5611 = vadd.f32 %v5576, %v5603
      %v5612 = vadd.f32 %v5577, %v5604
      %v5613 = vadd.f32 %v5605, %v5609
      %v5614 = vadd.f32 %v5606, %v5610
      %v5615 = vadd.f32 %v5607, %v5611
      %v5616 = vadd.f32 %v5608, %v5612
      %5618 = vset.pattern.permute.xlu0 0
      %5619 = vperm.xlu0 %5618, %v253
      %v5620 = vpop.permute.xlu0 %5619
      %v5622 = vadd.f32 %v5613, %v5620
      %v5623 = vadd.f32 %v5614, %v5620
      %v5624 = vadd.f32 %v5615, %v5620
      %v5625 = vadd.f32 %v5616, %v5620
      %5626 = vst [vmem:[%s251] sm:$0x1f] %v5622
      %5627 = vst [vmem:[%s251 + $0x8] sm:$0x1f] %v5623
      %5628 = vst [vmem:[%s251 + $0x10] sm:$0x1f] %v5624
      %5629 = vst [vmem:[%s251 + $0x18] sm:$0x1f] %v5625
      %p5630 = scmp.lt.s32.totalorder %s17, 1
      %s5631 = scalar_select %p5630, %s17, 1
      %s5632 = smul.addr %s5631, 4
      %s5633 = smul.addr %s5632, 8
      %s5634 = scalar_lea.vmem %s6, %s5633
      // Predicated region
      $region45: #{model_forward.1} parent=43 // pred_check
        %p5635 = pneg %p166
      $region46: #{model_forward.1} parent=43 // pred_check_branch
        %5637 = sbr.rel (%p5635) target = $region48
      $region47: #{model_forward.1} parent=43 // pred_region
        _
      $region48: #{model_forward.1} parent=43 // pred_fallthru
        _
    $region44: #{model_forward.1} parent=5 // pred_fallthru
      _
    %p5638 = scmp.le.s32.totalorder 2, %s12
    // Predicated region
    $region49: #{model_forward.1} parent=5 // pred_check
      %p5639 = pneg %p5638
    $region50: #{model_forward.1} parent=5 // pred_check_branch
      %5641 = sbr.rel (%p5639) target = $region52
    $region51: #{model_forward.1} parent=5 // pred_region
      %s5642 = ssub.s32 %s12, 2
      // Predicated region
      $region53: #{model_forward.1} parent=51 // pred_check
        %p5643 = pneg %p172
      $region54: #{model_forward.1} parent=51 // pred_check_branch
        %5645 = sbr.rel (%p5643) target = $region56
      $region55: #{model_forward.1} parent=51 // pred_region
        %p5646 = scmp.lt.s32.totalorder %s18, 1
        %s5647 = scalar_select %p5646, %s18, 1
        %s5648 = smul.addr %s5647, 4
        %s5649 = smul.addr %s5648, 8
        %s5650 = scalar_lea.vmem %s6, %s5649
      $region56: #{model_forward.1} parent=51 // pred_fallthru
        _
    $region52: #{model_forward.1} parent=5 // pred_fallthru
      _
  $region6: #{model_forward.1} parent=0 // loop_footer
    %s16 = sadd.s32 1, %s12
  $region7: #{model_forward.1} parent=0 // loop_footer_branch
    %11 = sbr.rel target = $region3
  $region8: #{model_forward.1} parent=0 // loop_exit
    _

</llo_original>
